<compile_context>
chip_gen: v7x
topology: tpu7x:2x2x1
jax: 0.10.0
libtpu: 0.0.40
codegen_flags: <defaults>
</compile_context>

<pallas_src>
import math
import numpy as np
import jax
import jax.numpy as jnp
from jax.experimental import pallas as pl
from jax.experimental.pallas import tpu as pltpu

SQRT2 = math.sqrt(2.0)
LRELU_SLOPE = 0.2
PACK = 4  # points packed per lane-row (32 feats * 4 = 128 lanes)


def _texture_mlp_kernel(xp_ref, gp_ref, sp_ref,
                        w1x_ref, w1g_ref, w1s_ref, b1_ref,
                        w2_ref, b2_ref,
                        w3_ref, b3_ref,
                        o_ref):
    """Fused 3-layer StyleGAN-FC MLP on one lane-dense row tile.

    4 points per lane-row; weights are block-diagonal (4 copies), so every matmul
    and the final store are 128/256-lane dense. The 1/sqrt(in) weight gains and the
    lrelu sqrt(2) gains are pre-folded into the weights at prep time.
    """
    xp = xp_ref[...].astype(jnp.bfloat16)   # (tm4, 4*feat_dim) = (tm4, 128)
    gp = gp_ref[...].astype(jnp.bfloat16)   # (tm4, 12)
    sp = sp_ref[...].astype(jnp.bfloat16)   # (tm4, 4)

    # layer 1 (lrelu) -- first matmul split by input source: x | grad | sdf
    h = jnp.dot(xp, w1x_ref[...], preferred_element_type=jnp.float32)
    h = h + jnp.dot(gp, w1g_ref[...], preferred_element_type=jnp.float32)
    h = h + jnp.dot(sp, w1s_ref[...], preferred_element_type=jnp.float32)
    h = h + b1_ref[...]
    h = jnp.where(h >= 0.0, h, LRELU_SLOPE * h)     # *sqrt(2) folded into W2

    # layer 2 (lrelu)
    h = jnp.dot(h.astype(jnp.bfloat16), w2_ref[...],
                preferred_element_type=jnp.float32) + b2_ref[...]
    h = jnp.where(h >= 0.0, h, LRELU_SLOPE * h)     # *sqrt(2) folded into W3

    # layer 3 (linear)
    h = jnp.dot(h.astype(jnp.bfloat16), w3_ref[...],
                preferred_element_type=jnp.float32) + b3_ref[...]

    o_ref[...] = h.astype(o_ref.dtype)              # (tm4, 4*out_dim) = (tm4, 128)


def prepare_params(params, pack=PACK):
    """One-time param prep (outside the per-call path).

    Folds the 1/sqrt(in) weight gains and the lrelu sqrt(2) act gains into the
    weights, splits W1 by input source (x / grad / sdf), builds block-diagonal
    packed weights (`pack` points per lane-row) and casts them to bf16.
    """
    (w1, b1), (w2, b2), (w3, b3) = params            # w: [in, out] f32, b: [1, out] f32
    g1 = 1.0 / math.sqrt(w1.shape[0])
    g2 = 1.0 / math.sqrt(w2.shape[0])
    g3 = 1.0 / math.sqrt(w3.shape[0])
    # lrelu is positively homogeneous -> layer-i's sqrt(2) gain commutes into W_{i+1}.
    w1 = w1 * g1
    w2 = w2 * (g2 * SQRT2)
    w3 = w3 * (g3 * SQRT2)

    feat_dim = w1.shape[0] - 4                        # in = feat_dim + 3 + 1
    w1x = w1[:feat_dim]
    w1g = w1[feat_dim:feat_dim + 3]
    w1s = w1[feat_dim + 3:]

    blockdiag = lambda w: jnp.kron(jnp.eye(pack, dtype=w.dtype), w).astype(jnp.bfloat16)
    tile_b = lambda b: jnp.tile(b, (1, pack)).astype(jnp.float32)

    return dict(
        w1x=blockdiag(w1x), w1g=blockdiag(w1g), w1s=blockdiag(w1s), b1=tile_b(b1),
        w2=blockdiag(w2), b2=tile_b(b2),
        w3=blockdiag(w3), b3=tile_b(b3),
    )


def texture_mlp_forward(x, grad, sdf, packed, *, tile_m=2048):
    """x: [B, N, feat_dim], grad: [B, N, 3], sdf: [B, N, 1] -> y: [B, N, out_dim]."""
    B, N, feat_dim = x.shape
    assert grad.shape[-1] == 3 and sdf.shape[-1] == 1
    M = B * N
    pack = PACK
    assert M % pack == 0, f"B*N={M} must be divisible by {pack}"
    assert packed["w1x"].shape[0] == pack * feat_dim
    out_dim = packed["w3"].shape[1] // pack

    # Row axis is the only tiling knob. Keep tile_m a multiple of pack*8 = 32 so the
    # packed (tile_m/4)-sublane blocks stay aligned; pad rows if B*N is ragged.
    tile_m = max(32, min(tile_m, pl.cdiv(M, 32) * 32))
    tile_m -= tile_m % 32
    Mp = pl.cdiv(M, tile_m) * tile_m

    xf = x.reshape(M, feat_dim)
    gf = grad.reshape(M, 3)
    sf = sdf.reshape(M, 1)
    if Mp != M:
        padr = ((0, Mp - M), (0, 0))
        xf, gf, sf = jnp.pad(xf, padr), jnp.pad(gf, padr), jnp.pad(sf, padr)

    # Lane-dense repack: 4 points per row. These reshapes preserve row-major order,
    # so they are free bitcasts (no concat, no extra HBM pass).
    xp = xf.reshape(Mp // pack, pack * feat_dim)      # (Mp/4, 128)
    gp = gf.reshape(Mp // pack, pack * 3)             # (Mp/4, 12)
    sp = sf.reshape(Mp // pack, pack * 1)             # (Mp/4, 4)

    tm4 = tile_m // pack
    row_spec = lambda d: pl.BlockSpec((tm4, d), lambda i: (i, 0))
    full = lambda a: pl.BlockSpec(a.shape, lambda i: (0,) * a.ndim)
    w = packed

    out = pl.pallas_call(
        _texture_mlp_kernel,
        out_shape=jax.ShapeDtypeStruct((Mp // pack, pack * out_dim), x.dtype),
        grid_spec=pltpu.PrefetchScalarGridSpec(
            num_scalar_prefetch=0,
            grid=(Mp // tile_m,),
            in_specs=[
                row_spec(pack * feat_dim), row_spec(pack * 3), row_spec(pack * 1),
                full(w["w1x"]), full(w["w1g"]), full(w["w1s"]), full(w["b1"]),
                full(w["w2"]), full(w["b2"]),
                full(w["w3"]), full(w["b3"]),
            ],
            out_specs=pl.BlockSpec((tm4, pack * out_dim), lambda i: (i, 0)),
        ),
        compiler_params=pltpu.CompilerParams(
            dimension_semantics=("parallel",)),
    )(xp, gp, sp,
      w["w1x"], w["w1g"], w["w1s"], w["b1"],
      w["w2"], w["b2"], w["w3"], w["b3"])

    # Lane-dense (Mp/4, 4*out_dim) is bit-identical to (Mp, out_dim): free reshape back.
    return out.reshape(Mp, out_dim)[:M].reshape(B, N, out_dim)


def init_params(key, dims):
    """StyleGAN FullyConnectedLayer init (lr_multiplier=1): weight ~ N(0,1) [out,in].
    Returned pre-transposed to [in, out]; bias [1, out]."""
    params = []
    for i in range(len(dims) - 1):
        key, kw, kb = jax.random.split(key, 3)
        wt = jax.random.normal(kw, (dims[i + 1], dims[i]), jnp.float32)  # [out, in]
        b = 0.1 * jax.random.normal(kb, (dims[i + 1],), jnp.float32)
        params.append((wt.T, b.reshape(1, -1)))       # store as [in, out], [1, out]
    return params


def reference_forward(x, grad, sdf, params):
    """Pure-JAX f32 reference mirroring the PyTorch module."""
    B, N, feat_dim = x.shape
    M = B * N
    h = jnp.concatenate(
        [x.reshape(M, feat_dim), grad.reshape(M, 3), sdf.reshape(M, 1)], axis=1)
    n_layers = len(params)
    for li, (w, b) in enumerate(params):
        h = h @ (w * (1.0 / math.sqrt(w.shape[0]))) + b
        if li < n_layers - 1:
            h = jnp.where(h >= 0.0, h, LRELU_SLOPE * h) * SQRT2
    return h.reshape(B, N, params[-1][0].shape[1])


if __name__ == "__main__":
    # cfg-implied dims
    B, N = 2, 2048
    feat_dim, hid_dim, out_dim = 32, 64, 32
    dims = [feat_dim + 3 + 1, hid_dim, hid_dim, out_dim]   # [36, 64, 64, 32]

    key = jax.random.PRNGKey(0)
    kx, kg, ks, kp = jax.random.split(key, 4)
    x = jax.random.normal(kx, (B, N, feat_dim), jnp.float32)
    grad = jax.random.normal(kg, (B, N, 3), jnp.float32)
    sdf = jax.random.normal(ks, (B, N, 1), jnp.float32)

    params = init_params(kp, dims)
    packed = prepare_params(params)

    y = texture_mlp_forward(x, grad, sdf, packed, tile_m=2048)
    y = jax.block_until_ready(y)

    y_ref = reference_forward(x, grad, sdf, params)
    assert y.shape == (B, N, out_dim)
    # bf16 matmul inputs with f32 accumulation vs pure-f32 reference.
    np.testing.assert_allclose(np.asarray(y), np.asarray(y_ref), rtol=2e-2, atol=8e-2)

    print("KERNEL_OK")
</pallas_src>

<mosaic_0001>
module attributes {stable_mosaic.version = 11 : i64} {
  func.func @_texture_mlp_kernel(%arg0: i32, %arg1: memref<512x128xf32, #tpu.memory_space<vmem>>, %arg2: memref<512x12xf32, #tpu.memory_space<vmem>>, %arg3: memref<512x4xf32, #tpu.memory_space<vmem>>, %arg4: memref<128x256xbf16, #tpu.memory_space<vmem>>, %arg5: memref<12x256xbf16, #tpu.memory_space<vmem>>, %arg6: memref<4x256xbf16, #tpu.memory_space<vmem>>, %arg7: memref<1x256xf32, #tpu.memory_space<vmem>>, %arg8: memref<256x256xbf16, #tpu.memory_space<vmem>>, %arg9: memref<1x256xf32, #tpu.memory_space<vmem>>, %arg10: memref<256x128xbf16, #tpu.memory_space<vmem>>, %arg11: memref<1x128xf32, #tpu.memory_space<vmem>>, %arg12: memref<512x128xf32, #tpu.memory_space<vmem>>) attributes {dimension_semantics = [#tpu.dimension_semantics<parallel>], iteration_bounds = array<i64: 2>, scalar_prefetch = 0 : i64, scratch_operands = 0 : i64, tpu.core_type = #tpu.core_type<tc>, window_params = [{transform_indices = @transform_0, window_bounds = array<i64: 512, 128>}, {transform_indices = @transform_1, window_bounds = array<i64: 512, 12>}, {transform_indices = @transform_2, window_bounds = array<i64: 512, 4>}, {pipeline_mode = #tpu.pipeline_mode<synchronous>, transform_indices = @transform_3, window_bounds = array<i64: 128, 256>}, {pipeline_mode = #tpu.pipeline_mode<synchronous>, transform_indices = @transform_4, window_bounds = array<i64: 12, 256>}, {pipeline_mode = #tpu.pipeline_mode<synchronous>, transform_indices = @transform_5, window_bounds = array<i64: 4, 256>}, {pipeline_mode = #tpu.pipeline_mode<synchronous>, transform_indices = @transform_6, window_bounds = array<i64: 1, 256>}, {pipeline_mode = #tpu.pipeline_mode<synchronous>, transform_indices = @transform_7, window_bounds = array<i64: 256, 256>}, {pipeline_mode = #tpu.pipeline_mode<synchronous>, transform_indices = @transform_8, window_bounds = array<i64: 1, 256>}, {pipeline_mode = #tpu.pipeline_mode<synchronous>, transform_indices = @transform_9, window_bounds = array<i64: 256, 128>}, {pipeline_mode = #tpu.pipeline_mode<synchronous>, transform_indices = @transform_10, window_bounds = array<i64: 1, 128>}, {transform_indices = @transform_11, window_bounds = array<i64: 512, 128>}]} {
    %c0 = arith.constant 0 : index
    %c0_0 = arith.constant 0 : index
    %0 = vector.load %arg1[%c0, %c0_0] : memref<512x128xf32, #tpu.memory_space<vmem>>, vector<512x128xf32>
    %1 = arith.truncf %0 : vector<512x128xf32> to vector<512x128xbf16>
    %c0_1 = arith.constant 0 : index
    %c0_2 = arith.constant 0 : index
    %2 = vector.load %arg2[%c0_1, %c0_2] : memref<512x12xf32, #tpu.memory_space<vmem>>, vector<512x12xf32>
    %3 = arith.truncf %2 : vector<512x12xf32> to vector<512x12xbf16>
    %c0_3 = arith.constant 0 : index
    %c0_4 = arith.constant 0 : index
    %4 = vector.load %arg3[%c0_3, %c0_4] : memref<512x4xf32, #tpu.memory_space<vmem>>, vector<512x4xf32>
    %5 = arith.truncf %4 : vector<512x4xf32> to vector<512x4xbf16>
    %c0_5 = arith.constant 0 : index
    %c0_6 = arith.constant 0 : index
    %6 = vector.load %arg4[%c0_5, %c0_6] : memref<128x256xbf16, #tpu.memory_space<vmem>>, vector<128x256xbf16>
    %cst = arith.constant dense<0.000000e+00> : vector<512x256xf32>
    %7 = tpu.matmul %1, %6, %cst {dimension_numbers = #tpu.dot_dimension_numbers<[1], [0], [0], [1], [0, 0, 1, 1], [], []>} : vector<512x128xbf16>, vector<128x256xbf16>, vector<512x256xf32> -> vector<512x256xf32>
    %c0_7 = arith.constant 0 : index
    %c0_8 = arith.constant 0 : index
    %8 = vector.load %arg5[%c0_7, %c0_8] : memref<12x256xbf16, #tpu.memory_space<vmem>>, vector<12x256xbf16>
    %cst_9 = arith.constant dense<0.000000e+00> : vector<512x256xf32>
    %9 = tpu.matmul %3, %8, %cst_9 {dimension_numbers = #tpu.dot_dimension_numbers<[1], [0], [0], [1], [0, 0, 1, 1], [], []>} : vector<512x12xbf16>, vector<12x256xbf16>, vector<512x256xf32> -> vector<512x256xf32>
    %10 = arith.addf %7, %9 : vector<512x256xf32>
    %c0_10 = arith.constant 0 : index
    %c0_11 = arith.constant 0 : index
    %11 = vector.load %arg6[%c0_10, %c0_11] : memref<4x256xbf16, #tpu.memory_space<vmem>>, vector<4x256xbf16>
    %cst_12 = arith.constant dense<0.000000e+00> : vector<512x256xf32>
    %12 = tpu.matmul %5, %11, %cst_12 {dimension_numbers = #tpu.dot_dimension_numbers<[1], [0], [0], [1], [0, 0, 1, 1], [], []>} : vector<512x4xbf16>, vector<4x256xbf16>, vector<512x256xf32> -> vector<512x256xf32>
    %13 = arith.addf %10, %12 : vector<512x256xf32>
    %c0_13 = arith.constant 0 : index
    %c0_14 = arith.constant 0 : index
    %14 = vector.load %arg7[%c0_13, %c0_14] : memref<1x256xf32, #tpu.memory_space<vmem>>, vector<1x256xf32>
    %15 = vector.broadcast %14 : vector<1x256xf32> to vector<512x256xf32>
    %16 = arith.addf %13, %15 : vector<512x256xf32>
    %cst_15 = arith.constant 0.000000e+00 : f32
    %17 = vector.broadcast %cst_15 : f32 to vector<512x256xf32>
    %18 = arith.cmpf oge, %16, %17 : vector<512x256xf32>
    %cst_16 = arith.constant 2.000000e-01 : f32
    %19 = vector.broadcast %cst_16 : f32 to vector<512x256xf32>
    %20 = arith.mulf %19, %16 : vector<512x256xf32>
    %21 = arith.select %18, %16, %20 : vector<512x256xi1>, vector<512x256xf32>
    %22 = arith.truncf %21 : vector<512x256xf32> to vector<512x256xbf16>
    %c0_17 = arith.constant 0 : index
    %c0_18 = arith.constant 0 : index
    %23 = vector.load %arg8[%c0_17, %c0_18] : memref<256x256xbf16, #tpu.memory_space<vmem>>, vector<256x256xbf16>
    %cst_19 = arith.constant dense<0.000000e+00> : vector<512x256xf32>
    %24 = tpu.matmul %22, %23, %cst_19 {dimension_numbers = #tpu.dot_dimension_numbers<[1], [0], [0], [1], [0, 0, 1, 1], [], []>} : vector<512x256xbf16>, vector<256x256xbf16>, vector<512x256xf32> -> vector<512x256xf32>
    %c0_20 = arith.constant 0 : index
    %c0_21 = arith.constant 0 : index
    %25 = vector.load %arg9[%c0_20, %c0_21] : memref<1x256xf32, #tpu.memory_space<vmem>>, vector<1x256xf32>
    %26 = vector.broadcast %25 : vector<1x256xf32> to vector<512x256xf32>
    %27 = arith.addf %24, %26 : vector<512x256xf32>
    %cst_22 = arith.constant 0.000000e+00 : f32
    %28 = vector.broadcast %cst_22 : f32 to vector<512x256xf32>
    %29 = arith.cmpf oge, %27, %28 : vector<512x256xf32>
    %cst_23 = arith.constant 2.000000e-01 : f32
    %30 = vector.broadcast %cst_23 : f32 to vector<512x256xf32>
    %31 = arith.mulf %30, %27 : vector<512x256xf32>
    %32 = arith.select %29, %27, %31 : vector<512x256xi1>, vector<512x256xf32>
    %33 = arith.truncf %32 : vector<512x256xf32> to vector<512x256xbf16>
    %c0_24 = arith.constant 0 : index
    %c0_25 = arith.constant 0 : index
    %34 = vector.load %arg10[%c0_24, %c0_25] : memref<256x128xbf16, #tpu.memory_space<vmem>>, vector<256x128xbf16>
    %cst_26 = arith.constant dense<0.000000e+00> : vector<512x128xf32>
    %35 = tpu.matmul %33, %34, %cst_26 {dimension_numbers = #tpu.dot_dimension_numbers<[1], [0], [0], [1], [0, 0, 1, 1], [], []>} : vector<512x256xbf16>, vector<256x128xbf16>, vector<512x128xf32> -> vector<512x128xf32>
    %c0_27 = arith.constant 0 : index
    %c0_28 = arith.constant 0 : index
    %36 = vector.load %arg11[%c0_27, %c0_28] : memref<1x128xf32, #tpu.memory_space<vmem>>, vector<1x128xf32>
    %37 = vector.broadcast %36 : vector<1x128xf32> to vector<512x128xf32>
    %38 = arith.addf %35, %37 : vector<512x128xf32>
    %c0_29 = arith.constant 0 : index
    %c0_30 = arith.constant 0 : index
    %39 = vector.load %arg12[%c0_29, %c0_30] : memref<512x128xf32, #tpu.memory_space<vmem>>, vector<512x128xf32>
    tpu.vector_store %arg12[%c0_29, %c0_30], %38 {strides = array<i32>} : memref<512x128xf32, #tpu.memory_space<vmem>>, vector<512x128xf32>,
    return
  }
  func.func @transform_0(%arg0: i32) -> (i32, i32) {
    %c0_i32 = arith.constant 0 : i32
    %c0_i32_0 = arith.constant 0 : i32
    return %arg0, %c0_i32 : i32, i32
  }
  func.func @transform_1(%arg0: i32) -> (i32, i32) {
    %c0_i32 = arith.constant 0 : i32
    %c0_i32_0 = arith.constant 0 : i32
    return %arg0, %c0_i32 : i32, i32
  }
  func.func @transform_2(%arg0: i32) -> (i32, i32) {
    %c0_i32 = arith.constant 0 : i32
    %c0_i32_0 = arith.constant 0 : i32
    return %arg0, %c0_i32 : i32, i32
  }
  func.func @transform_3(%arg0: i32) -> (i32, i32) {
    %c0_i32 = arith.constant 0 : i32
    %c0_i32_0 = arith.constant 0 : i32
    %c0_i32_1 = arith.constant 0 : i32
    return %c0_i32, %c0_i32_0 : i32, i32
  }
  func.func @transform_4(%arg0: i32) -> (i32, i32) {
    %c0_i32 = arith.constant 0 : i32
    %c0_i32_0 = arith.constant 0 : i32
    %c0_i32_1 = arith.constant 0 : i32
    return %c0_i32, %c0_i32_0 : i32, i32
  }
  func.func @transform_5(%arg0: i32) -> (i32, i32) {
    %c0_i32 = arith.constant 0 : i32
    %c0_i32_0 = arith.constant 0 : i32
    %c0_i32_1 = arith.constant 0 : i32
    return %c0_i32, %c0_i32_0 : i32, i32
  }
  func.func @transform_6(%arg0: i32) -> (i32, i32) {
    %c0_i32 = arith.constant 0 : i32
    %c0_i32_0 = arith.constant 0 : i32
    %c0_i32_1 = arith.constant 0 : i32
    return %c0_i32, %c0_i32_0 : i32, i32
  }
  func.func @transform_7(%arg0: i32) -> (i32, i32) {
    %c0_i32 = arith.constant 0 : i32
    %c0_i32_0 = arith.constant 0 : i32
    %c0_i32_1 = arith.constant 0 : i32
    return %c0_i32, %c0_i32_0 : i32, i32
  }
  func.func @transform_8(%arg0: i32) -> (i32, i32) {
    %c0_i32 = arith.constant 0 : i32
    %c0_i32_0 = arith.constant 0 : i32
    %c0_i32_1 = arith.constant 0 : i32
    return %c0_i32, %c0_i32_0 : i32, i32
  }
  func.func @transform_9(%arg0: i32) -> (i32, i32) {
    %c0_i32 = arith.constant 0 : i32
    %c0_i32_0 = arith.constant 0 : i32
    %c0_i32_1 = arith.constant 0 : i32
    return %c0_i32, %c0_i32_0 : i32, i32
  }
  func.func @transform_10(%arg0: i32) -> (i32, i32) {
    %c0_i32 = arith.constant 0 : i32
    %c0_i32_0 = arith.constant 0 : i32
    %c0_i32_1 = arith.constant 0 : i32
    return %c0_i32, %c0_i32_0 : i32, i32
  }
  func.func @transform_11(%arg0: i32) -> (i32, i32) {
    %c0_i32 = arith.constant 0 : i32
    %c0_i32_0 = arith.constant 0 : i32
    return %arg0, %c0_i32 : i32, i32
  }
}

</mosaic_0001>

<llo_original>
// kernel: tpu_custom_call.1
$region0: #{tpu_custom_call.1}
  #allocation0 [shape = 'u32[]', space=smem, size = 0x4, offset = 0x4, fixed_abs, tag = 'smem constant byte address 0x4 - core index']
  #allocation1 [shape = 'u32[144,128]{1,0:T(1,128)}', space=vmem, size = 0x12000, scoped, tag = 'internal scratch']
  %s0 = inlined_call_operand.vmem [shape: f32[1024,128], index: 0, kind: input, shape index: {}]
  %s1 = inlined_call_operand.vmem [shape: f32[1024,12], index: 1, kind: input, shape index: {}]
  %s2 = inlined_call_operand.vmem [shape: f32[1024,4], index: 2, kind: input, shape index: {}]
  %s3 = inlined_call_operand.vmem [shape: bf16[128,256], index: 3, kind: input, shape index: {}]
  %s4 = inlined_call_operand.vmem [shape: bf16[12,256], index: 4, kind: input, shape index: {}]
  %s5 = inlined_call_operand.vmem [shape: bf16[4,256], index: 5, kind: input, shape index: {}]
  %s6 = inlined_call_operand.vmem [shape: f32[1,256], index: 6, kind: input, shape index: {}]
  %s7 = inlined_call_operand.vmem [shape: bf16[256,256], index: 7, kind: input, shape index: {}]
  %s8 = inlined_call_operand.vmem [shape: f32[1,256], index: 8, kind: input, shape index: {}]
  %s9 = inlined_call_operand.vmem [shape: bf16[256,128], index: 9, kind: input, shape index: {}]
  %s10 = inlined_call_operand.vmem [shape: f32[1,128], index: 10, kind: input, shape index: {}]
  %s11 = inlined_call_operand.hbm [shape: f32[1024,128], index: 11, kind: output, shape index: {}]
  %s12 = sld [smem:[#allocation0]]
  $region77: #{tpu_custom_call.1} parent=0
    _
  %s14 = ssub.s32 1, %s12
  %s15 = scalar_select 0, %s14, %s12
  $region1: #{tpu_custom_call.1} parent=0
    #allocation2 [shape = 'u8[524288]{0}', space=vmem, size = 0x80000, scoped, tag = 'output window, operand 0']
    #allocation3 [shape = 's32[2]{0}', space=sflag, size = 0x8, scoped, tag = 'scoped memory for tpu_custom_call.1']
    %16 = vsyncpa [#allocation3], 0
    %s17 = scalar_lea.sflag [#allocation3], 1
    %18 = vsyncpa %s17, 0
    loop: start=0, step=1, limit=4
    $region2: #{tpu_custom_call.1} parent=1 // loop_pre_header
      _
    $region3: #{tpu_custom_call.1} parent=1 // loop_header
      %s20 = sphi 0, %s24
      %p21 = scmp.ge.s32.totalorder %s20, 4
      %s30 = sphi 0, %s32
      %s33 = sphi 0, %s30
      %s34 = sphi 0, %s33
      %s50 = sphi 0, %s34
      %s56 = sphi 0, %s58
      %s59 = sphi 0, %s56
      %s60 = sphi 0, %s59
      %s76 = sphi 0, %s60
      %s82 = sphi 0, %s84
      %s85 = sphi 0, %s82
      %s86 = sphi 0, %s85
      %s102 = sphi 0, %s86
      %s106 = sphi 0, %s106
      %s108 = sphi 0, %s106
      %s109 = sphi 0, %s108
      %s123 = sphi 0, %s109
      %s127 = sphi 0, %s127
      %s129 = sphi 0, %s127
      %s130 = sphi 0, %s129
      %s144 = sphi 0, %s130
      %s148 = sphi 0, %s148
      %s150 = sphi 0, %s148
      %s151 = sphi 0, %s150
      %s165 = sphi 0, %s151
      %s169 = sphi 0, %s169
      %s171 = sphi 0, %s169
      %s172 = sphi 0, %s171
      %s186 = sphi 0, %s172
      %s190 = sphi 0, %s190
      %s192 = sphi 0, %s190
      %s193 = sphi 0, %s192
      %s207 = sphi 0, %s193
      %s211 = sphi 0, %s211
      %s213 = sphi 0, %s211
      %s214 = sphi 0, %s213
      %s228 = sphi 0, %s214
      %s232 = sphi 0, %s232
      %s234 = sphi 0, %s232
      %s235 = sphi 0, %s234
      %s249 = sphi 0, %s235
      %s253 = sphi 0, %s253
      %s255 = sphi 0, %s253
      %s256 = sphi 0, %s255
      %s270 = sphi 0, %s256
      %s276 = sphi 0, %s278
      %s279 = sphi 0, %s276
      %s280 = sphi 0, %s279
      %s296 = sphi 0, %s280
    $region4: #{tpu_custom_call.1} parent=1 // loop_header_branch
      %23 = sbr.rel (%p21) target = $region8
    $region5: #{tpu_custom_call.1} parent=1 // loop_body
      %s25 = ssub.s32 %s20, 1
      %s26 = ssub.s32 %s20, 2
      %s27 = sadd.s32 %s20, 1
      %s28 = ssub.s32 %s20, %s27
      %p29 = scmp.eq.s32.totalorder %s28, 0
      %s31 = sadd.s32 %s30, 1
      %s32 = scalar_select %p29, %s30, %s31
      %p35 = pneg %p29
      %p36 = scmp.eq.s32.totalorder %s20, 1
      %p37 = por %p35, %p36
      %p38 = scmp.ne.s32.totalorder %s30, %s33
      %p39 = scmp.eq.s32.totalorder %s20, 0
      %p40 = por %p38, %p39
      %p41 = scmp.ne.s32.totalorder %s30, %s33
      %p42 = scmp.eq.s32.totalorder %s25, 1
      %p43 = por %p41, %p42
      %p44 = scmp.ne.s32.totalorder %s33, %s34
      %p45 = scmp.eq.s32.totalorder %s25, 0
      %p46 = por %p44, %p45
      %p47 = scmp.ne.s32.totalorder %s33, %s34
      %p48 = scmp.eq.s32.totalorder %s26, 1
      %p49 = por %p47, %p48
      %p51 = scmp.ne.s32.totalorder %s34, %s50
      %p52 = scmp.eq.s32.totalorder %s26, 0
      %p53 = por %p51, %p52
      %s54 = ssub.s32 %s20, %s27
      %p55 = scmp.eq.s32.totalorder %s54, 0
      %s57 = sadd.s32 %s56, 1
      %s58 = scalar_select %p55, %s56, %s57
      %p61 = pneg %p55
      %p62 = scmp.eq.s32.totalorder %s20, 1
      %p63 = por %p61, %p62
      %p64 = scmp.ne.s32.totalorder %s56, %s59
      %p65 = scmp.eq.s32.totalorder %s20, 0
      %p66 = por %p64, %p65
      %p67 = scmp.ne.s32.totalorder %s56, %s59
      %p68 = scmp.eq.s32.totalorder %s25, 1
      %p69 = por %p67, %p68
      %p70 = scmp.ne.s32.totalorder %s59, %s60
      %p71 = scmp.eq.s32.totalorder %s25, 0
      %p72 = por %p70, %p71
      %p73 = scmp.ne.s32.totalorder %s59, %s60
      %p74 = scmp.eq.s32.totalorder %s26, 1
      %p75 = por %p73, %p74
      %p77 = scmp.ne.s32.totalorder %s60, %s76
      %p78 = scmp.eq.s32.totalorder %s26, 0
      %p79 = por %p77, %p78
      %s80 = ssub.s32 %s20, %s27
      %p81 = scmp.eq.s32.totalorder %s80, 0
      %s83 = sadd.s32 %s82, 1
      %s84 = scalar_select %p81, %s82, %s83
      %p87 = pneg %p81
      %p88 = scmp.eq.s32.totalorder %s20, 1
      %p89 = por %p87, %p88
      %p90 = scmp.ne.s32.totalorder %s82, %s85
      %p91 = scmp.eq.s32.totalorder %s20, 0
      %p92 = por %p90, %p91
      %p93 = scmp.ne.s32.totalorder %s82, %s85
      %p94 = scmp.eq.s32.totalorder %s25, 1
      %p95 = por %p93, %p94
      %p96 = scmp.ne.s32.totalorder %s85, %s86
      %p97 = scmp.eq.s32.totalorder %s25, 0
      %p98 = por %p96, %p97
      %p99 = scmp.ne.s32.totalorder %s85, %s86
      %p100 = scmp.eq.s32.totalorder %s26, 1
      %p101 = por %p99, %p100
      %p103 = scmp.ne.s32.totalorder %s86, %s102
      %p104 = scmp.eq.s32.totalorder %s26, 0
      %p105 = por %p103, %p104
      %s107 = sadd.s32 %s106, 1
      %p110 = scmp.eq.s32.totalorder %s20, 1
      %p111 = scmp.ne.s32.totalorder %s106, %s108
      %p112 = scmp.eq.s32.totalorder %s20, 0
      %p113 = por %p111, %p112
      %p114 = scmp.ne.s32.totalorder %s106, %s108
      %p115 = scmp.eq.s32.totalorder %s25, 1
      %p116 = por %p114, %p115
      %p117 = scmp.ne.s32.totalorder %s108, %s109
      %p118 = scmp.eq.s32.totalorder %s25, 0
      %p119 = por %p117, %p118
      %p120 = scmp.ne.s32.totalorder %s108, %s109
      %p121 = scmp.eq.s32.totalorder %s26, 1
      %p122 = por %p120, %p121
      %p124 = scmp.ne.s32.totalorder %s109, %s123
      %p125 = scmp.eq.s32.totalorder %s26, 0
      %p126 = por %p124, %p125
      %s128 = sadd.s32 %s127, 1
      %p131 = scmp.eq.s32.totalorder %s20, 1
      %p132 = scmp.ne.s32.totalorder %s127, %s129
      %p133 = scmp.eq.s32.totalorder %s20, 0
      %p134 = por %p132, %p133
      %p135 = scmp.ne.s32.totalorder %s127, %s129
      %p136 = scmp.eq.s32.totalorder %s25, 1
      %p137 = por %p135, %p136
      %p138 = scmp.ne.s32.totalorder %s129, %s130
      %p139 = scmp.eq.s32.totalorder %s25, 0
      %p140 = por %p138, %p139
      %p141 = scmp.ne.s32.totalorder %s129, %s130
      %p142 = scmp.eq.s32.totalorder %s26, 1
      %p143 = por %p141, %p142
      %p145 = scmp.ne.s32.totalorder %s130, %s144
      %p146 = scmp.eq.s32.totalorder %s26, 0
      %p147 = por %p145, %p146
      %s149 = sadd.s32 %s148, 1
      %p152 = scmp.eq.s32.totalorder %s20, 1
      %p153 = scmp.ne.s32.totalorder %s148, %s150
      %p154 = scmp.eq.s32.totalorder %s20, 0
      %p155 = por %p153, %p154
      %p156 = scmp.ne.s32.totalorder %s148, %s150
      %p157 = scmp.eq.s32.totalorder %s25, 1
      %p158 = por %p156, %p157
      %p159 = scmp.ne.s32.totalorder %s150, %s151
      %p160 = scmp.eq.s32.totalorder %s25, 0
      %p161 = por %p159, %p160
      %p162 = scmp.ne.s32.totalorder %s150, %s151
      %p163 = scmp.eq.s32.totalorder %s26, 1
      %p164 = por %p162, %p163
      %p166 = scmp.ne.s32.totalorder %s151, %s165
      %p167 = scmp.eq.s32.totalorder %s26, 0
      %p168 = por %p166, %p167
      %s170 = sadd.s32 %s169, 1
      %p173 = scmp.eq.s32.totalorder %s20, 1
      %p174 = scmp.ne.s32.totalorder %s169, %s171
      %p175 = scmp.eq.s32.totalorder %s20, 0
      %p176 = por %p174, %p175
      %p177 = scmp.ne.s32.totalorder %s169, %s171
      %p178 = scmp.eq.s32.totalorder %s25, 1
      %p179 = por %p177, %p178
      %p180 = scmp.ne.s32.totalorder %s171, %s172
      %p181 = scmp.eq.s32.totalorder %s25, 0
      %p182 = por %p180, %p181
      %p183 = scmp.ne.s32.totalorder %s171, %s172
      %p184 = scmp.eq.s32.totalorder %s26, 1
      %p185 = por %p183, %p184
      %p187 = scmp.ne.s32.totalorder %s172, %s186
      %p188 = scmp.eq.s32.totalorder %s26, 0
      %p189 = por %p187, %p188
      %s191 = sadd.s32 %s190, 1
      %p194 = scmp.eq.s32.totalorder %s20, 1
      %p195 = scmp.ne.s32.totalorder %s190, %s192
      %p196 = scmp.eq.s32.totalorder %s20, 0
      %p197 = por %p195, %p196
      %p198 = scmp.ne.s32.totalorder %s190, %s192
      %p199 = scmp.eq.s32.totalorder %s25, 1
      %p200 = por %p198, %p199
      %p201 = scmp.ne.s32.totalorder %s192, %s193
      %p202 = scmp.eq.s32.totalorder %s25, 0
      %p203 = por %p201, %p202
      %p204 = scmp.ne.s32.totalorder %s192, %s193
      %p205 = scmp.eq.s32.totalorder %s26, 1
      %p206 = por %p204, %p205
      %p208 = scmp.ne.s32.totalorder %s193, %s207
      %p209 = scmp.eq.s32.totalorder %s26, 0
      %p210 = por %p208, %p209
      %s212 = sadd.s32 %s211, 1
      %p215 = scmp.eq.s32.totalorder %s20, 1
      %p216 = scmp.ne.s32.totalorder %s211, %s213
      %p217 = scmp.eq.s32.totalorder %s20, 0
      %p218 = por %p216, %p217
      %p219 = scmp.ne.s32.totalorder %s211, %s213
      %p220 = scmp.eq.s32.totalorder %s25, 1
      %p221 = por %p219, %p220
      %p222 = scmp.ne.s32.totalorder %s213, %s214
      %p223 = scmp.eq.s32.totalorder %s25, 0
      %p224 = por %p222, %p223
      %p225 = scmp.ne.s32.totalorder %s213, %s214
      %p226 = scmp.eq.s32.totalorder %s26, 1
      %p227 = por %p225, %p226
      %p229 = scmp.ne.s32.totalorder %s214, %s228
      %p230 = scmp.eq.s32.totalorder %s26, 0
      %p231 = por %p229, %p230
      %s233 = sadd.s32 %s232, 1
      %p236 = scmp.eq.s32.totalorder %s20, 1
      %p237 = scmp.ne.s32.totalorder %s232, %s234
      %p238 = scmp.eq.s32.totalorder %s20, 0
      %p239 = por %p237, %p238
      %p240 = scmp.ne.s32.totalorder %s232, %s234
      %p241 = scmp.eq.s32.totalorder %s25, 1
      %p242 = por %p240, %p241
      %p243 = scmp.ne.s32.totalorder %s234, %s235
      %p244 = scmp.eq.s32.totalorder %s25, 0
      %p245 = por %p243, %p244
      %p246 = scmp.ne.s32.totalorder %s234, %s235
      %p247 = scmp.eq.s32.totalorder %s26, 1
      %p248 = por %p246, %p247
      %p250 = scmp.ne.s32.totalorder %s235, %s249
      %p251 = scmp.eq.s32.totalorder %s26, 0
      %p252 = por %p250, %p251
      %s254 = sadd.s32 %s253, 1
      %p257 = scmp.eq.s32.totalorder %s20, 1
      %p258 = scmp.ne.s32.totalorder %s253, %s255
      %p259 = scmp.eq.s32.totalorder %s20, 0
      %p260 = por %p258, %p259
      %p261 = scmp.ne.s32.totalorder %s253, %s255
      %p262 = scmp.eq.s32.totalorder %s25, 1
      %p263 = por %p261, %p262
      %p264 = scmp.ne.s32.totalorder %s255, %s256
      %p265 = scmp.eq.s32.totalorder %s25, 0
      %p266 = por %p264, %p265
      %p267 = scmp.ne.s32.totalorder %s255, %s256
      %p268 = scmp.eq.s32.totalorder %s26, 1
      %p269 = por %p267, %p268
      %p271 = scmp.ne.s32.totalorder %s256, %s270
      %p272 = scmp.eq.s32.totalorder %s26, 0
      %p273 = por %p271, %p272
      %s274 = ssub.s32 %s20, %s27
      %p275 = scmp.eq.s32.totalorder %s274, 0
      %s277 = sadd.s32 %s276, 1
      %s278 = scalar_select %p275, %s276, %s277
      %p281 = pneg %p275
      %p282 = scmp.eq.s32.totalorder %s20, 1
      %p283 = por %p281, %p282
      %p284 = scmp.ne.s32.totalorder %s276, %s279
      %p285 = scmp.eq.s32.totalorder %s20, 0
      %p286 = por %p284, %p285
      %p287 = scmp.ne.s32.totalorder %s276, %s279
      %p288 = scmp.eq.s32.totalorder %s25, 1
      %p289 = por %p287, %p288
      %p290 = scmp.ne.s32.totalorder %s279, %s280
      %p291 = scmp.eq.s32.totalorder %s25, 0
      %p292 = por %p290, %p291
      %p293 = scmp.ne.s32.totalorder %s279, %s280
      %p294 = scmp.eq.s32.totalorder %s26, 1
      %p295 = por %p293, %p294
      %p297 = scmp.ne.s32.totalorder %s280, %s296
      %p298 = scmp.eq.s32.totalorder %s26, 0
      %p299 = por %p297, %p298
      %p300 = scmp.le.s32.totalorder 1, %s20
      %p301 = scmp.lt.s32.totalorder %s20, 3
      %p302 = pnand %p300, %p301
      %p303 = pneg %p302
      // Predicated region
      $region9: #{tpu_custom_call.1} parent=5 // pred_check
        _
      $region10: #{tpu_custom_call.1} parent=5 // pred_check_branch
        %305 = sbr.rel (%p302) target = $region12
      $region11: #{tpu_custom_call.1} parent=5 // pred_region
        %s306 = ssub.s32 %s20, 1
        // Predicated region
        $region13: #{tpu_custom_call.1} parent=11 // pred_check
          %p307 = pneg %p119
        $region14: #{tpu_custom_call.1} parent=11 // pred_check_branch
          %309 = sbr.rel (%p307) target = $region16
        $region15: #{tpu_custom_call.1} parent=11 // pred_region
          _
        $region16: #{tpu_custom_call.1} parent=11 // pred_fallthru
          _
        // Predicated region
        $region17: #{tpu_custom_call.1} parent=11 // pred_check
          %p310 = pneg %p140
        $region18: #{tpu_custom_call.1} parent=11 // pred_check_branch
          %312 = sbr.rel (%p310) target = $region20
        $region19: #{tpu_custom_call.1} parent=11 // pred_region
          _
        $region20: #{tpu_custom_call.1} parent=11 // pred_fallthru
          _
        // Predicated region
        $region21: #{tpu_custom_call.1} parent=11 // pred_check
          %p313 = pneg %p161
        $region22: #{tpu_custom_call.1} parent=11 // pred_check_branch
          %315 = sbr.rel (%p313) target = $region24
        $region23: #{tpu_custom_call.1} parent=11 // pred_region
          _
        $region24: #{tpu_custom_call.1} parent=11 // pred_fallthru
          _
        // Predicated region
        $region25: #{tpu_custom_call.1} parent=11 // pred_check
          %p316 = pneg %p182
        $region26: #{tpu_custom_call.1} parent=11 // pred_check_branch
          %318 = sbr.rel (%p316) target = $region28
        $region27: #{tpu_custom_call.1} parent=11 // pred_region
          _
        $region28: #{tpu_custom_call.1} parent=11 // pred_fallthru
          _
        // Predicated region
        $region29: #{tpu_custom_call.1} parent=11 // pred_check
          %p319 = pneg %p203
        $region30: #{tpu_custom_call.1} parent=11 // pred_check_branch
          %321 = sbr.rel (%p319) target = $region32
        $region31: #{tpu_custom_call.1} parent=11 // pred_region
          _
        $region32: #{tpu_custom_call.1} parent=11 // pred_fallthru
          _
        // Predicated region
        $region33: #{tpu_custom_call.1} parent=11 // pred_check
          %p322 = pneg %p224
        $region34: #{tpu_custom_call.1} parent=11 // pred_check_branch
          %324 = sbr.rel (%p322) target = $region36
        $region35: #{tpu_custom_call.1} parent=11 // pred_region
          _
        $region36: #{tpu_custom_call.1} parent=11 // pred_fallthru
          _
        // Predicated region
        $region37: #{tpu_custom_call.1} parent=11 // pred_check
          %p325 = pneg %p245
        $region38: #{tpu_custom_call.1} parent=11 // pred_check_branch
          %327 = sbr.rel (%p325) target = $region40
        $region39: #{tpu_custom_call.1} parent=11 // pred_region
          _
        $region40: #{tpu_custom_call.1} parent=11 // pred_fallthru
          _
        // Predicated region
        $region41: #{tpu_custom_call.1} parent=11 // pred_check
          %p328 = pneg %p266
        $region42: #{tpu_custom_call.1} parent=11 // pred_check_branch
          %330 = sbr.rel (%p328) target = $region44
        $region43: #{tpu_custom_call.1} parent=11 // pred_region
          _
        $region44: #{tpu_custom_call.1} parent=11 // pred_fallthru
          _
      $region12: #{tpu_custom_call.1} parent=5 // pred_fallthru
        _
      %p331 = scmp.lt.s32.totalorder %s20, 2
      // Predicated region
      $region45: #{tpu_custom_call.1} parent=5 // pred_check
        %p332 = pneg %p331
      $region46: #{tpu_custom_call.1} parent=5 // pred_check_branch
        %334 = sbr.rel (%p332) target = $region48
      $region47: #{tpu_custom_call.1} parent=5 // pred_region
        // Predicated region
        $region49: #{tpu_custom_call.1} parent=47 // pred_check
          %p335 = pneg %p40
        $region50: #{tpu_custom_call.1} parent=47 // pred_check_branch
          %337 = sbr.rel (%p335) target = $region52
        $region51: #{tpu_custom_call.1} parent=47 // pred_region
          %s338 = smul.u32 64, %s20
          %p339 = scmp.lt.s32.totalorder %s338, 127
          %s340 = scalar_select %p339, %s338, 127
          %s341 = smul.addr %s340, 8
          %s342 = scalar_lea.vmem %s0, %s341
          %s343 = smul.u32 64, %s20
        $region52: #{tpu_custom_call.1} parent=47 // pred_fallthru
          _
        // Predicated region
        $region53: #{tpu_custom_call.1} parent=47 // pred_check
          %p344 = pneg %p66
        $region54: #{tpu_custom_call.1} parent=47 // pred_check_branch
          %346 = sbr.rel (%p344) target = $region56
        $region55: #{tpu_custom_call.1} parent=47 // pred_region
          %s347 = smul.u32 64, %s20
          %p348 = scmp.lt.s32.totalorder %s347, 127
          %s349 = scalar_select %p348, %s347, 127
          %s350 = smul.addr %s349, 8
          %s351 = scalar_lea.vmem %s1, %s350
          %s352 = smul.u32 64, %s20
        $region56: #{tpu_custom_call.1} parent=47 // pred_fallthru
          _
        // Predicated region
        $region57: #{tpu_custom_call.1} parent=47 // pred_check
          %p353 = pneg %p92
        $region58: #{tpu_custom_call.1} parent=47 // pred_check_branch
          %355 = sbr.rel (%p353) target = $region60
        $region59: #{tpu_custom_call.1} parent=47 // pred_region
          %s356 = smul.u32 64, %s20
          %p357 = scmp.lt.s32.totalorder %s356, 127
          %s358 = scalar_select %p357, %s356, 127
          %s359 = smul.addr %s358, 8
          %s360 = scalar_lea.vmem %s2, %s359
          %s361 = smul.u32 64, %s20
        $region60: #{tpu_custom_call.1} parent=47 // pred_fallthru
          _
      $region48: #{tpu_custom_call.1} parent=5 // pred_fallthru
        _
      %p362 = scmp.le.s32.totalorder 1, %s20
      %p363 = scmp.lt.s32.totalorder %s20, 3
      %p364 = pnand %p362, %p363
      %p365 = pneg %p364
      // Predicated region
      $region61: #{tpu_custom_call.1} parent=5 // pred_check
        _
      $region62: #{tpu_custom_call.1} parent=5 // pred_check_branch
        %367 = sbr.rel (%p364) target = $region64
      $region63: #{tpu_custom_call.1} parent=5 // pred_region
        %s368 = ssub.s32 %s20, 1
        %s369 = smul.u32 64, %s25
        %p370 = scmp.lt.s32.totalorder %s369, 127
        %s371 = scalar_select %p370, %s369, 127
        %s372 = smul.addr %s371, 8
        %s373 = scalar_lea.vmem %s0, %s372
        %p374 = pneg %p46
        %p375 = pneg %p43
        %s376 = smul.u32 64, %s25
        %p377 = scmp.lt.s32.totalorder %s376, 127
        %s378 = scalar_select %p377, %s376, 127
        %s379 = smul.addr %s378, 8
        %s380 = scalar_lea.vmem %s1, %s379
        %p381 = pneg %p72
        %p382 = pneg %p69
        %s383 = smul.u32 64, %s25
        %p384 = scmp.lt.s32.totalorder %s383, 127
        %s385 = scalar_select %p384, %s383, 127
        %s386 = smul.addr %s385, 8
        %s387 = scalar_lea.vmem %s2, %s386
        %p388 = pneg %p98
        %p389 = pneg %p95
        %p390 = pneg %p119
        %p391 = pneg %p116
        %p392 = pneg %p140
        %p393 = pneg %p137
        %p394 = pneg %p161
        %p395 = pneg %p158
        %p396 = pneg %p182
        %p397 = pneg %p179
        %p398 = pneg %p203
        %p399 = pneg %p200
        %p400 = pneg %p224
        %p401 = pneg %p221
        %p402 = pneg %p245
        %p403 = pneg %p242
        %p404 = pneg %p266
        %p405 = pneg %p263
        %p406 = pneg %p292
        %p407 = pneg %p289
        %s408 = sand.u32 %s279, 1
        %s409 = scalar_lea.sflag [#allocation3], %s408
        %s410 = sand.u32 %s279, 1
        %s411 = smul.addr %s410, 512
        %s412 = scalar_lea.vmem [#allocation2], %s411
        %s413 = smul.u32 64, %s25
        %p414 = scmp.lt.s32.totalorder %s413, 127
        %s415 = scalar_select %p414, %s413, 127
        %s416 = smul.addr %s415, 8
        %s417 = scalar_lea.vmem %s0, %s416
        %s418 = smul.u32 64, %s25
        %s419 = smul.u32 64, %s25
        %p420 = scmp.lt.s32.totalorder %s419, 127
        %s421 = scalar_select %p420, %s419, 127
        %s422 = smul.addr %s421, 8
        %s423 = scalar_lea.vmem %s1, %s422
        %s424 = smul.u32 64, %s25
        %s425 = smul.u32 64, %s25
        %p426 = scmp.lt.s32.totalorder %s425, 127
        %s427 = scalar_select %p426, %s425, 127
        %s428 = smul.addr %s427, 8
        %s429 = scalar_lea.vmem %s2, %s428
        %s430 = smul.u32 64, %s25
        %s431 = smul.u32 64, %s25
        %v433 = vld [vmem:[%s417] sm:$0xff]
        %v434 = vld [vmem:[%s417 + $0x8] sm:$0xff]
        %v435 = vld [vmem:[%s417 + $0x10] sm:$0xff]
        %v436 = vld [vmem:[%s417 + $0x18] sm:$0xff]
        %v437 = vld [vmem:[%s417 + $0x20] sm:$0xff]
        %v438 = vld [vmem:[%s417 + $0x28] sm:$0xff]
        %v439 = vld [vmem:[%s417 + $0x30] sm:$0xff]
        %v440 = vld [vmem:[%s417 + $0x38] sm:$0xff]
        %v441 = vld [vmem:[%s417 + $0x40] sm:$0xff]
        %v442 = vld [vmem:[%s417 + $0x48] sm:$0xff]
        %v443 = vld [vmem:[%s417 + $0x50] sm:$0xff]
        %v444 = vld [vmem:[%s417 + $0x58] sm:$0xff]
        %v445 = vld [vmem:[%s417 + $0x60] sm:$0xff]
        %v446 = vld [vmem:[%s417 + $0x68] sm:$0xff]
        %v447 = vld [vmem:[%s417 + $0x70] sm:$0xff]
        %v448 = vld [vmem:[%s417 + $0x78] sm:$0xff]
        %v449 = vld [vmem:[%s417 + $0x80] sm:$0xff]
        %v450 = vld [vmem:[%s417 + $0x88] sm:$0xff]
        %v451 = vld [vmem:[%s417 + $0x90] sm:$0xff]
        %v452 = vld [vmem:[%s417 + $0x98] sm:$0xff]
        %v453 = vld [vmem:[%s417 + $0xa0] sm:$0xff]
        %v454 = vld [vmem:[%s417 + $0xa8] sm:$0xff]
        %v455 = vld [vmem:[%s417 + $0xb0] sm:$0xff]
        %v456 = vld [vmem:[%s417 + $0xb8] sm:$0xff]
        %v457 = vld [vmem:[%s417 + $0xc0] sm:$0xff]
        %v458 = vld [vmem:[%s417 + $0xc8] sm:$0xff]
        %v459 = vld [vmem:[%s417 + $0xd0] sm:$0xff]
        %v460 = vld [vmem:[%s417 + $0xd8] sm:$0xff]
        %v461 = vld [vmem:[%s417 + $0xe0] sm:$0xff]
        %v462 = vld [vmem:[%s417 + $0xe8] sm:$0xff]
        %v463 = vld [vmem:[%s417 + $0xf0] sm:$0xff]
        %v464 = vld [vmem:[%s417 + $0xf8] sm:$0xff]
        %v465 = vld [vmem:[%s417 + $0x100] sm:$0xff]
        %v466 = vld [vmem:[%s417 + $0x108] sm:$0xff]
        %v467 = vld [vmem:[%s417 + $0x110] sm:$0xff]
        %v468 = vld [vmem:[%s417 + $0x118] sm:$0xff]
        %v469 = vld [vmem:[%s417 + $0x120] sm:$0xff]
        %v470 = vld [vmem:[%s417 + $0x128] sm:$0xff]
        %v471 = vld [vmem:[%s417 + $0x130] sm:$0xff]
        %v472 = vld [vmem:[%s417 + $0x138] sm:$0xff]
        %v473 = vld [vmem:[%s417 + $0x140] sm:$0xff]
        %v474 = vld [vmem:[%s417 + $0x148] sm:$0xff]
        %v475 = vld [vmem:[%s417 + $0x150] sm:$0xff]
        %v476 = vld [vmem:[%s417 + $0x158] sm:$0xff]
        %v477 = vld [vmem:[%s417 + $0x160] sm:$0xff]
        %v478 = vld [vmem:[%s417 + $0x168] sm:$0xff]
        %v479 = vld [vmem:[%s417 + $0x170] sm:$0xff]
        %v480 = vld [vmem:[%s417 + $0x178] sm:$0xff]
        %v481 = vld [vmem:[%s417 + $0x180] sm:$0xff]
        %v482 = vld [vmem:[%s417 + $0x188] sm:$0xff]
        %v483 = vld [vmem:[%s417 + $0x190] sm:$0xff]
        %v484 = vld [vmem:[%s417 + $0x198] sm:$0xff]
        %v485 = vld [vmem:[%s417 + $0x1a0] sm:$0xff]
        %v486 = vld [vmem:[%s417 + $0x1a8] sm:$0xff]
        %v487 = vld [vmem:[%s417 + $0x1b0] sm:$0xff]
        %v488 = vld [vmem:[%s417 + $0x1b8] sm:$0xff]
        %v489 = vld [vmem:[%s417 + $0x1c0] sm:$0xff]
        %v490 = vld [vmem:[%s417 + $0x1c8] sm:$0xff]
        %v491 = vld [vmem:[%s417 + $0x1d0] sm:$0xff]
        %v492 = vld [vmem:[%s417 + $0x1d8] sm:$0xff]
        %v493 = vld [vmem:[%s417 + $0x1e0] sm:$0xff]
        %v494 = vld [vmem:[%s417 + $0x1e8] sm:$0xff]
        %v495 = vld [vmem:[%s417 + $0x1f0] sm:$0xff]
        %v496 = vld [vmem:[%s417 + $0x1f8] sm:$0xff]
        %v497 = vpack.c.bf16 %v434, %v433
        %v498 = vpack.c.bf16 %v436, %v435
        %v499 = vpack.c.bf16 %v438, %v437
        %v500 = vpack.c.bf16 %v440, %v439
        %v501 = vpack.c.bf16 %v442, %v441
        %v502 = vpack.c.bf16 %v444, %v443
        %v503 = vpack.c.bf16 %v446, %v445
        %v504 = vpack.c.bf16 %v448, %v447
        %v505 = vpack.c.bf16 %v450, %v449
        %v506 = vpack.c.bf16 %v452, %v451
        %v507 = vpack.c.bf16 %v454, %v453
        %v508 = vpack.c.bf16 %v456, %v455
        %v509 = vpack.c.bf16 %v458, %v457
        %v510 = vpack.c.bf16 %v460, %v459
        %v511 = vpack.c.bf16 %v462, %v461
        %v512 = vpack.c.bf16 %v464, %v463
        %v513 = vpack.c.bf16 %v466, %v465
        %v514 = vpack.c.bf16 %v468, %v467
        %v515 = vpack.c.bf16 %v470, %v469
        %v516 = vpack.c.bf16 %v472, %v471
        %v517 = vpack.c.bf16 %v474, %v473
        %v518 = vpack.c.bf16 %v476, %v475
        %v519 = vpack.c.bf16 %v478, %v477
        %v520 = vpack.c.bf16 %v480, %v479
        %v521 = vpack.c.bf16 %v482, %v481
        %v522 = vpack.c.bf16 %v484, %v483
        %v523 = vpack.c.bf16 %v486, %v485
        %v524 = vpack.c.bf16 %v488, %v487
        %v525 = vpack.c.bf16 %v490, %v489
        %v526 = vpack.c.bf16 %v492, %v491
        %v527 = vpack.c.bf16 %v494, %v493
        %v528 = vpack.c.bf16 %v496, %v495
        %v529 = vld [vmem:[%s423] sm:$0xff]
        %v530 = vld [vmem:[%s423 + $0x8] sm:$0xff]
        %v531 = vld [vmem:[%s423 + $0x10] sm:$0xff]
        %v532 = vld [vmem:[%s423 + $0x18] sm:$0xff]
        %v533 = vld [vmem:[%s423 + $0x20] sm:$0xff]
        %v534 = vld [vmem:[%s423 + $0x28] sm:$0xff]
        %v535 = vld [vmem:[%s423 + $0x30] sm:$0xff]
        %v536 = vld [vmem:[%s423 + $0x38] sm:$0xff]
        %v537 = vld [vmem:[%s423 + $0x40] sm:$0xff]
        %v538 = vld [vmem:[%s423 + $0x48] sm:$0xff]
        %v539 = vld [vmem:[%s423 + $0x50] sm:$0xff]
        %v540 = vld [vmem:[%s423 + $0x58] sm:$0xff]
        %v541 = vld [vmem:[%s423 + $0x60] sm:$0xff]
        %v542 = vld [vmem:[%s423 + $0x68] sm:$0xff]
        %v543 = vld [vmem:[%s423 + $0x70] sm:$0xff]
        %v544 = vld [vmem:[%s423 + $0x78] sm:$0xff]
        %v545 = vld [vmem:[%s423 + $0x80] sm:$0xff]
        %v546 = vld [vmem:[%s423 + $0x88] sm:$0xff]
        %v547 = vld [vmem:[%s423 + $0x90] sm:$0xff]
        %v548 = vld [vmem:[%s423 + $0x98] sm:$0xff]
        %v549 = vld [vmem:[%s423 + $0xa0] sm:$0xff]
        %v550 = vld [vmem:[%s423 + $0xa8] sm:$0xff]
        %v551 = vld [vmem:[%s423 + $0xb0] sm:$0xff]
        %v552 = vld [vmem:[%s423 + $0xb8] sm:$0xff]
        %v553 = vld [vmem:[%s423 + $0xc0] sm:$0xff]
        %v554 = vld [vmem:[%s423 + $0xc8] sm:$0xff]
        %v555 = vld [vmem:[%s423 + $0xd0] sm:$0xff]
        %v556 = vld [vmem:[%s423 + $0xd8] sm:$0xff]
        %v557 = vld [vmem:[%s423 + $0xe0] sm:$0xff]
        %v558 = vld [vmem:[%s423 + $0xe8] sm:$0xff]
        %v559 = vld [vmem:[%s423 + $0xf0] sm:$0xff]
        %v560 = vld [vmem:[%s423 + $0xf8] sm:$0xff]
        %v561 = vld [vmem:[%s423 + $0x100] sm:$0xff]
        %v562 = vld [vmem:[%s423 + $0x108] sm:$0xff]
        %v563 = vld [vmem:[%s423 + $0x110] sm:$0xff]
        %v564 = vld [vmem:[%s423 + $0x118] sm:$0xff]
        %v565 = vld [vmem:[%s423 + $0x120] sm:$0xff]
        %v566 = vld [vmem:[%s423 + $0x128] sm:$0xff]
        %v567 = vld [vmem:[%s423 + $0x130] sm:$0xff]
        %v568 = vld [vmem:[%s423 + $0x138] sm:$0xff]
        %v569 = vld [vmem:[%s423 + $0x140] sm:$0xff]
        %v570 = vld [vmem:[%s423 + $0x148] sm:$0xff]
        %v571 = vld [vmem:[%s423 + $0x150] sm:$0xff]
        %v572 = vld [vmem:[%s423 + $0x158] sm:$0xff]
        %v573 = vld [vmem:[%s423 + $0x160] sm:$0xff]
        %v574 = vld [vmem:[%s423 + $0x168] sm:$0xff]
        %v575 = vld [vmem:[%s423 + $0x170] sm:$0xff]
        %v576 = vld [vmem:[%s423 + $0x178] sm:$0xff]
        %v577 = vld [vmem:[%s423 + $0x180] sm:$0xff]
        %v578 = vld [vmem:[%s423 + $0x188] sm:$0xff]
        %v579 = vld [vmem:[%s423 + $0x190] sm:$0xff]
        %v580 = vld [vmem:[%s423 + $0x198] sm:$0xff]
        %v581 = vld [vmem:[%s423 + $0x1a0] sm:$0xff]
        %v582 = vld [vmem:[%s423 + $0x1a8] sm:$0xff]
        %v583 = vld [vmem:[%s423 + $0x1b0] sm:$0xff]
        %v584 = vld [vmem:[%s423 + $0x1b8] sm:$0xff]
        %v585 = vld [vmem:[%s423 + $0x1c0] sm:$0xff]
        %v586 = vld [vmem:[%s423 + $0x1c8] sm:$0xff]
        %v587 = vld [vmem:[%s423 + $0x1d0] sm:$0xff]
        %v588 = vld [vmem:[%s423 + $0x1d8] sm:$0xff]
        %v589 = vld [vmem:[%s423 + $0x1e0] sm:$0xff]
        %v590 = vld [vmem:[%s423 + $0x1e8] sm:$0xff]
        %v591 = vld [vmem:[%s423 + $0x1f0] sm:$0xff]
        %v592 = vld [vmem:[%s423 + $0x1f8] sm:$0xff]
        %v593 = vpack.c.bf16 %v530, %v529
        %v594 = vpack.c.bf16 %v532, %v531
        %v595 = vpack.c.bf16 %v534, %v533
        %v596 = vpack.c.bf16 %v536, %v535
        %v597 = vpack.c.bf16 %v538, %v537
        %v598 = vpack.c.bf16 %v540, %v539
        %v599 = vpack.c.bf16 %v542, %v541
        %v600 = vpack.c.bf16 %v544, %v543
        %v601 = vpack.c.bf16 %v546, %v545
        %v602 = vpack.c.bf16 %v548, %v547
        %v603 = vpack.c.bf16 %v550, %v549
        %v604 = vpack.c.bf16 %v552, %v551
        %v605 = vpack.c.bf16 %v554, %v553
        %v606 = vpack.c.bf16 %v556, %v555
        %v607 = vpack.c.bf16 %v558, %v557
        %v608 = vpack.c.bf16 %v560, %v559
        %v609 = vpack.c.bf16 %v562, %v561
        %v610 = vpack.c.bf16 %v564, %v563
        %v611 = vpack.c.bf16 %v566, %v565
        %v612 = vpack.c.bf16 %v568, %v567
        %v613 = vpack.c.bf16 %v570, %v569
        %v614 = vpack.c.bf16 %v572, %v571
        %v615 = vpack.c.bf16 %v574, %v573
        %v616 = vpack.c.bf16 %v576, %v575
        %v617 = vpack.c.bf16 %v578, %v577
        %v618 = vpack.c.bf16 %v580, %v579
        %v619 = vpack.c.bf16 %v582, %v581
        %v620 = vpack.c.bf16 %v584, %v583
        %v621 = vpack.c.bf16 %v586, %v585
        %v622 = vpack.c.bf16 %v588, %v587
        %v623 = vpack.c.bf16 %v590, %v589
        %v624 = vpack.c.bf16 %v592, %v591
        %v625 = vld [vmem:[%s429] sm:$0xff]
        %v626 = vld [vmem:[%s429 + $0x8] sm:$0xff]
        %v627 = vld [vmem:[%s429 + $0x10] sm:$0xff]
        %v628 = vld [vmem:[%s429 + $0x18] sm:$0xff]
        %v629 = vld [vmem:[%s429 + $0x20] sm:$0xff]
        %v630 = vld [vmem:[%s429 + $0x28] sm:$0xff]
        %v631 = vld [vmem:[%s429 + $0x30] sm:$0xff]
        %v632 = vld [vmem:[%s429 + $0x38] sm:$0xff]
        %v633 = vld [vmem:[%s429 + $0x40] sm:$0xff]
        %v634 = vld [vmem:[%s429 + $0x48] sm:$0xff]
        %v635 = vld [vmem:[%s429 + $0x50] sm:$0xff]
        %v636 = vld [vmem:[%s429 + $0x58] sm:$0xff]
        %v637 = vld [vmem:[%s429 + $0x60] sm:$0xff]
        %v638 = vld [vmem:[%s429 + $0x68] sm:$0xff]
        %v639 = vld [vmem:[%s429 + $0x70] sm:$0xff]
        %v640 = vld [vmem:[%s429 + $0x78] sm:$0xff]
        %v641 = vld [vmem:[%s429 + $0x80] sm:$0xff]
        %v642 = vld [vmem:[%s429 + $0x88] sm:$0xff]
        %v643 = vld [vmem:[%s429 + $0x90] sm:$0xff]
        %v644 = vld [vmem:[%s429 + $0x98] sm:$0xff]
        %v645 = vld [vmem:[%s429 + $0xa0] sm:$0xff]
        %v646 = vld [vmem:[%s429 + $0xa8] sm:$0xff]
        %v647 = vld [vmem:[%s429 + $0xb0] sm:$0xff]
        %v648 = vld [vmem:[%s429 + $0xb8] sm:$0xff]
        %v649 = vld [vmem:[%s429 + $0xc0] sm:$0xff]
        %v650 = vld [vmem:[%s429 + $0xc8] sm:$0xff]
        %v651 = vld [vmem:[%s429 + $0xd0] sm:$0xff]
        %v652 = vld [vmem:[%s429 + $0xd8] sm:$0xff]
        %v653 = vld [vmem:[%s429 + $0xe0] sm:$0xff]
        %v654 = vld [vmem:[%s429 + $0xe8] sm:$0xff]
        %v655 = vld [vmem:[%s429 + $0xf0] sm:$0xff]
        %v656 = vld [vmem:[%s429 + $0xf8] sm:$0xff]
        %v657 = vld [vmem:[%s429 + $0x100] sm:$0xff]
        %v658 = vld [vmem:[%s429 + $0x108] sm:$0xff]
        %v659 = vld [vmem:[%s429 + $0x110] sm:$0xff]
        %v660 = vld [vmem:[%s429 + $0x118] sm:$0xff]
        %v661 = vld [vmem:[%s429 + $0x120] sm:$0xff]
        %v662 = vld [vmem:[%s429 + $0x128] sm:$0xff]
        %v663 = vld [vmem:[%s429 + $0x130] sm:$0xff]
        %v664 = vld [vmem:[%s429 + $0x138] sm:$0xff]
        %v665 = vld [vmem:[%s429 + $0x140] sm:$0xff]
        %v666 = vld [vmem:[%s429 + $0x148] sm:$0xff]
        %v667 = vld [vmem:[%s429 + $0x150] sm:$0xff]
        %v668 = vld [vmem:[%s429 + $0x158] sm:$0xff]
        %v669 = vld [vmem:[%s429 + $0x160] sm:$0xff]
        %v670 = vld [vmem:[%s429 + $0x168] sm:$0xff]
        %v671 = vld [vmem:[%s429 + $0x170] sm:$0xff]
        %v672 = vld [vmem:[%s429 + $0x178] sm:$0xff]
        %v673 = vld [vmem:[%s429 + $0x180] sm:$0xff]
        %v674 = vld [vmem:[%s429 + $0x188] sm:$0xff]
        %v675 = vld [vmem:[%s429 + $0x190] sm:$0xff]
        %v676 = vld [vmem:[%s429 + $0x198] sm:$0xff]
        %v677 = vld [vmem:[%s429 + $0x1a0] sm:$0xff]
        %v678 = vld [vmem:[%s429 + $0x1a8] sm:$0xff]
        %v679 = vld [vmem:[%s429 + $0x1b0] sm:$0xff]
        %v680 = vld [vmem:[%s429 + $0x1b8] sm:$0xff]
        %v681 = vld [vmem:[%s429 + $0x1c0] sm:$0xff]
        %v682 = vld [vmem:[%s429 + $0x1c8] sm:$0xff]
        %v683 = vld [vmem:[%s429 + $0x1d0] sm:$0xff]
        %v684 = vld [vmem:[%s429 + $0x1d8] sm:$0xff]
        %v685 = vld [vmem:[%s429 + $0x1e0] sm:$0xff]
        %v686 = vld [vmem:[%s429 + $0x1e8] sm:$0xff]
        %v687 = vld [vmem:[%s429 + $0x1f0] sm:$0xff]
        %v688 = vld [vmem:[%s429 + $0x1f8] sm:$0xff]
        %v689 = vpack.c.bf16 %v626, %v625
        %v690 = vpack.c.bf16 %v628, %v627
        %v691 = vpack.c.bf16 %v630, %v629
        %v692 = vpack.c.bf16 %v632, %v631
        %v693 = vpack.c.bf16 %v634, %v633
        %v694 = vpack.c.bf16 %v636, %v635
        %v695 = vpack.c.bf16 %v638, %v637
        %v696 = vpack.c.bf16 %v640, %v639
        %v697 = vpack.c.bf16 %v642, %v641
        %v698 = vpack.c.bf16 %v644, %v643
        %v699 = vpack.c.bf16 %v646, %v645
        %v700 = vpack.c.bf16 %v648, %v647
        %v701 = vpack.c.bf16 %v650, %v649
        %v702 = vpack.c.bf16 %v652, %v651
        %v703 = vpack.c.bf16 %v654, %v653
        %v704 = vpack.c.bf16 %v656, %v655
        %v705 = vpack.c.bf16 %v658, %v657
        %v706 = vpack.c.bf16 %v660, %v659
        %v707 = vpack.c.bf16 %v662, %v661
        %v708 = vpack.c.bf16 %v664, %v663
        %v709 = vpack.c.bf16 %v666, %v665
        %v710 = vpack.c.bf16 %v668, %v667
        %v711 = vpack.c.bf16 %v670, %v669
        %v712 = vpack.c.bf16 %v672, %v671
        %v713 = vpack.c.bf16 %v674, %v673
        %v714 = vpack.c.bf16 %v676, %v675
        %v715 = vpack.c.bf16 %v678, %v677
        %v716 = vpack.c.bf16 %v680, %v679
        %v717 = vpack.c.bf16 %v682, %v681
        %v718 = vpack.c.bf16 %v684, %v683
        %v719 = vpack.c.bf16 %v686, %v685
        %v720 = vpack.c.bf16 %v688, %v687
        %v721 = vld [vmem:[%s3] sm:$0xff]
        %v722 = vld [vmem:[%s3 + $0x8] sm:$0xff]
        %v723 = vld [vmem:[%s3 + $0x10] sm:$0xff]
        %v724 = vld [vmem:[%s3 + $0x18] sm:$0xff]
        %v725 = vld [vmem:[%s3 + $0x20] sm:$0xff]
        %v726 = vld [vmem:[%s3 + $0x28] sm:$0xff]
        %v727 = vld [vmem:[%s3 + $0x30] sm:$0xff]
        %v728 = vld [vmem:[%s3 + $0x38] sm:$0xff]
        %v729 = vld [vmem:[%s3 + $0x40] sm:$0xff]
        %v730 = vld [vmem:[%s3 + $0x48] sm:$0xff]
        %v731 = vld [vmem:[%s3 + $0x50] sm:$0xff]
        %v732 = vld [vmem:[%s3 + $0x58] sm:$0xff]
        %v733 = vld [vmem:[%s3 + $0x60] sm:$0xff]
        %v734 = vld [vmem:[%s3 + $0x68] sm:$0xff]
        %v735 = vld [vmem:[%s3 + $0x70] sm:$0xff]
        %v736 = vld [vmem:[%s3 + $0x78] sm:$0xff]
        %v737 = vld [vmem:[%s4] sm:$0xff]
        %v738 = vld [vmem:[%s4 + $0x8] sm:$0x33]
        %v741 = vunpack.c.l.b16 %v737
        %v742 = vunpack.c.h.b16 %v737
        %v743 = vunpack.c.l.b16 %v738
        %v744 = vunpack.c.h.b16 %v738
        %v745 = vpack.c.b16 %v743, %v741
        %v746 = vpack.c.b16 %v744, %v742
        %vm747 = vcmask 97280
        %v749 = vsel %vm747, %v593, 0
        %v752 = vsel %vm747, %v594, 0
        %v755 = vsel %vm747, %v595, 0
        %v758 = vsel %vm747, %v596, 0
        %v761 = vsel %vm747, %v597, 0
        %v764 = vsel %vm747, %v598, 0
        %v767 = vsel %vm747, %v599, 0
        %v770 = vsel %vm747, %v600, 0
        %v773 = vsel %vm747, %v601, 0
        %v776 = vsel %vm747, %v602, 0
        %v779 = vsel %vm747, %v603, 0
        %v782 = vsel %vm747, %v604, 0
        %v785 = vsel %vm747, %v605, 0
        %v788 = vsel %vm747, %v606, 0
        %v791 = vsel %vm747, %v607, 0
        %v794 = vsel %vm747, %v608, 0
        %v797 = vsel %vm747, %v609, 0
        %v800 = vsel %vm747, %v610, 0
        %v803 = vsel %vm747, %v611, 0
        %v806 = vsel %vm747, %v612, 0
        %v809 = vsel %vm747, %v613, 0
        %v812 = vsel %vm747, %v614, 0
        %v815 = vsel %vm747, %v615, 0
        %v818 = vsel %vm747, %v616, 0
        %v821 = vsel %vm747, %v617, 0
        %v824 = vsel %vm747, %v618, 0
        %v827 = vsel %vm747, %v619, 0
        %v830 = vsel %vm747, %v620, 0
        %v833 = vsel %vm747, %v621, 0
        %v836 = vsel %vm747, %v622, 0
        %v839 = vsel %vm747, %v623, 0
        %v842 = vsel %vm747, %v624, 0
        %vm844 = vcmask 1045504
        %v846 = vsel %vm844, %v745, 0
        %v849 = vsel %vm844, %v746, 0
        %851 = vmatprep.subr.bf16.mxu0 %v849
        %852 = vmatpush1.bf16.msra.mxu0 %v846
        %853 = vmatprep.subr.bf16.mxu0 0
        %854 = vmatpush1.bf16.msra.mxu0 0
        %855 = vmatprep.subr.bf16.mxu0 0
        %856 = vmatpush1.bf16.msra.mxu0 0
        %857 = vmatprep.subr.bf16.mxu0 0
        %858 = vmatpush1.bf16.msra.mxu0 0
        %859 = vmatprep.subr.bf16.mxu0 0
        %860 = vmatpush1.bf16.msra.mxu0 0
        %861 = vmatprep.subr.bf16.mxu0 0
        %862 = vmatpush1.bf16.msra.mxu0 0
        %863 = vmatprep.subr.bf16.mxu0 0
        %864 = vmatpush1.bf16.msra.mxu0 0
        %865 = vmatprep.subr.bf16.mxu0 0
        %866 = vmatpush1.bf16.msra.mxu0 0
        %867 = vmatprep.subr.bf16.mxu0 0
        %868 = vmatpush1.bf16.msra.mxu0 0
        %869 = vmatprep.subr.bf16.mxu0 0
        %870 = vmatpush1.bf16.msra.mxu0 0
        %871 = vmatprep.subr.bf16.mxu0 0
        %872 = vmatpush1.bf16.msra.mxu0 0
        %873 = vmatprep.subr.bf16.mxu0 0
        %874 = vmatpush1.bf16.msra.mxu0 0
        %875 = vmatprep.subr.bf16.mxu0 0
        %876 = vmatpush1.bf16.msra.mxu0 0
        %877 = vmatprep.subr.bf16.mxu0 0
        %878 = vmatpush1.bf16.msra.mxu0 0
        %879 = vmatprep.subr.bf16.mxu0 0
        %880 = vmatpush1.bf16.msra.mxu0 0
        %881 = vmatprep.subr.bf16.mxu0 0
        %882 = vmatpush1.bf16.msra.mxu0 0
        %883 = vmatprep.mubr.bf16.mxu0 0
        %884 = vmatmul.mubr.bf16.gmra.mrb[0].mxu0 %v749
        %v885 = vpop.f32.mrb[0].mxu0
        %v886 = vadd.f32 0.0, %v885
        %v887 = vpop.f32.mrb[0].mxu0
        %v888 = vadd.f32 0.0, %v887
        %v889 = vpop.f32.mrb[0].mxu0
        %v890 = vadd.f32 0.0, %v889
        %v891 = vpop.f32.mrb[0].mxu0
        %v892 = vadd.f32 0.0, %v891
        %893 = vmatprep.mubr.bf16.mxu0 0
        %894 = vmatmul.mubr.bf16.gmra.mrb[0].mxu0 %v752
        %v895 = vpop.f32.mrb[0].mxu0
        %v896 = vadd.f32 0.0, %v895
        %v897 = vpop.f32.mrb[0].mxu0
        %v898 = vadd.f32 0.0, %v897
        %v899 = vpop.f32.mrb[0].mxu0
        %v900 = vadd.f32 0.0, %v899
        %v901 = vpop.f32.mrb[0].mxu0
        %v902 = vadd.f32 0.0, %v901
        %903 = vmatprep.mubr.bf16.mxu0 0
        %904 = vmatmul.mubr.bf16.gmra.mrb[0].mxu0 %v755
        %v905 = vpop.f32.mrb[0].mxu0
        %v906 = vadd.f32 0.0, %v905
        %v907 = vpop.f32.mrb[0].mxu0
        %v908 = vadd.f32 0.0, %v907
        %v909 = vpop.f32.mrb[0].mxu0
        %v910 = vadd.f32 0.0, %v909
        %v911 = vpop.f32.mrb[0].mxu0
        %v912 = vadd.f32 0.0, %v911
        %913 = vmatprep.mubr.bf16.mxu0 0
        %914 = vmatmul.mubr.bf16.gmra.mrb[0].mxu0 %v758
        %v915 = vpop.f32.mrb[0].mxu0
        %v916 = vadd.f32 0.0, %v915
        %v917 = vpop.f32.mrb[0].mxu0
        %v918 = vadd.f32 0.0, %v917
        %v919 = vpop.f32.mrb[0].mxu0
        %v920 = vadd.f32 0.0, %v919
        %v921 = vpop.f32.mrb[0].mxu0
        %v922 = vadd.f32 0.0, %v921
        %923 = vmatprep.mubr.bf16.mxu0 0
        %924 = vmatmul.mubr.bf16.gmra.mrb[0].mxu0 %v761
        %v925 = vpop.f32.mrb[0].mxu0
        %v926 = vadd.f32 0.0, %v925
        %v927 = vpop.f32.mrb[0].mxu0
        %v928 = vadd.f32 0.0, %v927
        %v929 = vpop.f32.mrb[0].mxu0
        %v930 = vadd.f32 0.0, %v929
        %v931 = vpop.f32.mrb[0].mxu0
        %v932 = vadd.f32 0.0, %v931
        %933 = vmatprep.mubr.bf16.mxu0 0
        %934 = vmatmul.mubr.bf16.gmra.mrb[0].mxu0 %v764
        %v935 = vpop.f32.mrb[0].mxu0
        %v936 = vadd.f32 0.0, %v935
        %v937 = vpop.f32.mrb[0].mxu0
        %v938 = vadd.f32 0.0, %v937
        %v939 = vpop.f32.mrb[0].mxu0
        %v940 = vadd.f32 0.0, %v939
        %v941 = vpop.f32.mrb[0].mxu0
        %v942 = vadd.f32 0.0, %v941
        %943 = vmatprep.mubr.bf16.mxu0 0
        %944 = vmatmul.mubr.bf16.gmra.mrb[0].mxu0 %v767
        %v945 = vpop.f32.mrb[0].mxu0
        %v946 = vadd.f32 0.0, %v945
        %v947 = vpop.f32.mrb[0].mxu0
        %v948 = vadd.f32 0.0, %v947
        %v949 = vpop.f32.mrb[0].mxu0
        %v950 = vadd.f32 0.0, %v949
        %v951 = vpop.f32.mrb[0].mxu0
        %v952 = vadd.f32 0.0, %v951
        %953 = vmatprep.mubr.bf16.mxu0 0
        %954 = vmatmul.mubr.bf16.gmra.mrb[0].mxu0 %v770
        %v955 = vpop.f32.mrb[0].mxu0
        %v956 = vadd.f32 0.0, %v955
        %v957 = vpop.f32.mrb[0].mxu0
        %v958 = vadd.f32 0.0, %v957
        %v959 = vpop.f32.mrb[0].mxu0
        %v960 = vadd.f32 0.0, %v959
        %v961 = vpop.f32.mrb[0].mxu0
        %v962 = vadd.f32 0.0, %v961
        %963 = vmatprep.mubr.bf16.mxu0 0
        %964 = vmatmul.mubr.bf16.gmra.mrb[0].mxu0 %v773
        %v965 = vpop.f32.mrb[0].mxu0
        %v966 = vadd.f32 0.0, %v965
        %v967 = vpop.f32.mrb[0].mxu0
        %v968 = vadd.f32 0.0, %v967
        %v969 = vpop.f32.mrb[0].mxu0
        %v970 = vadd.f32 0.0, %v969
        %v971 = vpop.f32.mrb[0].mxu0
        %v972 = vadd.f32 0.0, %v971
        %973 = vmatprep.mubr.bf16.mxu0 0
        %974 = vmatmul.mubr.bf16.gmra.mrb[0].mxu0 %v776
        %v975 = vpop.f32.mrb[0].mxu0
        %v976 = vadd.f32 0.0, %v975
        %v977 = vpop.f32.mrb[0].mxu0
        %v978 = vadd.f32 0.0, %v977
        %v979 = vpop.f32.mrb[0].mxu0
        %v980 = vadd.f32 0.0, %v979
        %v981 = vpop.f32.mrb[0].mxu0
        %v982 = vadd.f32 0.0, %v981
        %983 = vmatprep.mubr.bf16.mxu0 0
        %984 = vmatmul.mubr.bf16.gmra.mrb[0].mxu0 %v779
        %v985 = vpop.f32.mrb[0].mxu0
        %v986 = vadd.f32 0.0, %v985
        %v987 = vpop.f32.mrb[0].mxu0
        %v988 = vadd.f32 0.0, %v987
        %v989 = vpop.f32.mrb[0].mxu0
        %v990 = vadd.f32 0.0, %v989
        %v991 = vpop.f32.mrb[0].mxu0
        %v992 = vadd.f32 0.0, %v991
        %993 = vmatprep.mubr.bf16.mxu0 0
        %994 = vmatmul.mubr.bf16.gmra.mrb[0].mxu0 %v782
        %v995 = vpop.f32.mrb[0].mxu0
        %v996 = vadd.f32 0.0, %v995
        %v997 = vpop.f32.mrb[0].mxu0
        %v998 = vadd.f32 0.0, %v997
        %v999 = vpop.f32.mrb[0].mxu0
        %v1000 = vadd.f32 0.0, %v999
        %v1001 = vpop.f32.mrb[0].mxu0
        %v1002 = vadd.f32 0.0, %v1001
        %1003 = vmatprep.mubr.bf16.mxu0 0
        %1004 = vmatmul.mubr.bf16.gmra.mrb[0].mxu0 %v785
        %v1005 = vpop.f32.mrb[0].mxu0
        %v1006 = vadd.f32 0.0, %v1005
        %v1007 = vpop.f32.mrb[0].mxu0
        %v1008 = vadd.f32 0.0, %v1007
        %v1009 = vpop.f32.mrb[0].mxu0
        %v1010 = vadd.f32 0.0, %v1009
        %v1011 = vpop.f32.mrb[0].mxu0
        %v1012 = vadd.f32 0.0, %v1011
        %1013 = vmatprep.mubr.bf16.mxu0 0
        %1014 = vmatmul.mubr.bf16.gmra.mrb[0].mxu0 %v788
        %v1015 = vpop.f32.mrb[0].mxu0
        %v1016 = vadd.f32 0.0, %v1015
        %v1017 = vpop.f32.mrb[0].mxu0
        %v1018 = vadd.f32 0.0, %v1017
        %v1019 = vpop.f32.mrb[0].mxu0
        %v1020 = vadd.f32 0.0, %v1019
        %v1021 = vpop.f32.mrb[0].mxu0
        %v1022 = vadd.f32 0.0, %v1021
        %1023 = vmatprep.mubr.bf16.mxu0 0
        %1024 = vmatmul.mubr.bf16.gmra.mrb[0].mxu0 %v791
        %v1025 = vpop.f32.mrb[0].mxu0
        %v1026 = vadd.f32 0.0, %v1025
        %v1027 = vpop.f32.mrb[0].mxu0
        %v1028 = vadd.f32 0.0, %v1027
        %v1029 = vpop.f32.mrb[0].mxu0
        %v1030 = vadd.f32 0.0, %v1029
        %v1031 = vpop.f32.mrb[0].mxu0
        %v1032 = vadd.f32 0.0, %v1031
        %1033 = vmatprep.mubr.bf16.mxu0 0
        %1034 = vmatmul.mubr.bf16.gmra.mrb[0].mxu0 %v794
        %v1035 = vpop.f32.mrb[0].mxu0
        %v1036 = vadd.f32 0.0, %v1035
        %v1037 = vpop.f32.mrb[0].mxu0
        %v1038 = vadd.f32 0.0, %v1037
        %v1039 = vpop.f32.mrb[0].mxu0
        %v1040 = vadd.f32 0.0, %v1039
        %v1041 = vpop.f32.mrb[0].mxu0
        %v1042 = vadd.f32 0.0, %v1041
        %1043 = vmatprep.mubr.bf16.mxu0 0
        %1044 = vmatmul.mubr.bf16.gmra.mrb[0].mxu0 %v797
        %v1045 = vpop.f32.mrb[0].mxu0
        %v1046 = vadd.f32 0.0, %v1045
        %v1047 = vpop.f32.mrb[0].mxu0
        %v1048 = vadd.f32 0.0, %v1047
        %v1049 = vpop.f32.mrb[0].mxu0
        %v1050 = vadd.f32 0.0, %v1049
        %v1051 = vpop.f32.mrb[0].mxu0
        %v1052 = vadd.f32 0.0, %v1051
        %1053 = vmatprep.mubr.bf16.mxu0 0
        %1054 = vmatmul.mubr.bf16.gmra.mrb[0].mxu0 %v800
        %v1055 = vpop.f32.mrb[0].mxu0
        %v1056 = vadd.f32 0.0, %v1055
        %v1057 = vpop.f32.mrb[0].mxu0
        %v1058 = vadd.f32 0.0, %v1057
        %v1059 = vpop.f32.mrb[0].mxu0
        %v1060 = vadd.f32 0.0, %v1059
        %v1061 = vpop.f32.mrb[0].mxu0
        %v1062 = vadd.f32 0.0, %v1061
        %1063 = vmatprep.mubr.bf16.mxu0 0
        %1064 = vmatmul.mubr.bf16.gmra.mrb[0].mxu0 %v803
        %v1065 = vpop.f32.mrb[0].mxu0
        %v1066 = vadd.f32 0.0, %v1065
        %v1067 = vpop.f32.mrb[0].mxu0
        %v1068 = vadd.f32 0.0, %v1067
        %v1069 = vpop.f32.mrb[0].mxu0
        %v1070 = vadd.f32 0.0, %v1069
        %v1071 = vpop.f32.mrb[0].mxu0
        %v1072 = vadd.f32 0.0, %v1071
        %1073 = vmatprep.mubr.bf16.mxu0 0
        %1074 = vmatmul.mubr.bf16.gmra.mrb[0].mxu0 %v806
        %v1075 = vpop.f32.mrb[0].mxu0
        %v1076 = vadd.f32 0.0, %v1075
        %v1077 = vpop.f32.mrb[0].mxu0
        %v1078 = vadd.f32 0.0, %v1077
        %v1079 = vpop.f32.mrb[0].mxu0
        %v1080 = vadd.f32 0.0, %v1079
        %v1081 = vpop.f32.mrb[0].mxu0
        %v1082 = vadd.f32 0.0, %v1081
        %1083 = vmatprep.mubr.bf16.mxu0 0
        %1084 = vmatmul.mubr.bf16.gmra.mrb[0].mxu0 %v809
        %v1085 = vpop.f32.mrb[0].mxu0
        %v1086 = vadd.f32 0.0, %v1085
        %v1087 = vpop.f32.mrb[0].mxu0
        %v1088 = vadd.f32 0.0, %v1087
        %v1089 = vpop.f32.mrb[0].mxu0
        %v1090 = vadd.f32 0.0, %v1089
        %v1091 = vpop.f32.mrb[0].mxu0
        %v1092 = vadd.f32 0.0, %v1091
        %1093 = vmatprep.mubr.bf16.mxu0 0
        %1094 = vmatmul.mubr.bf16.gmra.mrb[0].mxu0 %v812
        %v1095 = vpop.f32.mrb[0].mxu0
        %v1096 = vadd.f32 0.0, %v1095
        %v1097 = vpop.f32.mrb[0].mxu0
        %v1098 = vadd.f32 0.0, %v1097
        %v1099 = vpop.f32.mrb[0].mxu0
        %v1100 = vadd.f32 0.0, %v1099
        %v1101 = vpop.f32.mrb[0].mxu0
        %v1102 = vadd.f32 0.0, %v1101
        %1103 = vmatprep.mubr.bf16.mxu0 0
        %1104 = vmatmul.mubr.bf16.gmra.mrb[0].mxu0 %v815
        %v1105 = vpop.f32.mrb[0].mxu0
        %v1106 = vadd.f32 0.0, %v1105
        %v1107 = vpop.f32.mrb[0].mxu0
        %v1108 = vadd.f32 0.0, %v1107
        %v1109 = vpop.f32.mrb[0].mxu0
        %v1110 = vadd.f32 0.0, %v1109
        %v1111 = vpop.f32.mrb[0].mxu0
        %v1112 = vadd.f32 0.0, %v1111
        %1113 = vmatprep.mubr.bf16.mxu0 0
        %1114 = vmatmul.mubr.bf16.gmra.mrb[0].mxu0 %v818
        %v1115 = vpop.f32.mrb[0].mxu0
        %v1116 = vadd.f32 0.0, %v1115
        %v1117 = vpop.f32.mrb[0].mxu0
        %v1118 = vadd.f32 0.0, %v1117
        %v1119 = vpop.f32.mrb[0].mxu0
        %v1120 = vadd.f32 0.0, %v1119
        %v1121 = vpop.f32.mrb[0].mxu0
        %v1122 = vadd.f32 0.0, %v1121
        %1123 = vmatprep.mubr.bf16.mxu0 0
        %1124 = vmatmul.mubr.bf16.gmra.mrb[0].mxu0 %v821
        %v1125 = vpop.f32.mrb[0].mxu0
        %v1126 = vadd.f32 0.0, %v1125
        %v1127 = vpop.f32.mrb[0].mxu0
        %v1128 = vadd.f32 0.0, %v1127
        %v1129 = vpop.f32.mrb[0].mxu0
        %v1130 = vadd.f32 0.0, %v1129
        %v1131 = vpop.f32.mrb[0].mxu0
        %v1132 = vadd.f32 0.0, %v1131
        %1133 = vmatprep.mubr.bf16.mxu0 0
        %1134 = vmatmul.mubr.bf16.gmra.mrb[0].mxu0 %v824
        %v1135 = vpop.f32.mrb[0].mxu0
        %v1136 = vadd.f32 0.0, %v1135
        %v1137 = vpop.f32.mrb[0].mxu0
        %v1138 = vadd.f32 0.0, %v1137
        %v1139 = vpop.f32.mrb[0].mxu0
        %v1140 = vadd.f32 0.0, %v1139
        %v1141 = vpop.f32.mrb[0].mxu0
        %v1142 = vadd.f32 0.0, %v1141
        %1143 = vmatprep.mubr.bf16.mxu0 0
        %1144 = vmatmul.mubr.bf16.gmra.mrb[0].mxu0 %v827
        %v1145 = vpop.f32.mrb[0].mxu0
        %v1146 = vadd.f32 0.0, %v1145
        %v1147 = vpop.f32.mrb[0].mxu0
        %v1148 = vadd.f32 0.0, %v1147
        %v1149 = vpop.f32.mrb[0].mxu0
        %v1150 = vadd.f32 0.0, %v1149
        %v1151 = vpop.f32.mrb[0].mxu0
        %v1152 = vadd.f32 0.0, %v1151
        %1153 = vmatprep.mubr.bf16.mxu0 0
        %1154 = vmatmul.mubr.bf16.gmra.mrb[0].mxu0 %v830
        %v1155 = vpop.f32.mrb[0].mxu0
        %v1156 = vadd.f32 0.0, %v1155
        %v1157 = vpop.f32.mrb[0].mxu0
        %v1158 = vadd.f32 0.0, %v1157
        %v1159 = vpop.f32.mrb[0].mxu0
        %v1160 = vadd.f32 0.0, %v1159
        %v1161 = vpop.f32.mrb[0].mxu0
        %v1162 = vadd.f32 0.0, %v1161
        %1163 = vmatprep.mubr.bf16.mxu0 0
        %1164 = vmatmul.mubr.bf16.gmra.mrb[0].mxu0 %v833
        %v1165 = vpop.f32.mrb[0].mxu0
        %v1166 = vadd.f32 0.0, %v1165
        %v1167 = vpop.f32.mrb[0].mxu0
        %v1168 = vadd.f32 0.0, %v1167
        %v1169 = vpop.f32.mrb[0].mxu0
        %v1170 = vadd.f32 0.0, %v1169
        %v1171 = vpop.f32.mrb[0].mxu0
        %v1172 = vadd.f32 0.0, %v1171
        %1173 = vmatprep.mubr.bf16.mxu0 0
        %1174 = vmatmul.mubr.bf16.gmra.mrb[0].mxu0 %v836
        %v1175 = vpop.f32.mrb[0].mxu0
        %v1176 = vadd.f32 0.0, %v1175
        %v1177 = vpop.f32.mrb[0].mxu0
        %v1178 = vadd.f32 0.0, %v1177
        %v1179 = vpop.f32.mrb[0].mxu0
        %v1180 = vadd.f32 0.0, %v1179
        %v1181 = vpop.f32.mrb[0].mxu0
        %v1182 = vadd.f32 0.0, %v1181
        %1183 = vmatprep.mubr.bf16.mxu0 0
        %1184 = vmatmul.mubr.bf16.gmra.mrb[0].mxu0 %v839
        %v1185 = vpop.f32.mrb[0].mxu0
        %v1186 = vadd.f32 0.0, %v1185
        %v1187 = vpop.f32.mrb[0].mxu0
        %v1188 = vadd.f32 0.0, %v1187
        %v1189 = vpop.f32.mrb[0].mxu0
        %v1190 = vadd.f32 0.0, %v1189
        %v1191 = vpop.f32.mrb[0].mxu0
        %v1192 = vadd.f32 0.0, %v1191
        %1193 = vmatprep.mubr.bf16.mxu0 0
        %1194 = vmatmul.mubr.bf16.gmra.mrb[0].mxu0 %v842
        %v1195 = vpop.f32.mrb[0].mxu0
        %v1196 = vadd.f32 0.0, %v1195
        %v1197 = vpop.f32.mrb[0].mxu0
        %v1198 = vadd.f32 0.0, %v1197
        %v1199 = vpop.f32.mrb[0].mxu0
        %v1200 = vadd.f32 0.0, %v1199
        %v1201 = vpop.f32.mrb[0].mxu0
        %v1202 = vadd.f32 0.0, %v1201
        %1203 = vdwg.mxu0
        %v1220 = vunpack.c.l.b16 %v721
        %v1221 = vunpack.c.h.b16 %v721
        %v1222 = vunpack.c.l.b16 %v722
        %v1223 = vunpack.c.h.b16 %v722
        %v1224 = vunpack.c.l.b16 %v723
        %v1225 = vunpack.c.h.b16 %v723
        %v1226 = vunpack.c.l.b16 %v724
        %v1227 = vunpack.c.h.b16 %v724
        %v1228 = vunpack.c.l.b16 %v725
        %v1229 = vunpack.c.h.b16 %v725
        %v1230 = vunpack.c.l.b16 %v726
        %v1231 = vunpack.c.h.b16 %v726
        %v1232 = vunpack.c.l.b16 %v727
        %v1233 = vunpack.c.h.b16 %v727
        %v1234 = vunpack.c.l.b16 %v728
        %v1235 = vunpack.c.h.b16 %v728
        %v1236 = vunpack.c.l.b16 %v729
        %v1237 = vunpack.c.h.b16 %v729
        %v1238 = vunpack.c.l.b16 %v730
        %v1239 = vunpack.c.h.b16 %v730
        %v1240 = vunpack.c.l.b16 %v731
        %v1241 = vunpack.c.h.b16 %v731
        %v1242 = vunpack.c.l.b16 %v732
        %v1243 = vunpack.c.h.b16 %v732
        %v1244 = vunpack.c.l.b16 %v733
        %v1245 = vunpack.c.h.b16 %v733
        %v1246 = vunpack.c.l.b16 %v734
        %v1247 = vunpack.c.h.b16 %v734
        %v1248 = vunpack.c.l.b16 %v735
        %v1249 = vunpack.c.h.b16 %v735
        %v1250 = vunpack.c.l.b16 %v736
        %v1251 = vunpack.c.h.b16 %v736
        %v1252 = vpack.c.b16 %v1222, %v1220
        %v1253 = vpack.c.b16 %v1223, %v1221
        %v1254 = vpack.c.b16 %v1226, %v1224
        %v1255 = vpack.c.b16 %v1227, %v1225
        %v1256 = vpack.c.b16 %v1230, %v1228
        %v1257 = vpack.c.b16 %v1231, %v1229
        %v1258 = vpack.c.b16 %v1234, %v1232
        %v1259 = vpack.c.b16 %v1235, %v1233
        %v1260 = vpack.c.b16 %v1238, %v1236
        %v1261 = vpack.c.b16 %v1239, %v1237
        %v1262 = vpack.c.b16 %v1242, %v1240
        %v1263 = vpack.c.b16 %v1243, %v1241
        %v1264 = vpack.c.b16 %v1246, %v1244
        %v1265 = vpack.c.b16 %v1247, %v1245
        %v1266 = vpack.c.b16 %v1250, %v1248
        %v1267 = vpack.c.b16 %v1251, %v1249
        %1284 = vmatprep.subr.bf16.mxu0 %v1253
        %1285 = vmatpush1.bf16.msra.mxu0 %v1252
        %1286 = vmatprep.subr.bf16.mxu0 %v1255
        %1287 = vmatpush1.bf16.msra.mxu0 %v1254
        %1288 = vmatprep.subr.bf16.mxu0 %v1257
        %1289 = vmatpush1.bf16.msra.mxu0 %v1256
        %1290 = vmatprep.subr.bf16.mxu0 %v1259
        %1291 = vmatpush1.bf16.msra.mxu0 %v1258
        %1292 = vmatprep.subr.bf16.mxu0 %v1261
        %1293 = vmatpush1.bf16.msra.mxu0 %v1260
        %1294 = vmatprep.subr.bf16.mxu0 %v1263
        %1295 = vmatpush1.bf16.msra.mxu0 %v1262
        %1296 = vmatprep.subr.bf16.mxu0 %v1265
        %1297 = vmatpush1.bf16.msra.mxu0 %v1264
        %1298 = vmatprep.subr.bf16.mxu0 %v1267
        %1299 = vmatpush1.bf16.msra.mxu0 %v1266
        %1300 = vmatprep.subr.bf16.mxu0 0
        %1301 = vmatpush1.bf16.msra.mxu0 0
        %1302 = vmatprep.subr.bf16.mxu0 0
        %1303 = vmatpush1.bf16.msra.mxu0 0
        %1304 = vmatprep.subr.bf16.mxu0 0
        %1305 = vmatpush1.bf16.msra.mxu0 0
        %1306 = vmatprep.subr.bf16.mxu0 0
        %1307 = vmatpush1.bf16.msra.mxu0 0
        %1308 = vmatprep.subr.bf16.mxu0 0
        %1309 = vmatpush1.bf16.msra.mxu0 0
        %1310 = vmatprep.subr.bf16.mxu0 0
        %1311 = vmatpush1.bf16.msra.mxu0 0
        %1312 = vmatprep.subr.bf16.mxu0 0
        %1313 = vmatpush1.bf16.msra.mxu0 0
        %1314 = vmatprep.subr.bf16.mxu0 0
        %1315 = vmatpush1.bf16.msra.mxu0 0
        %1316 = vmatprep.mubr.bf16.mxu0 0
        %1317 = vmatmul.mubr.bf16.gmra.mrb[0].mxu0 %v497
        %v1318 = vpop.f32.mrb[0].mxu0
        %v1319 = vadd.f32 %v886, %v1318
        %v1320 = vpop.f32.mrb[0].mxu0
        %v1321 = vadd.f32 %v888, %v1320
        %v1322 = vpop.f32.mrb[0].mxu0
        %v1323 = vadd.f32 %v890, %v1322
        %v1324 = vpop.f32.mrb[0].mxu0
        %v1325 = vadd.f32 %v892, %v1324
        %1326 = vmatprep.mubr.bf16.mxu0 0
        %1327 = vmatmul.mubr.bf16.gmra.mrb[0].mxu0 %v498
        %v1328 = vpop.f32.mrb[0].mxu0
        %v1329 = vadd.f32 %v896, %v1328
        %v1330 = vpop.f32.mrb[0].mxu0
        %v1331 = vadd.f32 %v898, %v1330
        %v1332 = vpop.f32.mrb[0].mxu0
        %v1333 = vadd.f32 %v900, %v1332
        %v1334 = vpop.f32.mrb[0].mxu0
        %v1335 = vadd.f32 %v902, %v1334
        %1336 = vmatprep.mubr.bf16.mxu0 0
        %1337 = vmatmul.mubr.bf16.gmra.mrb[0].mxu0 %v499
        %v1338 = vpop.f32.mrb[0].mxu0
        %v1339 = vadd.f32 %v906, %v1338
        %v1340 = vpop.f32.mrb[0].mxu0
        %v1341 = vadd.f32 %v908, %v1340
        %v1342 = vpop.f32.mrb[0].mxu0
        %v1343 = vadd.f32 %v910, %v1342
        %v1344 = vpop.f32.mrb[0].mxu0
        %v1345 = vadd.f32 %v912, %v1344
        %1346 = vmatprep.mubr.bf16.mxu0 0
        %1347 = vmatmul.mubr.bf16.gmra.mrb[0].mxu0 %v500
        %v1348 = vpop.f32.mrb[0].mxu0
        %v1349 = vadd.f32 %v916, %v1348
        %v1350 = vpop.f32.mrb[0].mxu0
        %v1351 = vadd.f32 %v918, %v1350
        %v1352 = vpop.f32.mrb[0].mxu0
        %v1353 = vadd.f32 %v920, %v1352
        %v1354 = vpop.f32.mrb[0].mxu0
        %v1355 = vadd.f32 %v922, %v1354
        %1356 = vmatprep.mubr.bf16.mxu0 0
        %1357 = vmatmul.mubr.bf16.gmra.mrb[0].mxu0 %v501
        %v1358 = vpop.f32.mrb[0].mxu0
        %v1359 = vadd.f32 %v926, %v1358
        %v1360 = vpop.f32.mrb[0].mxu0
        %v1361 = vadd.f32 %v928, %v1360
        %v1362 = vpop.f32.mrb[0].mxu0
        %v1363 = vadd.f32 %v930, %v1362
        %v1364 = vpop.f32.mrb[0].mxu0
        %v1365 = vadd.f32 %v932, %v1364
        %1366 = vmatprep.mubr.bf16.mxu0 0
        %1367 = vmatmul.mubr.bf16.gmra.mrb[0].mxu0 %v502
        %v1368 = vpop.f32.mrb[0].mxu0
        %v1369 = vadd.f32 %v936, %v1368
        %v1370 = vpop.f32.mrb[0].mxu0
        %v1371 = vadd.f32 %v938, %v1370
        %v1372 = vpop.f32.mrb[0].mxu0
        %v1373 = vadd.f32 %v940, %v1372
        %v1374 = vpop.f32.mrb[0].mxu0
        %v1375 = vadd.f32 %v942, %v1374
        %1376 = vmatprep.mubr.bf16.mxu0 0
        %1377 = vmatmul.mubr.bf16.gmra.mrb[0].mxu0 %v503
        %v1378 = vpop.f32.mrb[0].mxu0
        %v1379 = vadd.f32 %v946, %v1378
        %v1380 = vpop.f32.mrb[0].mxu0
        %v1381 = vadd.f32 %v948, %v1380
        %v1382 = vpop.f32.mrb[0].mxu0
        %v1383 = vadd.f32 %v950, %v1382
        %v1384 = vpop.f32.mrb[0].mxu0
        %v1385 = vadd.f32 %v952, %v1384
        %1386 = vmatprep.mubr.bf16.mxu0 0
        %1387 = vmatmul.mubr.bf16.gmra.mrb[0].mxu0 %v504
        %v1388 = vpop.f32.mrb[0].mxu0
        %v1389 = vadd.f32 %v956, %v1388
        %v1390 = vpop.f32.mrb[0].mxu0
        %v1391 = vadd.f32 %v958, %v1390
        %v1392 = vpop.f32.mrb[0].mxu0
        %v1393 = vadd.f32 %v960, %v1392
        %v1394 = vpop.f32.mrb[0].mxu0
        %v1395 = vadd.f32 %v962, %v1394
        %1396 = vmatprep.mubr.bf16.mxu0 0
        %1397 = vmatmul.mubr.bf16.gmra.mrb[0].mxu0 %v505
        %v1398 = vpop.f32.mrb[0].mxu0
        %v1399 = vadd.f32 %v966, %v1398
        %v1400 = vpop.f32.mrb[0].mxu0
        %v1401 = vadd.f32 %v968, %v1400
        %v1402 = vpop.f32.mrb[0].mxu0
        %v1403 = vadd.f32 %v970, %v1402
        %v1404 = vpop.f32.mrb[0].mxu0
        %v1405 = vadd.f32 %v972, %v1404
        %1406 = vmatprep.mubr.bf16.mxu0 0
        %1407 = vmatmul.mubr.bf16.gmra.mrb[0].mxu0 %v506
        %v1408 = vpop.f32.mrb[0].mxu0
        %v1409 = vadd.f32 %v976, %v1408
        %v1410 = vpop.f32.mrb[0].mxu0
        %v1411 = vadd.f32 %v978, %v1410
        %v1412 = vpop.f32.mrb[0].mxu0
        %v1413 = vadd.f32 %v980, %v1412
        %v1414 = vpop.f32.mrb[0].mxu0
        %v1415 = vadd.f32 %v982, %v1414
        %1416 = vmatprep.mubr.bf16.mxu0 0
        %1417 = vmatmul.mubr.bf16.gmra.mrb[0].mxu0 %v507
        %v1418 = vpop.f32.mrb[0].mxu0
        %v1419 = vadd.f32 %v986, %v1418
        %v1420 = vpop.f32.mrb[0].mxu0
        %v1421 = vadd.f32 %v988, %v1420
        %v1422 = vpop.f32.mrb[0].mxu0
        %v1423 = vadd.f32 %v990, %v1422
        %v1424 = vpop.f32.mrb[0].mxu0
        %v1425 = vadd.f32 %v992, %v1424
        %1426 = vmatprep.mubr.bf16.mxu0 0
        %1427 = vmatmul.mubr.bf16.gmra.mrb[0].mxu0 %v508
        %v1428 = vpop.f32.mrb[0].mxu0
        %v1429 = vadd.f32 %v996, %v1428
        %v1430 = vpop.f32.mrb[0].mxu0
        %v1431 = vadd.f32 %v998, %v1430
        %v1432 = vpop.f32.mrb[0].mxu0
        %v1433 = vadd.f32 %v1000, %v1432
        %v1434 = vpop.f32.mrb[0].mxu0
        %v1435 = vadd.f32 %v1002, %v1434
        %1436 = vmatprep.mubr.bf16.mxu0 0
        %1437 = vmatmul.mubr.bf16.gmra.mrb[0].mxu0 %v509
        %v1438 = vpop.f32.mrb[0].mxu0
        %v1439 = vadd.f32 %v1006, %v1438
        %v1440 = vpop.f32.mrb[0].mxu0
        %v1441 = vadd.f32 %v1008, %v1440
        %v1442 = vpop.f32.mrb[0].mxu0
        %v1443 = vadd.f32 %v1010, %v1442
        %v1444 = vpop.f32.mrb[0].mxu0
        %v1445 = vadd.f32 %v1012, %v1444
        %1446 = vmatprep.mubr.bf16.mxu0 0
        %1447 = vmatmul.mubr.bf16.gmra.mrb[0].mxu0 %v510
        %v1448 = vpop.f32.mrb[0].mxu0
        %v1449 = vadd.f32 %v1016, %v1448
        %v1450 = vpop.f32.mrb[0].mxu0
        %v1451 = vadd.f32 %v1018, %v1450
        %v1452 = vpop.f32.mrb[0].mxu0
        %v1453 = vadd.f32 %v1020, %v1452
        %v1454 = vpop.f32.mrb[0].mxu0
        %v1455 = vadd.f32 %v1022, %v1454
        %1456 = vmatprep.mubr.bf16.mxu0 0
        %1457 = vmatmul.mubr.bf16.gmra.mrb[0].mxu0 %v511
        %v1458 = vpop.f32.mrb[0].mxu0
        %v1459 = vadd.f32 %v1026, %v1458
        %v1460 = vpop.f32.mrb[0].mxu0
        %v1461 = vadd.f32 %v1028, %v1460
        %v1462 = vpop.f32.mrb[0].mxu0
        %v1463 = vadd.f32 %v1030, %v1462
        %v1464 = vpop.f32.mrb[0].mxu0
        %v1465 = vadd.f32 %v1032, %v1464
        %1466 = vmatprep.mubr.bf16.mxu0 0
        %1467 = vmatmul.mubr.bf16.gmra.mrb[0].mxu0 %v512
        %v1468 = vpop.f32.mrb[0].mxu0
        %v1469 = vadd.f32 %v1036, %v1468
        %v1470 = vpop.f32.mrb[0].mxu0
        %v1471 = vadd.f32 %v1038, %v1470
        %v1472 = vpop.f32.mrb[0].mxu0
        %v1473 = vadd.f32 %v1040, %v1472
        %v1474 = vpop.f32.mrb[0].mxu0
        %v1475 = vadd.f32 %v1042, %v1474
        %1476 = vmatprep.mubr.bf16.mxu0 0
        %1477 = vmatmul.mubr.bf16.gmra.mrb[0].mxu0 %v513
        %v1478 = vpop.f32.mrb[0].mxu0
        %v1479 = vadd.f32 %v1046, %v1478
        %v1480 = vpop.f32.mrb[0].mxu0
        %v1481 = vadd.f32 %v1048, %v1480
        %v1482 = vpop.f32.mrb[0].mxu0
        %v1483 = vadd.f32 %v1050, %v1482
        %v1484 = vpop.f32.mrb[0].mxu0
        %v1485 = vadd.f32 %v1052, %v1484
        %1486 = vmatprep.mubr.bf16.mxu0 0
        %1487 = vmatmul.mubr.bf16.gmra.mrb[0].mxu0 %v514
        %v1488 = vpop.f32.mrb[0].mxu0
        %v1489 = vadd.f32 %v1056, %v1488
        %v1490 = vpop.f32.mrb[0].mxu0
        %v1491 = vadd.f32 %v1058, %v1490
        %v1492 = vpop.f32.mrb[0].mxu0
        %v1493 = vadd.f32 %v1060, %v1492
        %v1494 = vpop.f32.mrb[0].mxu0
        %v1495 = vadd.f32 %v1062, %v1494
        %1496 = vmatprep.mubr.bf16.mxu0 0
        %1497 = vmatmul.mubr.bf16.gmra.mrb[0].mxu0 %v515
        %v1498 = vpop.f32.mrb[0].mxu0
        %v1499 = vadd.f32 %v1066, %v1498
        %v1500 = vpop.f32.mrb[0].mxu0
        %v1501 = vadd.f32 %v1068, %v1500
        %v1502 = vpop.f32.mrb[0].mxu0
        %v1503 = vadd.f32 %v1070, %v1502
        %v1504 = vpop.f32.mrb[0].mxu0
        %v1505 = vadd.f32 %v1072, %v1504
        %1506 = vmatprep.mubr.bf16.mxu0 0
        %1507 = vmatmul.mubr.bf16.gmra.mrb[0].mxu0 %v516
        %v1508 = vpop.f32.mrb[0].mxu0
        %v1509 = vadd.f32 %v1076, %v1508
        %v1510 = vpop.f32.mrb[0].mxu0
        %v1511 = vadd.f32 %v1078, %v1510
        %v1512 = vpop.f32.mrb[0].mxu0
        %v1513 = vadd.f32 %v1080, %v1512
        %v1514 = vpop.f32.mrb[0].mxu0
        %v1515 = vadd.f32 %v1082, %v1514
        %1516 = vmatprep.mubr.bf16.mxu0 0
        %1517 = vmatmul.mubr.bf16.gmra.mrb[0].mxu0 %v517
        %v1518 = vpop.f32.mrb[0].mxu0
        %v1519 = vadd.f32 %v1086, %v1518
        %v1520 = vpop.f32.mrb[0].mxu0
        %v1521 = vadd.f32 %v1088, %v1520
        %v1522 = vpop.f32.mrb[0].mxu0
        %v1523 = vadd.f32 %v1090, %v1522
        %v1524 = vpop.f32.mrb[0].mxu0
        %v1525 = vadd.f32 %v1092, %v1524
        %1526 = vmatprep.mubr.bf16.mxu0 0
        %1527 = vmatmul.mubr.bf16.gmra.mrb[0].mxu0 %v518
        %v1528 = vpop.f32.mrb[0].mxu0
        %v1529 = vadd.f32 %v1096, %v1528
        %v1530 = vpop.f32.mrb[0].mxu0
        %v1531 = vadd.f32 %v1098, %v1530
        %v1532 = vpop.f32.mrb[0].mxu0
        %v1533 = vadd.f32 %v1100, %v1532
        %v1534 = vpop.f32.mrb[0].mxu0
        %v1535 = vadd.f32 %v1102, %v1534
        %1536 = vmatprep.mubr.bf16.mxu0 0
        %1537 = vmatmul.mubr.bf16.gmra.mrb[0].mxu0 %v519
        %v1538 = vpop.f32.mrb[0].mxu0
        %v1539 = vadd.f32 %v1106, %v1538
        %v1540 = vpop.f32.mrb[0].mxu0
        %v1541 = vadd.f32 %v1108, %v1540
        %v1542 = vpop.f32.mrb[0].mxu0
        %v1543 = vadd.f32 %v1110, %v1542
        %v1544 = vpop.f32.mrb[0].mxu0
        %v1545 = vadd.f32 %v1112, %v1544
        %1546 = vmatprep.mubr.bf16.mxu0 0
        %1547 = vmatmul.mubr.bf16.gmra.mrb[0].mxu0 %v520
        %v1548 = vpop.f32.mrb[0].mxu0
        %v1549 = vadd.f32 %v1116, %v1548
        %v1550 = vpop.f32.mrb[0].mxu0
        %v1551 = vadd.f32 %v1118, %v1550
        %v1552 = vpop.f32.mrb[0].mxu0
        %v1553 = vadd.f32 %v1120, %v1552
        %v1554 = vpop.f32.mrb[0].mxu0
        %v1555 = vadd.f32 %v1122, %v1554
        %1556 = vmatprep.mubr.bf16.mxu0 0
        %1557 = vmatmul.mubr.bf16.gmra.mrb[0].mxu0 %v521
        %v1558 = vpop.f32.mrb[0].mxu0
        %v1559 = vadd.f32 %v1126, %v1558
        %v1560 = vpop.f32.mrb[0].mxu0
        %v1561 = vadd.f32 %v1128, %v1560
        %v1562 = vpop.f32.mrb[0].mxu0
        %v1563 = vadd.f32 %v1130, %v1562
        %v1564 = vpop.f32.mrb[0].mxu0
        %v1565 = vadd.f32 %v1132, %v1564
        %1566 = vmatprep.mubr.bf16.mxu0 0
        %1567 = vmatmul.mubr.bf16.gmra.mrb[0].mxu0 %v522
        %v1568 = vpop.f32.mrb[0].mxu0
        %v1569 = vadd.f32 %v1136, %v1568
        %v1570 = vpop.f32.mrb[0].mxu0
        %v1571 = vadd.f32 %v1138, %v1570
        %v1572 = vpop.f32.mrb[0].mxu0
        %v1573 = vadd.f32 %v1140, %v1572
        %v1574 = vpop.f32.mrb[0].mxu0
        %v1575 = vadd.f32 %v1142, %v1574
        %1576 = vmatprep.mubr.bf16.mxu0 0
        %1577 = vmatmul.mubr.bf16.gmra.mrb[0].mxu0 %v523
        %v1578 = vpop.f32.mrb[0].mxu0
        %v1579 = vadd.f32 %v1146, %v1578
        %v1580 = vpop.f32.mrb[0].mxu0
        %v1581 = vadd.f32 %v1148, %v1580
        %v1582 = vpop.f32.mrb[0].mxu0
        %v1583 = vadd.f32 %v1150, %v1582
        %v1584 = vpop.f32.mrb[0].mxu0
        %v1585 = vadd.f32 %v1152, %v1584
        %1586 = vmatprep.mubr.bf16.mxu0 0
        %1587 = vmatmul.mubr.bf16.gmra.mrb[0].mxu0 %v524
        %v1588 = vpop.f32.mrb[0].mxu0
        %v1589 = vadd.f32 %v1156, %v1588
        %v1590 = vpop.f32.mrb[0].mxu0
        %v1591 = vadd.f32 %v1158, %v1590
        %v1592 = vpop.f32.mrb[0].mxu0
        %v1593 = vadd.f32 %v1160, %v1592
        %v1594 = vpop.f32.mrb[0].mxu0
        %v1595 = vadd.f32 %v1162, %v1594
        %1596 = vmatprep.mubr.bf16.mxu0 0
        %1597 = vmatmul.mubr.bf16.gmra.mrb[0].mxu0 %v525
        %v1598 = vpop.f32.mrb[0].mxu0
        %v1599 = vadd.f32 %v1166, %v1598
        %v1600 = vpop.f32.mrb[0].mxu0
        %v1601 = vadd.f32 %v1168, %v1600
        %v1602 = vpop.f32.mrb[0].mxu0
        %v1603 = vadd.f32 %v1170, %v1602
        %v1604 = vpop.f32.mrb[0].mxu0
        %v1605 = vadd.f32 %v1172, %v1604
        %1606 = vmatprep.mubr.bf16.mxu0 0
        %1607 = vmatmul.mubr.bf16.gmra.mrb[0].mxu0 %v526
        %v1608 = vpop.f32.mrb[0].mxu0
        %v1609 = vadd.f32 %v1176, %v1608
        %v1610 = vpop.f32.mrb[0].mxu0
        %v1611 = vadd.f32 %v1178, %v1610
        %v1612 = vpop.f32.mrb[0].mxu0
        %v1613 = vadd.f32 %v1180, %v1612
        %v1614 = vpop.f32.mrb[0].mxu0
        %v1615 = vadd.f32 %v1182, %v1614
        %1616 = vmatprep.mubr.bf16.mxu0 0
        %1617 = vmatmul.mubr.bf16.gmra.mrb[0].mxu0 %v527
        %v1618 = vpop.f32.mrb[0].mxu0
        %v1619 = vadd.f32 %v1186, %v1618
        %v1620 = vpop.f32.mrb[0].mxu0
        %v1621 = vadd.f32 %v1188, %v1620
        %v1622 = vpop.f32.mrb[0].mxu0
        %v1623 = vadd.f32 %v1190, %v1622
        %v1624 = vpop.f32.mrb[0].mxu0
        %v1625 = vadd.f32 %v1192, %v1624
        %1626 = vmatprep.mubr.bf16.mxu0 0
        %1627 = vmatmul.mubr.bf16.gmra.mrb[0].mxu0 %v528
        %v1628 = vpop.f32.mrb[0].mxu0
        %v1629 = vadd.f32 %v1196, %v1628
        %v1630 = vpop.f32.mrb[0].mxu0
        %v1631 = vadd.f32 %v1198, %v1630
        %v1632 = vpop.f32.mrb[0].mxu0
        %v1633 = vadd.f32 %v1200, %v1632
        %v1634 = vpop.f32.mrb[0].mxu0
        %v1635 = vadd.f32 %v1202, %v1634
        %1636 = vdwg.mxu0
        %v1637 = vld [vmem:[%s5] sm:$0xf]
        %v1640 = vunpack.c.l.s4 1983009808
        %v1641 = vunpack.c.0.s8 %v1640
        %v1642 = vlaneseq
        %v1643 = vshrl.u32 %v1642, 7
        %v1644 = vsub.s32 %v1641, %v1643
        %v1645 = vrot.slane %v1637, %v1644
        %v1646 = vcombine.high %v1645, %v1645
        %vm1647 = vcmask 31744
        %v1649 = vsel %vm1647, %v689, 0
        %v1652 = vsel %vm1647, %v690, 0
        %v1655 = vsel %vm1647, %v691, 0
        %v1658 = vsel %vm1647, %v692, 0
        %v1661 = vsel %vm1647, %v693, 0
        %v1664 = vsel %vm1647, %v694, 0
        %v1667 = vsel %vm1647, %v695, 0
        %v1670 = vsel %vm1647, %v696, 0
        %v1673 = vsel %vm1647, %v697, 0
        %v1676 = vsel %vm1647, %v698, 0
        %v1679 = vsel %vm1647, %v699, 0
        %v1682 = vsel %vm1647, %v700, 0
        %v1685 = vsel %vm1647, %v701, 0
        %v1688 = vsel %vm1647, %v702, 0
        %v1691 = vsel %vm1647, %v703, 0
        %v1694 = vsel %vm1647, %v704, 0
        %v1697 = vsel %vm1647, %v705, 0
        %v1700 = vsel %vm1647, %v706, 0
        %v1703 = vsel %vm1647, %v707, 0
        %v1706 = vsel %vm1647, %v708, 0
        %v1709 = vsel %vm1647, %v709, 0
        %v1712 = vsel %vm1647, %v710, 0
        %v1715 = vsel %vm1647, %v711, 0
        %v1718 = vsel %vm1647, %v712, 0
        %v1721 = vsel %vm1647, %v713, 0
        %v1724 = vsel %vm1647, %v714, 0
        %v1727 = vsel %vm1647, %v715, 0
        %v1730 = vsel %vm1647, %v716, 0
        %v1733 = vsel %vm1647, %v717, 0
        %v1736 = vsel %vm1647, %v718, 0
        %v1739 = vsel %vm1647, %v719, 0
        %v1742 = vsel %vm1647, %v720, 0
        %vm1744 = vcmask 1041408
        %v1746 = vsel %vm1744, %v1645, 0
        %v1749 = vsel %vm1744, %v1646, 0
        %1751 = vmatprep.subr.bf16.mxu0 %v1749
        %1752 = vmatpush1.bf16.msra.mxu0 %v1746
        %1753 = vmatprep.subr.bf16.mxu0 0
        %1754 = vmatpush1.bf16.msra.mxu0 0
        %1755 = vmatprep.subr.bf16.mxu0 0
        %1756 = vmatpush1.bf16.msra.mxu0 0
        %1757 = vmatprep.subr.bf16.mxu0 0
        %1758 = vmatpush1.bf16.msra.mxu0 0
        %1759 = vmatprep.subr.bf16.mxu0 0
        %1760 = vmatpush1.bf16.msra.mxu0 0
        %1761 = vmatprep.subr.bf16.mxu0 0
        %1762 = vmatpush1.bf16.msra.mxu0 0
        %1763 = vmatprep.subr.bf16.mxu0 0
        %1764 = vmatpush1.bf16.msra.mxu0 0
        %1765 = vmatprep.subr.bf16.mxu0 0
        %1766 = vmatpush1.bf16.msra.mxu0 0
        %1767 = vmatprep.subr.bf16.mxu0 0
        %1768 = vmatpush1.bf16.msra.mxu0 0
        %1769 = vmatprep.subr.bf16.mxu0 0
        %1770 = vmatpush1.bf16.msra.mxu0 0
        %1771 = vmatprep.subr.bf16.mxu0 0
        %1772 = vmatpush1.bf16.msra.mxu0 0
        %1773 = vmatprep.subr.bf16.mxu0 0
        %1774 = vmatpush1.bf16.msra.mxu0 0
        %1775 = vmatprep.subr.bf16.mxu0 0
        %1776 = vmatpush1.bf16.msra.mxu0 0
        %1777 = vmatprep.subr.bf16.mxu0 0
        %1778 = vmatpush1.bf16.msra.mxu0 0
        %1779 = vmatprep.subr.bf16.mxu0 0
        %1780 = vmatpush1.bf16.msra.mxu0 0
        %1781 = vmatprep.subr.bf16.mxu0 0
        %1782 = vmatpush1.bf16.msra.mxu0 0
        %1783 = vmatprep.mubr.bf16.mxu0 0
        %1784 = vmatmul.mubr.bf16.gmra.mrb[0].mxu0 %v1649
        %v1785 = vpop.f32.mrb[0].mxu0
        %v1786 = vadd.f32 0.0, %v1785
        %v1787 = vpop.f32.mrb[0].mxu0
        %v1788 = vadd.f32 0.0, %v1787
        %v1789 = vpop.f32.mrb[0].mxu0
        %v1790 = vadd.f32 0.0, %v1789
        %v1791 = vpop.f32.mrb[0].mxu0
        %v1792 = vadd.f32 0.0, %v1791
        %1793 = vmatprep.mubr.bf16.mxu0 0
        %1794 = vmatmul.mubr.bf16.gmra.mrb[0].mxu0 %v1652
        %v1795 = vpop.f32.mrb[0].mxu0
        %v1796 = vadd.f32 0.0, %v1795
        %v1797 = vpop.f32.mrb[0].mxu0
        %v1798 = vadd.f32 0.0, %v1797
        %v1799 = vpop.f32.mrb[0].mxu0
        %v1800 = vadd.f32 0.0, %v1799
        %v1801 = vpop.f32.mrb[0].mxu0
        %v1802 = vadd.f32 0.0, %v1801
        %1803 = vmatprep.mubr.bf16.mxu0 0
        %1804 = vmatmul.mubr.bf16.gmra.mrb[0].mxu0 %v1655
        %v1805 = vpop.f32.mrb[0].mxu0
        %v1806 = vadd.f32 0.0, %v1805
        %v1807 = vpop.f32.mrb[0].mxu0
        %v1808 = vadd.f32 0.0, %v1807
        %v1809 = vpop.f32.mrb[0].mxu0
        %v1810 = vadd.f32 0.0, %v1809
        %v1811 = vpop.f32.mrb[0].mxu0
        %v1812 = vadd.f32 0.0, %v1811
        %1813 = vmatprep.mubr.bf16.mxu0 0
        %1814 = vmatmul.mubr.bf16.gmra.mrb[0].mxu0 %v1658
        %v1815 = vpop.f32.mrb[0].mxu0
        %v1816 = vadd.f32 0.0, %v1815
        %v1817 = vpop.f32.mrb[0].mxu0
        %v1818 = vadd.f32 0.0, %v1817
        %v1819 = vpop.f32.mrb[0].mxu0
        %v1820 = vadd.f32 0.0, %v1819
        %v1821 = vpop.f32.mrb[0].mxu0
        %v1822 = vadd.f32 0.0, %v1821
        %1823 = vmatprep.mubr.bf16.mxu0 0
        %1824 = vmatmul.mubr.bf16.gmra.mrb[0].mxu0 %v1661
        %v1825 = vpop.f32.mrb[0].mxu0
        %v1826 = vadd.f32 0.0, %v1825
        %v1827 = vpop.f32.mrb[0].mxu0
        %v1828 = vadd.f32 0.0, %v1827
        %v1829 = vpop.f32.mrb[0].mxu0
        %v1830 = vadd.f32 0.0, %v1829
        %v1831 = vpop.f32.mrb[0].mxu0
        %v1832 = vadd.f32 0.0, %v1831
        %1833 = vmatprep.mubr.bf16.mxu0 0
        %1834 = vmatmul.mubr.bf16.gmra.mrb[0].mxu0 %v1664
        %v1835 = vpop.f32.mrb[0].mxu0
        %v1836 = vadd.f32 0.0, %v1835
        %v1837 = vpop.f32.mrb[0].mxu0
        %v1838 = vadd.f32 0.0, %v1837
        %v1839 = vpop.f32.mrb[0].mxu0
        %v1840 = vadd.f32 0.0, %v1839
        %v1841 = vpop.f32.mrb[0].mxu0
        %v1842 = vadd.f32 0.0, %v1841
        %1843 = vmatprep.mubr.bf16.mxu0 0
        %1844 = vmatmul.mubr.bf16.gmra.mrb[0].mxu0 %v1667
        %v1845 = vpop.f32.mrb[0].mxu0
        %v1846 = vadd.f32 0.0, %v1845
        %v1847 = vpop.f32.mrb[0].mxu0
        %v1848 = vadd.f32 0.0, %v1847
        %v1849 = vpop.f32.mrb[0].mxu0
        %v1850 = vadd.f32 0.0, %v1849
        %v1851 = vpop.f32.mrb[0].mxu0
        %v1852 = vadd.f32 0.0, %v1851
        %1853 = vmatprep.mubr.bf16.mxu0 0
        %1854 = vmatmul.mubr.bf16.gmra.mrb[0].mxu0 %v1670
        %v1855 = vpop.f32.mrb[0].mxu0
        %v1856 = vadd.f32 0.0, %v1855
        %v1857 = vpop.f32.mrb[0].mxu0
        %v1858 = vadd.f32 0.0, %v1857
        %v1859 = vpop.f32.mrb[0].mxu0
        %v1860 = vadd.f32 0.0, %v1859
        %v1861 = vpop.f32.mrb[0].mxu0
        %v1862 = vadd.f32 0.0, %v1861
        %1863 = vmatprep.mubr.bf16.mxu0 0
        %1864 = vmatmul.mubr.bf16.gmra.mrb[0].mxu0 %v1673
        %v1865 = vpop.f32.mrb[0].mxu0
        %v1866 = vadd.f32 0.0, %v1865
        %v1867 = vpop.f32.mrb[0].mxu0
        %v1868 = vadd.f32 0.0, %v1867
        %v1869 = vpop.f32.mrb[0].mxu0
        %v1870 = vadd.f32 0.0, %v1869
        %v1871 = vpop.f32.mrb[0].mxu0
        %v1872 = vadd.f32 0.0, %v1871
        %1873 = vmatprep.mubr.bf16.mxu0 0
        %1874 = vmatmul.mubr.bf16.gmra.mrb[0].mxu0 %v1676
        %v1875 = vpop.f32.mrb[0].mxu0
        %v1876 = vadd.f32 0.0, %v1875
        %v1877 = vpop.f32.mrb[0].mxu0
        %v1878 = vadd.f32 0.0, %v1877
        %v1879 = vpop.f32.mrb[0].mxu0
        %v1880 = vadd.f32 0.0, %v1879
        %v1881 = vpop.f32.mrb[0].mxu0
        %v1882 = vadd.f32 0.0, %v1881
        %1883 = vmatprep.mubr.bf16.mxu0 0
        %1884 = vmatmul.mubr.bf16.gmra.mrb[0].mxu0 %v1679
        %v1885 = vpop.f32.mrb[0].mxu0
        %v1886 = vadd.f32 0.0, %v1885
        %v1887 = vpop.f32.mrb[0].mxu0
        %v1888 = vadd.f32 0.0, %v1887
        %v1889 = vpop.f32.mrb[0].mxu0
        %v1890 = vadd.f32 0.0, %v1889
        %v1891 = vpop.f32.mrb[0].mxu0
        %v1892 = vadd.f32 0.0, %v1891
        %1893 = vmatprep.mubr.bf16.mxu0 0
        %1894 = vmatmul.mubr.bf16.gmra.mrb[0].mxu0 %v1682
        %v1895 = vpop.f32.mrb[0].mxu0
        %v1896 = vadd.f32 0.0, %v1895
        %v1897 = vpop.f32.mrb[0].mxu0
        %v1898 = vadd.f32 0.0, %v1897
        %v1899 = vpop.f32.mrb[0].mxu0
        %v1900 = vadd.f32 0.0, %v1899
        %v1901 = vpop.f32.mrb[0].mxu0
        %v1902 = vadd.f32 0.0, %v1901
        %1903 = vmatprep.mubr.bf16.mxu0 0
        %1904 = vmatmul.mubr.bf16.gmra.mrb[0].mxu0 %v1685
        %v1905 = vpop.f32.mrb[0].mxu0
        %v1906 = vadd.f32 0.0, %v1905
        %v1907 = vpop.f32.mrb[0].mxu0
        %v1908 = vadd.f32 0.0, %v1907
        %v1909 = vpop.f32.mrb[0].mxu0
        %v1910 = vadd.f32 0.0, %v1909
        %v1911 = vpop.f32.mrb[0].mxu0
        %v1912 = vadd.f32 0.0, %v1911
        %1913 = vmatprep.mubr.bf16.mxu0 0
        %1914 = vmatmul.mubr.bf16.gmra.mrb[0].mxu0 %v1688
        %v1915 = vpop.f32.mrb[0].mxu0
        %v1916 = vadd.f32 0.0, %v1915
        %v1917 = vpop.f32.mrb[0].mxu0
        %v1918 = vadd.f32 0.0, %v1917
        %v1919 = vpop.f32.mrb[0].mxu0
        %v1920 = vadd.f32 0.0, %v1919
        %v1921 = vpop.f32.mrb[0].mxu0
        %v1922 = vadd.f32 0.0, %v1921
        %1923 = vmatprep.mubr.bf16.mxu0 0
        %1924 = vmatmul.mubr.bf16.gmra.mrb[0].mxu0 %v1691
        %v1925 = vpop.f32.mrb[0].mxu0
        %v1926 = vadd.f32 0.0, %v1925
        %v1927 = vpop.f32.mrb[0].mxu0
        %v1928 = vadd.f32 0.0, %v1927
        %v1929 = vpop.f32.mrb[0].mxu0
        %v1930 = vadd.f32 0.0, %v1929
        %v1931 = vpop.f32.mrb[0].mxu0
        %v1932 = vadd.f32 0.0, %v1931
        %1933 = vmatprep.mubr.bf16.mxu0 0
        %1934 = vmatmul.mubr.bf16.gmra.mrb[0].mxu0 %v1694
        %v1935 = vpop.f32.mrb[0].mxu0
        %v1936 = vadd.f32 0.0, %v1935
        %v1937 = vpop.f32.mrb[0].mxu0
        %v1938 = vadd.f32 0.0, %v1937
        %v1939 = vpop.f32.mrb[0].mxu0
        %v1940 = vadd.f32 0.0, %v1939
        %v1941 = vpop.f32.mrb[0].mxu0
        %v1942 = vadd.f32 0.0, %v1941
        %1943 = vmatprep.mubr.bf16.mxu0 0
        %1944 = vmatmul.mubr.bf16.gmra.mrb[0].mxu0 %v1697
        %v1945 = vpop.f32.mrb[0].mxu0
        %v1946 = vadd.f32 0.0, %v1945
        %v1947 = vpop.f32.mrb[0].mxu0
        %v1948 = vadd.f32 0.0, %v1947
        %v1949 = vpop.f32.mrb[0].mxu0
        %v1950 = vadd.f32 0.0, %v1949
        %v1951 = vpop.f32.mrb[0].mxu0
        %v1952 = vadd.f32 0.0, %v1951
        %1953 = vmatprep.mubr.bf16.mxu0 0
        %1954 = vmatmul.mubr.bf16.gmra.mrb[0].mxu0 %v1700
        %v1955 = vpop.f32.mrb[0].mxu0
        %v1956 = vadd.f32 0.0, %v1955
        %v1957 = vpop.f32.mrb[0].mxu0
        %v1958 = vadd.f32 0.0, %v1957
        %v1959 = vpop.f32.mrb[0].mxu0
        %v1960 = vadd.f32 0.0, %v1959
        %v1961 = vpop.f32.mrb[0].mxu0
        %v1962 = vadd.f32 0.0, %v1961
        %1963 = vmatprep.mubr.bf16.mxu0 0
        %1964 = vmatmul.mubr.bf16.gmra.mrb[0].mxu0 %v1703
        %v1965 = vpop.f32.mrb[0].mxu0
        %v1966 = vadd.f32 0.0, %v1965
        %v1967 = vpop.f32.mrb[0].mxu0
        %v1968 = vadd.f32 0.0, %v1967
        %v1969 = vpop.f32.mrb[0].mxu0
        %v1970 = vadd.f32 0.0, %v1969
        %v1971 = vpop.f32.mrb[0].mxu0
        %v1972 = vadd.f32 0.0, %v1971
        %1973 = vmatprep.mubr.bf16.mxu0 0
        %1974 = vmatmul.mubr.bf16.gmra.mrb[0].mxu0 %v1706
        %v1975 = vpop.f32.mrb[0].mxu0
        %v1976 = vadd.f32 0.0, %v1975
        %v1977 = vpop.f32.mrb[0].mxu0
        %v1978 = vadd.f32 0.0, %v1977
        %v1979 = vpop.f32.mrb[0].mxu0
        %v1980 = vadd.f32 0.0, %v1979
        %v1981 = vpop.f32.mrb[0].mxu0
        %v1982 = vadd.f32 0.0, %v1981
        %1983 = vmatprep.mubr.bf16.mxu0 0
        %1984 = vmatmul.mubr.bf16.gmra.mrb[0].mxu0 %v1709
        %v1985 = vpop.f32.mrb[0].mxu0
        %v1986 = vadd.f32 0.0, %v1985
        %v1987 = vpop.f32.mrb[0].mxu0
        %v1988 = vadd.f32 0.0, %v1987
        %v1989 = vpop.f32.mrb[0].mxu0
        %v1990 = vadd.f32 0.0, %v1989
        %v1991 = vpop.f32.mrb[0].mxu0
        %v1992 = vadd.f32 0.0, %v1991
        %1993 = vmatprep.mubr.bf16.mxu0 0
        %1994 = vmatmul.mubr.bf16.gmra.mrb[0].mxu0 %v1712
        %v1995 = vpop.f32.mrb[0].mxu0
        %v1996 = vadd.f32 0.0, %v1995
        %v1997 = vpop.f32.mrb[0].mxu0
        %v1998 = vadd.f32 0.0, %v1997
        %v1999 = vpop.f32.mrb[0].mxu0
        %v2000 = vadd.f32 0.0, %v1999
        %v2001 = vpop.f32.mrb[0].mxu0
        %v2002 = vadd.f32 0.0, %v2001
        %2003 = vmatprep.mubr.bf16.mxu0 0
        %2004 = vmatmul.mubr.bf16.gmra.mrb[0].mxu0 %v1715
        %v2005 = vpop.f32.mrb[0].mxu0
        %v2006 = vadd.f32 0.0, %v2005
        %v2007 = vpop.f32.mrb[0].mxu0
        %v2008 = vadd.f32 0.0, %v2007
        %v2009 = vpop.f32.mrb[0].mxu0
        %v2010 = vadd.f32 0.0, %v2009
        %v2011 = vpop.f32.mrb[0].mxu0
        %v2012 = vadd.f32 0.0, %v2011
        %2013 = vmatprep.mubr.bf16.mxu0 0
        %2014 = vmatmul.mubr.bf16.gmra.mrb[0].mxu0 %v1718
        %v2015 = vpop.f32.mrb[0].mxu0
        %v2016 = vadd.f32 0.0, %v2015
        %v2017 = vpop.f32.mrb[0].mxu0
        %v2018 = vadd.f32 0.0, %v2017
        %v2019 = vpop.f32.mrb[0].mxu0
        %v2020 = vadd.f32 0.0, %v2019
        %v2021 = vpop.f32.mrb[0].mxu0
        %v2022 = vadd.f32 0.0, %v2021
        %2023 = vmatprep.mubr.bf16.mxu0 0
        %2024 = vmatmul.mubr.bf16.gmra.mrb[0].mxu0 %v1721
        %v2025 = vpop.f32.mrb[0].mxu0
        %v2026 = vadd.f32 0.0, %v2025
        %v2027 = vpop.f32.mrb[0].mxu0
        %v2028 = vadd.f32 0.0, %v2027
        %v2029 = vpop.f32.mrb[0].mxu0
        %v2030 = vadd.f32 0.0, %v2029
        %v2031 = vpop.f32.mrb[0].mxu0
        %v2032 = vadd.f32 0.0, %v2031
        %2033 = vmatprep.mubr.bf16.mxu0 0
        %2034 = vmatmul.mubr.bf16.gmra.mrb[0].mxu0 %v1724
        %v2035 = vpop.f32.mrb[0].mxu0
        %v2036 = vadd.f32 0.0, %v2035
        %v2037 = vpop.f32.mrb[0].mxu0
        %v2038 = vadd.f32 0.0, %v2037
        %v2039 = vpop.f32.mrb[0].mxu0
        %v2040 = vadd.f32 0.0, %v2039
        %v2041 = vpop.f32.mrb[0].mxu0
        %v2042 = vadd.f32 0.0, %v2041
        %2043 = vmatprep.mubr.bf16.mxu0 0
        %2044 = vmatmul.mubr.bf16.gmra.mrb[0].mxu0 %v1727
        %v2045 = vpop.f32.mrb[0].mxu0
        %v2046 = vadd.f32 0.0, %v2045
        %v2047 = vpop.f32.mrb[0].mxu0
        %v2048 = vadd.f32 0.0, %v2047
        %v2049 = vpop.f32.mrb[0].mxu0
        %v2050 = vadd.f32 0.0, %v2049
        %v2051 = vpop.f32.mrb[0].mxu0
        %v2052 = vadd.f32 0.0, %v2051
        %2053 = vmatprep.mubr.bf16.mxu0 0
        %2054 = vmatmul.mubr.bf16.gmra.mrb[0].mxu0 %v1730
        %v2055 = vpop.f32.mrb[0].mxu0
        %v2056 = vadd.f32 0.0, %v2055
        %v2057 = vpop.f32.mrb[0].mxu0
        %v2058 = vadd.f32 0.0, %v2057
        %v2059 = vpop.f32.mrb[0].mxu0
        %v2060 = vadd.f32 0.0, %v2059
        %v2061 = vpop.f32.mrb[0].mxu0
        %v2062 = vadd.f32 0.0, %v2061
        %2063 = vmatprep.mubr.bf16.mxu0 0
        %2064 = vmatmul.mubr.bf16.gmra.mrb[0].mxu0 %v1733
        %v2065 = vpop.f32.mrb[0].mxu0
        %v2066 = vadd.f32 0.0, %v2065
        %v2067 = vpop.f32.mrb[0].mxu0
        %v2068 = vadd.f32 0.0, %v2067
        %v2069 = vpop.f32.mrb[0].mxu0
        %v2070 = vadd.f32 0.0, %v2069
        %v2071 = vpop.f32.mrb[0].mxu0
        %v2072 = vadd.f32 0.0, %v2071
        %2073 = vmatprep.mubr.bf16.mxu0 0
        %2074 = vmatmul.mubr.bf16.gmra.mrb[0].mxu0 %v1736
        %v2075 = vpop.f32.mrb[0].mxu0
        %v2076 = vadd.f32 0.0, %v2075
        %v2077 = vpop.f32.mrb[0].mxu0
        %v2078 = vadd.f32 0.0, %v2077
        %v2079 = vpop.f32.mrb[0].mxu0
        %v2080 = vadd.f32 0.0, %v2079
        %v2081 = vpop.f32.mrb[0].mxu0
        %v2082 = vadd.f32 0.0, %v2081
        %2083 = vmatprep.mubr.bf16.mxu0 0
        %2084 = vmatmul.mubr.bf16.gmra.mrb[0].mxu0 %v1739
        %v2085 = vpop.f32.mrb[0].mxu0
        %v2086 = vadd.f32 0.0, %v2085
        %v2087 = vpop.f32.mrb[0].mxu0
        %v2088 = vadd.f32 0.0, %v2087
        %v2089 = vpop.f32.mrb[0].mxu0
        %v2090 = vadd.f32 0.0, %v2089
        %v2091 = vpop.f32.mrb[0].mxu0
        %v2092 = vadd.f32 0.0, %v2091
        %2093 = vmatprep.mubr.bf16.mxu0 0
        %2094 = vmatmul.mubr.bf16.gmra.mrb[0].mxu0 %v1742
        %v2095 = vpop.f32.mrb[0].mxu0
        %v2096 = vadd.f32 0.0, %v2095
        %v2097 = vpop.f32.mrb[0].mxu0
        %v2098 = vadd.f32 0.0, %v2097
        %v2099 = vpop.f32.mrb[0].mxu0
        %v2100 = vadd.f32 0.0, %v2099
        %v2101 = vpop.f32.mrb[0].mxu0
        %v2102 = vadd.f32 0.0, %v2101
        %2103 = vdwg.mxu0
        %v2104 = vadd.f32 %v1319, %v1786
        %v2105 = vadd.f32 %v1321, %v1788
        %v2106 = vadd.f32 %v1323, %v1790
        %v2107 = vadd.f32 %v1325, %v1792
        %v2108 = vadd.f32 %v1329, %v1796
        %v2109 = vadd.f32 %v1331, %v1798
        %v2110 = vadd.f32 %v1333, %v1800
        %v2111 = vadd.f32 %v1335, %v1802
        %v2112 = vadd.f32 %v1339, %v1806
        %v2113 = vadd.f32 %v1341, %v1808
        %v2114 = vadd.f32 %v1343, %v1810
        %v2115 = vadd.f32 %v1345, %v1812
        %v2116 = vadd.f32 %v1349, %v1816
        %v2117 = vadd.f32 %v1351, %v1818
        %v2118 = vadd.f32 %v1353, %v1820
        %v2119 = vadd.f32 %v1355, %v1822
        %v2120 = vadd.f32 %v1359, %v1826
        %v2121 = vadd.f32 %v1361, %v1828
        %v2122 = vadd.f32 %v1363, %v1830
        %v2123 = vadd.f32 %v1365, %v1832
        %v2124 = vadd.f32 %v1369, %v1836
        %v2125 = vadd.f32 %v1371, %v1838
        %v2126 = vadd.f32 %v1373, %v1840
        %v2127 = vadd.f32 %v1375, %v1842
        %v2128 = vadd.f32 %v1379, %v1846
        %v2129 = vadd.f32 %v1381, %v1848
        %v2130 = vadd.f32 %v1383, %v1850
        %v2131 = vadd.f32 %v1385, %v1852
        %v2132 = vadd.f32 %v1389, %v1856
        %v2133 = vadd.f32 %v1391, %v1858
        %v2134 = vadd.f32 %v1393, %v1860
        %v2135 = vadd.f32 %v1395, %v1862
        %v2136 = vadd.f32 %v1399, %v1866
        %v2137 = vadd.f32 %v1401, %v1868
        %v2138 = vadd.f32 %v1403, %v1870
        %v2139 = vadd.f32 %v1405, %v1872
        %v2140 = vadd.f32 %v1409, %v1876
        %v2141 = vadd.f32 %v1411, %v1878
        %v2142 = vadd.f32 %v1413, %v1880
        %v2143 = vadd.f32 %v1415, %v1882
        %v2144 = vadd.f32 %v1419, %v1886
        %v2145 = vadd.f32 %v1421, %v1888
        %v2146 = vadd.f32 %v1423, %v1890
        %v2147 = vadd.f32 %v1425, %v1892
        %v2148 = vadd.f32 %v1429, %v1896
        %v2149 = vadd.f32 %v1431, %v1898
        %v2150 = vadd.f32 %v1433, %v1900
        %v2151 = vadd.f32 %v1435, %v1902
        %v2152 = vadd.f32 %v1439, %v1906
        %v2153 = vadd.f32 %v1441, %v1908
        %v2154 = vadd.f32 %v1443, %v1910
        %v2155 = vadd.f32 %v1445, %v1912
        %v2156 = vadd.f32 %v1449, %v1916
        %v2157 = vadd.f32 %v1451, %v1918
        %v2158 = vadd.f32 %v1453, %v1920
        %v2159 = vadd.f32 %v1455, %v1922
        %v2160 = vadd.f32 %v1459, %v1926
        %v2161 = vadd.f32 %v1461, %v1928
        %v2162 = vadd.f32 %v1463, %v1930
        %v2163 = vadd.f32 %v1465, %v1932
        %v2164 = vadd.f32 %v1469, %v1936
        %v2165 = vadd.f32 %v1471, %v1938
        %v2166 = vadd.f32 %v1473, %v1940
        %v2167 = vadd.f32 %v1475, %v1942
        %v2168 = vadd.f32 %v1479, %v1946
        %v2169 = vadd.f32 %v1481, %v1948
        %v2170 = vadd.f32 %v1483, %v1950
        %v2171 = vadd.f32 %v1485, %v1952
        %v2172 = vadd.f32 %v1489, %v1956
        %v2173 = vadd.f32 %v1491, %v1958
        %v2174 = vadd.f32 %v1493, %v1960
        %v2175 = vadd.f32 %v1495, %v1962
        %v2176 = vadd.f32 %v1499, %v1966
        %v2177 = vadd.f32 %v1501, %v1968
        %v2178 = vadd.f32 %v1503, %v1970
        %v2179 = vadd.f32 %v1505, %v1972
        %v2180 = vadd.f32 %v1509, %v1976
        %v2181 = vadd.f32 %v1511, %v1978
        %v2182 = vadd.f32 %v1513, %v1980
        %v2183 = vadd.f32 %v1515, %v1982
        %v2184 = vadd.f32 %v1519, %v1986
        %v2185 = vadd.f32 %v1521, %v1988
        %v2186 = vadd.f32 %v1523, %v1990
        %v2187 = vadd.f32 %v1525, %v1992
        %v2188 = vadd.f32 %v1529, %v1996
        %v2189 = vadd.f32 %v1531, %v1998
        %v2190 = vadd.f32 %v1533, %v2000
        %v2191 = vadd.f32 %v1535, %v2002
        %v2192 = vadd.f32 %v1539, %v2006
        %v2193 = vadd.f32 %v1541, %v2008
        %v2194 = vadd.f32 %v1543, %v2010
        %v2195 = vadd.f32 %v1545, %v2012
        %v2196 = vadd.f32 %v1549, %v2016
        %v2197 = vadd.f32 %v1551, %v2018
        %v2198 = vadd.f32 %v1553, %v2020
        %v2199 = vadd.f32 %v1555, %v2022
        %v2200 = vadd.f32 %v1559, %v2026
        %v2201 = vadd.f32 %v1561, %v2028
        %v2202 = vadd.f32 %v1563, %v2030
        %v2203 = vadd.f32 %v1565, %v2032
        %v2204 = vadd.f32 %v1569, %v2036
        %v2205 = vadd.f32 %v1571, %v2038
        %v2206 = vadd.f32 %v1573, %v2040
        %v2207 = vadd.f32 %v1575, %v2042
        %v2208 = vadd.f32 %v1579, %v2046
        %v2209 = vadd.f32 %v1581, %v2048
        %v2210 = vadd.f32 %v1583, %v2050
        %v2211 = vadd.f32 %v1585, %v2052
        %v2212 = vadd.f32 %v1589, %v2056
        %v2213 = vadd.f32 %v1591, %v2058
        %v2214 = vadd.f32 %v1593, %v2060
        %v2215 = vadd.f32 %v1595, %v2062
        %v2216 = vadd.f32 %v1599, %v2066
        %v2217 = vadd.f32 %v1601, %v2068
        %v2218 = vadd.f32 %v1603, %v2070
        %v2219 = vadd.f32 %v1605, %v2072
        %v2220 = vadd.f32 %v1609, %v2076
        %v2221 = vadd.f32 %v1611, %v2078
        %v2222 = vadd.f32 %v1613, %v2080
        %v2223 = vadd.f32 %v1615, %v2082
        %v2224 = vadd.f32 %v1619, %v2086
        %v2225 = vadd.f32 %v1621, %v2088
        %v2226 = vadd.f32 %v1623, %v2090
        %v2227 = vadd.f32 %v1625, %v2092
        %v2228 = vadd.f32 %v1629, %v2096
        %v2229 = vadd.f32 %v1631, %v2098
        %v2230 = vadd.f32 %v1633, %v2100
        %v2231 = vadd.f32 %v1635, %v2102
        %v2232 = vld [vmem:[%s6] sm:$0x3]
        %v2234 = vlaneseq
        %v2235 = vshrl.u32 %v2234, 7
        %v2236 = vsub.s32 0, %v2235
        %v2237 = vrot.slane %v2232, %v2236
        %v2238 = vlaneseq
        %v2239 = vshrl.u32 %v2238, 7
        %v2240 = vsub.s32 1, %v2239
        %v2241 = vrot.slane %v2232, %v2240
        %v2244 = vadd.f32 %v2104, %v2237
        %v2245 = vadd.f32 %v2105, %v2241
        %v2246 = vadd.f32 %v2106, %v2237
        %v2247 = vadd.f32 %v2107, %v2241
        %v2248 = vadd.f32 %v2108, %v2237
        %v2249 = vadd.f32 %v2109, %v2241
        %v2250 = vadd.f32 %v2110, %v2237
        %v2251 = vadd.f32 %v2111, %v2241
        %v2252 = vadd.f32 %v2112, %v2237
        %v2253 = vadd.f32 %v2113, %v2241
        %v2254 = vadd.f32 %v2114, %v2237
        %v2255 = vadd.f32 %v2115, %v2241
        %v2256 = vadd.f32 %v2116, %v2237
        %v2257 = vadd.f32 %v2117, %v2241
        %v2258 = vadd.f32 %v2118, %v2237
        %v2259 = vadd.f32 %v2119, %v2241
        %v2260 = vadd.f32 %v2120, %v2237
        %v2261 = vadd.f32 %v2121, %v2241
        %v2262 = vadd.f32 %v2122, %v2237
        %v2263 = vadd.f32 %v2123, %v2241
        %v2264 = vadd.f32 %v2124, %v2237
        %v2265 = vadd.f32 %v2125, %v2241
        %v2266 = vadd.f32 %v2126, %v2237
        %v2267 = vadd.f32 %v2127, %v2241
        %v2268 = vadd.f32 %v2128, %v2237
        %v2269 = vadd.f32 %v2129, %v2241
        %v2270 = vadd.f32 %v2130, %v2237
        %v2271 = vadd.f32 %v2131, %v2241
        %v2272 = vadd.f32 %v2132, %v2237
        %v2273 = vadd.f32 %v2133, %v2241
        %v2274 = vadd.f32 %v2134, %v2237
        %v2275 = vadd.f32 %v2135, %v2241
        %v2276 = vadd.f32 %v2136, %v2237
        %v2277 = vadd.f32 %v2137, %v2241
        %v2278 = vadd.f32 %v2138, %v2237
        %v2279 = vadd.f32 %v2139, %v2241
        %v2280 = vadd.f32 %v2140, %v2237
        %v2281 = vadd.f32 %v2141, %v2241
        %v2282 = vadd.f32 %v2142, %v2237
        %v2283 = vadd.f32 %v2143, %v2241
        %v2284 = vadd.f32 %v2144, %v2237
        %v2285 = vadd.f32 %v2145, %v2241
        %v2286 = vadd.f32 %v2146, %v2237
        %v2287 = vadd.f32 %v2147, %v2241
        %v2288 = vadd.f32 %v2148, %v2237
        %v2289 = vadd.f32 %v2149, %v2241
        %v2290 = vadd.f32 %v2150, %v2237
        %v2291 = vadd.f32 %v2151, %v2241
        %v2292 = vadd.f32 %v2152, %v2237
        %v2293 = vadd.f32 %v2153, %v2241
        %v2294 = vadd.f32 %v2154, %v2237
        %v2295 = vadd.f32 %v2155, %v2241
        %v2296 = vadd.f32 %v2156, %v2237
        %v2297 = vadd.f32 %v2157, %v2241
        %v2298 = vadd.f32 %v2158, %v2237
        %v2299 = vadd.f32 %v2159, %v2241
        %v2300 = vadd.f32 %v2160, %v2237
        %v2301 = vadd.f32 %v2161, %v2241
        %v2302 = vadd.f32 %v2162, %v2237
        %v2303 = vadd.f32 %v2163, %v2241
        %v2304 = vadd.f32 %v2164, %v2237
        %v2305 = vadd.f32 %v2165, %v2241
        %v2306 = vadd.f32 %v2166, %v2237
        %v2307 = vadd.f32 %v2167, %v2241
        %v2308 = vadd.f32 %v2168, %v2237
        %v2309 = vadd.f32 %v2169, %v2241
        %v2310 = vadd.f32 %v2170, %v2237
        %v2311 = vadd.f32 %v2171, %v2241
        %v2312 = vadd.f32 %v2172, %v2237
        %v2313 = vadd.f32 %v2173, %v2241
        %v2314 = vadd.f32 %v2174, %v2237
        %v2315 = vadd.f32 %v2175, %v2241
        %v2316 = vadd.f32 %v2176, %v2237
        %v2317 = vadd.f32 %v2177, %v2241
        %v2318 = vadd.f32 %v2178, %v2237
        %v2319 = vadd.f32 %v2179, %v2241
        %v2320 = vadd.f32 %v2180, %v2237
        %v2321 = vadd.f32 %v2181, %v2241
        %v2322 = vadd.f32 %v2182, %v2237
        %v2323 = vadd.f32 %v2183, %v2241
        %v2324 = vadd.f32 %v2184, %v2237
        %v2325 = vadd.f32 %v2185, %v2241
        %v2326 = vadd.f32 %v2186, %v2237
        %v2327 = vadd.f32 %v2187, %v2241
        %v2328 = vadd.f32 %v2188, %v2237
        %v2329 = vadd.f32 %v2189, %v2241
        %v2330 = vadd.f32 %v2190, %v2237
        %v2331 = vadd.f32 %v2191, %v2241
        %v2332 = vadd.f32 %v2192, %v2237
        %v2333 = vadd.f32 %v2193, %v2241
        %v2334 = vadd.f32 %v2194, %v2237
        %v2335 = vadd.f32 %v2195, %v2241
        %v2336 = vadd.f32 %v2196, %v2237
        %v2337 = vadd.f32 %v2197, %v2241
        %v2338 = vadd.f32 %v2198, %v2237
        %v2339 = vadd.f32 %v2199, %v2241
        %v2340 = vadd.f32 %v2200, %v2237
        %v2341 = vadd.f32 %v2201, %v2241
        %v2342 = vadd.f32 %v2202, %v2237
        %v2343 = vadd.f32 %v2203, %v2241
        %v2344 = vadd.f32 %v2204, %v2237
        %v2345 = vadd.f32 %v2205, %v2241
        %v2346 = vadd.f32 %v2206, %v2237
        %v2347 = vadd.f32 %v2207, %v2241
        %v2348 = vadd.f32 %v2208, %v2237
        %v2349 = vadd.f32 %v2209, %v2241
        %v2350 = vadd.f32 %v2210, %v2237
        %v2351 = vadd.f32 %v2211, %v2241
        %v2352 = vadd.f32 %v2212, %v2237
        %v2353 = vadd.f32 %v2213, %v2241
        %v2354 = vadd.f32 %v2214, %v2237
        %v2355 = vadd.f32 %v2215, %v2241
        %v2356 = vadd.f32 %v2216, %v2237
        %v2357 = vadd.f32 %v2217, %v2241
        %v2358 = vadd.f32 %v2218, %v2237
        %v2359 = vadd.f32 %v2219, %v2241
        %v2360 = vadd.f32 %v2220, %v2237
        %v2361 = vadd.f32 %v2221, %v2241
        %v2362 = vadd.f32 %v2222, %v2237
        %v2363 = vadd.f32 %v2223, %v2241
        %v2364 = vadd.f32 %v2224, %v2237
        %v2365 = vadd.f32 %v2225, %v2241
        %v2366 = vadd.f32 %v2226, %v2237
        %v2367 = vadd.f32 %v2227, %v2241
        %v2368 = vadd.f32 %v2228, %v2237
        %v2369 = vadd.f32 %v2229, %v2241
        %v2370 = vadd.f32 %v2230, %v2237
        %v2371 = vadd.f32 %v2231, %v2241
        %vm2372 = vcmp.ge.f32.partialorder %v2244, 0.0
        %vm2373 = vcmp.ge.f32.partialorder %v2245, 0.0
        %vm2374 = vcmp.ge.f32.partialorder %v2246, 0.0
        %vm2375 = vcmp.ge.f32.partialorder %v2247, 0.0
        %vm2376 = vcmp.ge.f32.partialorder %v2248, 0.0
        %vm2377 = vcmp.ge.f32.partialorder %v2249, 0.0
        %vm2378 = vcmp.ge.f32.partialorder %v2250, 0.0
        %vm2379 = vcmp.ge.f32.partialorder %v2251, 0.0
        %vm2380 = vcmp.ge.f32.partialorder %v2252, 0.0
        %vm2381 = vcmp.ge.f32.partialorder %v2253, 0.0
        %vm2382 = vcmp.ge.f32.partialorder %v2254, 0.0
        %vm2383 = vcmp.ge.f32.partialorder %v2255, 0.0
        %vm2384 = vcmp.ge.f32.partialorder %v2256, 0.0
        %vm2385 = vcmp.ge.f32.partialorder %v2257, 0.0
        %vm2386 = vcmp.ge.f32.partialorder %v2258, 0.0
        %vm2387 = vcmp.ge.f32.partialorder %v2259, 0.0
        %vm2388 = vcmp.ge.f32.partialorder %v2260, 0.0
        %vm2389 = vcmp.ge.f32.partialorder %v2261, 0.0
        %vm2390 = vcmp.ge.f32.partialorder %v2262, 0.0
        %vm2391 = vcmp.ge.f32.partialorder %v2263, 0.0
        %vm2392 = vcmp.ge.f32.partialorder %v2264, 0.0
        %vm2393 = vcmp.ge.f32.partialorder %v2265, 0.0
        %vm2394 = vcmp.ge.f32.partialorder %v2266, 0.0
        %vm2395 = vcmp.ge.f32.partialorder %v2267, 0.0
        %vm2396 = vcmp.ge.f32.partialorder %v2268, 0.0
        %vm2397 = vcmp.ge.f32.partialorder %v2269, 0.0
        %vm2398 = vcmp.ge.f32.partialorder %v2270, 0.0
        %vm2399 = vcmp.ge.f32.partialorder %v2271, 0.0
        %vm2400 = vcmp.ge.f32.partialorder %v2272, 0.0
        %vm2401 = vcmp.ge.f32.partialorder %v2273, 0.0
        %vm2402 = vcmp.ge.f32.partialorder %v2274, 0.0
        %vm2403 = vcmp.ge.f32.partialorder %v2275, 0.0
        %vm2404 = vcmp.ge.f32.partialorder %v2276, 0.0
        %vm2405 = vcmp.ge.f32.partialorder %v2277, 0.0
        %vm2406 = vcmp.ge.f32.partialorder %v2278, 0.0
        %vm2407 = vcmp.ge.f32.partialorder %v2279, 0.0
        %vm2408 = vcmp.ge.f32.partialorder %v2280, 0.0
        %vm2409 = vcmp.ge.f32.partialorder %v2281, 0.0
        %vm2410 = vcmp.ge.f32.partialorder %v2282, 0.0
        %vm2411 = vcmp.ge.f32.partialorder %v2283, 0.0
        %vm2412 = vcmp.ge.f32.partialorder %v2284, 0.0
        %vm2413 = vcmp.ge.f32.partialorder %v2285, 0.0
        %vm2414 = vcmp.ge.f32.partialorder %v2286, 0.0
        %vm2415 = vcmp.ge.f32.partialorder %v2287, 0.0
        %vm2416 = vcmp.ge.f32.partialorder %v2288, 0.0
        %vm2417 = vcmp.ge.f32.partialorder %v2289, 0.0
        %vm2418 = vcmp.ge.f32.partialorder %v2290, 0.0
        %vm2419 = vcmp.ge.f32.partialorder %v2291, 0.0
        %vm2420 = vcmp.ge.f32.partialorder %v2292, 0.0
        %vm2421 = vcmp.ge.f32.partialorder %v2293, 0.0
        %vm2422 = vcmp.ge.f32.partialorder %v2294, 0.0
        %vm2423 = vcmp.ge.f32.partialorder %v2295, 0.0
        %vm2424 = vcmp.ge.f32.partialorder %v2296, 0.0
        %vm2425 = vcmp.ge.f32.partialorder %v2297, 0.0
        %vm2426 = vcmp.ge.f32.partialorder %v2298, 0.0
        %vm2427 = vcmp.ge.f32.partialorder %v2299, 0.0
        %vm2428 = vcmp.ge.f32.partialorder %v2300, 0.0
        %vm2429 = vcmp.ge.f32.partialorder %v2301, 0.0
        %vm2430 = vcmp.ge.f32.partialorder %v2302, 0.0
        %vm2431 = vcmp.ge.f32.partialorder %v2303, 0.0
        %vm2432 = vcmp.ge.f32.partialorder %v2304, 0.0
        %vm2433 = vcmp.ge.f32.partialorder %v2305, 0.0
        %vm2434 = vcmp.ge.f32.partialorder %v2306, 0.0
        %vm2435 = vcmp.ge.f32.partialorder %v2307, 0.0
        %vm2436 = vcmp.ge.f32.partialorder %v2308, 0.0
        %vm2437 = vcmp.ge.f32.partialorder %v2309, 0.0
        %vm2438 = vcmp.ge.f32.partialorder %v2310, 0.0
        %vm2439 = vcmp.ge.f32.partialorder %v2311, 0.0
        %vm2440 = vcmp.ge.f32.partialorder %v2312, 0.0
        %vm2441 = vcmp.ge.f32.partialorder %v2313, 0.0
        %vm2442 = vcmp.ge.f32.partialorder %v2314, 0.0
        %vm2443 = vcmp.ge.f32.partialorder %v2315, 0.0
        %vm2444 = vcmp.ge.f32.partialorder %v2316, 0.0
        %vm2445 = vcmp.ge.f32.partialorder %v2317, 0.0
        %vm2446 = vcmp.ge.f32.partialorder %v2318, 0.0
        %vm2447 = vcmp.ge.f32.partialorder %v2319, 0.0
        %vm2448 = vcmp.ge.f32.partialorder %v2320, 0.0
        %vm2449 = vcmp.ge.f32.partialorder %v2321, 0.0
        %vm2450 = vcmp.ge.f32.partialorder %v2322, 0.0
        %vm2451 = vcmp.ge.f32.partialorder %v2323, 0.0
        %vm2452 = vcmp.ge.f32.partialorder %v2324, 0.0
        %vm2453 = vcmp.ge.f32.partialorder %v2325, 0.0
        %vm2454 = vcmp.ge.f32.partialorder %v2326, 0.0
        %vm2455 = vcmp.ge.f32.partialorder %v2327, 0.0
        %vm2456 = vcmp.ge.f32.partialorder %v2328, 0.0
        %vm2457 = vcmp.ge.f32.partialorder %v2329, 0.0
        %vm2458 = vcmp.ge.f32.partialorder %v2330, 0.0
        %vm2459 = vcmp.ge.f32.partialorder %v2331, 0.0
        %vm2460 = vcmp.ge.f32.partialorder %v2332, 0.0
        %vm2461 = vcmp.ge.f32.partialorder %v2333, 0.0
        %vm2462 = vcmp.ge.f32.partialorder %v2334, 0.0
        %vm2463 = vcmp.ge.f32.partialorder %v2335, 0.0
        %vm2464 = vcmp.ge.f32.partialorder %v2336, 0.0
        %vm2465 = vcmp.ge.f32.partialorder %v2337, 0.0
        %vm2466 = vcmp.ge.f32.partialorder %v2338, 0.0
        %vm2467 = vcmp.ge.f32.partialorder %v2339, 0.0
        %vm2468 = vcmp.ge.f32.partialorder %v2340, 0.0
        %vm2469 = vcmp.ge.f32.partialorder %v2341, 0.0
        %vm2470 = vcmp.ge.f32.partialorder %v2342, 0.0
        %vm2471 = vcmp.ge.f32.partialorder %v2343, 0.0
        %vm2472 = vcmp.ge.f32.partialorder %v2344, 0.0
        %vm2473 = vcmp.ge.f32.partialorder %v2345, 0.0
        %vm2474 = vcmp.ge.f32.partialorder %v2346, 0.0
        %vm2475 = vcmp.ge.f32.partialorder %v2347, 0.0
        %vm2476 = vcmp.ge.f32.partialorder %v2348, 0.0
        %vm2477 = vcmp.ge.f32.partialorder %v2349, 0.0
        %vm2478 = vcmp.ge.f32.partialorder %v2350, 0.0
        %vm2479 = vcmp.ge.f32.partialorder %v2351, 0.0
        %vm2480 = vcmp.ge.f32.partialorder %v2352, 0.0
        %vm2481 = vcmp.ge.f32.partialorder %v2353, 0.0
        %vm2482 = vcmp.ge.f32.partialorder %v2354, 0.0
        %vm2483 = vcmp.ge.f32.partialorder %v2355, 0.0
        %vm2484 = vcmp.ge.f32.partialorder %v2356, 0.0
        %vm2485 = vcmp.ge.f32.partialorder %v2357, 0.0
        %vm2486 = vcmp.ge.f32.partialorder %v2358, 0.0
        %vm2487 = vcmp.ge.f32.partialorder %v2359, 0.0
        %vm2488 = vcmp.ge.f32.partialorder %v2360, 0.0
        %vm2489 = vcmp.ge.f32.partialorder %v2361, 0.0
        %vm2490 = vcmp.ge.f32.partialorder %v2362, 0.0
        %vm2491 = vcmp.ge.f32.partialorder %v2363, 0.0
        %vm2492 = vcmp.ge.f32.partialorder %v2364, 0.0
        %vm2493 = vcmp.ge.f32.partialorder %v2365, 0.0
        %vm2494 = vcmp.ge.f32.partialorder %v2366, 0.0
        %vm2495 = vcmp.ge.f32.partialorder %v2367, 0.0
        %vm2496 = vcmp.ge.f32.partialorder %v2368, 0.0
        %vm2497 = vcmp.ge.f32.partialorder %v2369, 0.0
        %vm2498 = vcmp.ge.f32.partialorder %v2370, 0.0
        %vm2499 = vcmp.ge.f32.partialorder %v2371, 0.0
        %v2500 = vmul.f32 %v2244, 0.2
        %v2501 = vmul.f32 %v2245, 0.2
        %v2502 = vmul.f32 %v2246, 0.2
        %v2503 = vmul.f32 %v2247, 0.2
        %v2504 = vmul.f32 %v2248, 0.2
        %v2505 = vmul.f32 %v2249, 0.2
        %v2506 = vmul.f32 %v2250, 0.2
        %v2507 = vmul.f32 %v2251, 0.2
        %v2508 = vmul.f32 %v2252, 0.2
        %v2509 = vmul.f32 %v2253, 0.2
        %v2510 = vmul.f32 %v2254, 0.2
        %v2511 = vmul.f32 %v2255, 0.2
        %v2512 = vmul.f32 %v2256, 0.2
        %v2513 = vmul.f32 %v2257, 0.2
        %v2514 = vmul.f32 %v2258, 0.2
        %v2515 = vmul.f32 %v2259, 0.2
        %v2516 = vmul.f32 %v2260, 0.2
        %v2517 = vmul.f32 %v2261, 0.2
        %v2518 = vmul.f32 %v2262, 0.2
        %v2519 = vmul.f32 %v2263, 0.2
        %v2520 = vmul.f32 %v2264, 0.2
        %v2521 = vmul.f32 %v2265, 0.2
        %v2522 = vmul.f32 %v2266, 0.2
        %v2523 = vmul.f32 %v2267, 0.2
        %v2524 = vmul.f32 %v2268, 0.2
        %v2525 = vmul.f32 %v2269, 0.2
        %v2526 = vmul.f32 %v2270, 0.2
        %v2527 = vmul.f32 %v2271, 0.2
        %v2528 = vmul.f32 %v2272, 0.2
        %v2529 = vmul.f32 %v2273, 0.2
        %v2530 = vmul.f32 %v2274, 0.2
        %v2531 = vmul.f32 %v2275, 0.2
        %v2532 = vmul.f32 %v2276, 0.2
        %v2533 = vmul.f32 %v2277, 0.2
        %v2534 = vmul.f32 %v2278, 0.2
        %v2535 = vmul.f32 %v2279, 0.2
        %v2536 = vmul.f32 %v2280, 0.2
        %v2537 = vmul.f32 %v2281, 0.2
        %v2538 = vmul.f32 %v2282, 0.2
        %v2539 = vmul.f32 %v2283, 0.2
        %v2540 = vmul.f32 %v2284, 0.2
        %v2541 = vmul.f32 %v2285, 0.2
        %v2542 = vmul.f32 %v2286, 0.2
        %v2543 = vmul.f32 %v2287, 0.2
        %v2544 = vmul.f32 %v2288, 0.2
        %v2545 = vmul.f32 %v2289, 0.2
        %v2546 = vmul.f32 %v2290, 0.2
        %v2547 = vmul.f32 %v2291, 0.2
        %v2548 = vmul.f32 %v2292, 0.2
        %v2549 = vmul.f32 %v2293, 0.2
        %v2550 = vmul.f32 %v2294, 0.2
        %v2551 = vmul.f32 %v2295, 0.2
        %v2552 = vmul.f32 %v2296, 0.2
        %v2553 = vmul.f32 %v2297, 0.2
        %v2554 = vmul.f32 %v2298, 0.2
        %v2555 = vmul.f32 %v2299, 0.2
        %v2556 = vmul.f32 %v2300, 0.2
        %v2557 = vmul.f32 %v2301, 0.2
        %v2558 = vmul.f32 %v2302, 0.2
        %v2559 = vmul.f32 %v2303, 0.2
        %v2560 = vmul.f32 %v2304, 0.2
        %v2561 = vmul.f32 %v2305, 0.2
        %v2562 = vmul.f32 %v2306, 0.2
        %v2563 = vmul.f32 %v2307, 0.2
        %v2564 = vmul.f32 %v2308, 0.2
        %v2565 = vmul.f32 %v2309, 0.2
        %v2566 = vmul.f32 %v2310, 0.2
        %v2567 = vmul.f32 %v2311, 0.2
        %v2568 = vmul.f32 %v2312, 0.2
        %v2569 = vmul.f32 %v2313, 0.2
        %v2570 = vmul.f32 %v2314, 0.2
        %v2571 = vmul.f32 %v2315, 0.2
        %v2572 = vmul.f32 %v2316, 0.2
        %v2573 = vmul.f32 %v2317, 0.2
        %v2574 = vmul.f32 %v2318, 0.2
        %v2575 = vmul.f32 %v2319, 0.2
        %v2576 = vmul.f32 %v2320, 0.2
        %v2577 = vmul.f32 %v2321, 0.2
        %v2578 = vmul.f32 %v2322, 0.2
        %v2579 = vmul.f32 %v2323, 0.2
        %v2580 = vmul.f32 %v2324, 0.2
        %v2581 = vmul.f32 %v2325, 0.2
        %v2582 = vmul.f32 %v2326, 0.2
        %v2583 = vmul.f32 %v2327, 0.2
        %v2584 = vmul.f32 %v2328, 0.2
        %v2585 = vmul.f32 %v2329, 0.2
        %v2586 = vmul.f32 %v2330, 0.2
        %v2587 = vmul.f32 %v2331, 0.2
        %v2588 = vmul.f32 %v2332, 0.2
        %v2589 = vmul.f32 %v2333, 0.2
        %v2590 = vmul.f32 %v2334, 0.2
        %v2591 = vmul.f32 %v2335, 0.2
        %v2592 = vmul.f32 %v2336, 0.2
        %v2593 = vmul.f32 %v2337, 0.2
        %v2594 = vmul.f32 %v2338, 0.2
        %v2595 = vmul.f32 %v2339, 0.2
        %v2596 = vmul.f32 %v2340, 0.2
        %v2597 = vmul.f32 %v2341, 0.2
        %v2598 = vmul.f32 %v2342, 0.2
        %v2599 = vmul.f32 %v2343, 0.2
        %v2600 = vmul.f32 %v2344, 0.2
        %v2601 = vmul.f32 %v2345, 0.2
        %v2602 = vmul.f32 %v2346, 0.2
        %v2603 = vmul.f32 %v2347, 0.2
        %v2604 = vmul.f32 %v2348, 0.2
        %v2605 = vmul.f32 %v2349, 0.2
        %v2606 = vmul.f32 %v2350, 0.2
        %v2607 = vmul.f32 %v2351, 0.2
        %v2608 = vmul.f32 %v2352, 0.2
        %v2609 = vmul.f32 %v2353, 0.2
        %v2610 = vmul.f32 %v2354, 0.2
        %v2611 = vmul.f32 %v2355, 0.2
        %v2612 = vmul.f32 %v2356, 0.2
        %v2613 = vmul.f32 %v2357, 0.2
        %v2614 = vmul.f32 %v2358, 0.2
        %v2615 = vmul.f32 %v2359, 0.2
        %v2616 = vmul.f32 %v2360, 0.2
        %v2617 = vmul.f32 %v2361, 0.2
        %v2618 = vmul.f32 %v2362, 0.2
        %v2619 = vmul.f32 %v2363, 0.2
        %v2620 = vmul.f32 %v2364, 0.2
        %v2621 = vmul.f32 %v2365, 0.2
        %v2622 = vmul.f32 %v2366, 0.2
        %v2623 = vmul.f32 %v2367, 0.2
        %v2624 = vmul.f32 %v2368, 0.2
        %v2625 = vmul.f32 %v2369, 0.2
        %v2626 = vmul.f32 %v2370, 0.2
        %v2627 = vmul.f32 %v2371, 0.2
        %v2628 = vsel %vm2372, %v2244, %v2500
        %v2629 = vsel %vm2373, %v2245, %v2501
        %v2630 = vsel %vm2374, %v2246, %v2502
        %v2631 = vsel %vm2375, %v2247, %v2503
        %v2632 = vsel %vm2376, %v2248, %v2504
        %v2633 = vsel %vm2377, %v2249, %v2505
        %v2634 = vsel %vm2378, %v2250, %v2506
        %v2635 = vsel %vm2379, %v2251, %v2507
        %v2636 = vsel %vm2380, %v2252, %v2508
        %v2637 = vsel %vm2381, %v2253, %v2509
        %v2638 = vsel %vm2382, %v2254, %v2510
        %v2639 = vsel %vm2383, %v2255, %v2511
        %v2640 = vsel %vm2384, %v2256, %v2512
        %v2641 = vsel %vm2385, %v2257, %v2513
        %v2642 = vsel %vm2386, %v2258, %v2514
        %v2643 = vsel %vm2387, %v2259, %v2515
        %v2644 = vsel %vm2388, %v2260, %v2516
        %v2645 = vsel %vm2389, %v2261, %v2517
        %v2646 = vsel %vm2390, %v2262, %v2518
        %v2647 = vsel %vm2391, %v2263, %v2519
        %v2648 = vsel %vm2392, %v2264, %v2520
        %v2649 = vsel %vm2393, %v2265, %v2521
        %v2650 = vsel %vm2394, %v2266, %v2522
        %v2651 = vsel %vm2395, %v2267, %v2523
        %v2652 = vsel %vm2396, %v2268, %v2524
        %v2653 = vsel %vm2397, %v2269, %v2525
        %v2654 = vsel %vm2398, %v2270, %v2526
        %v2655 = vsel %vm2399, %v2271, %v2527
        %v2656 = vsel %vm2400, %v2272, %v2528
        %v2657 = vsel %vm2401, %v2273, %v2529
        %v2658 = vsel %vm2402, %v2274, %v2530
        %v2659 = vsel %vm2403, %v2275, %v2531
        %v2660 = vsel %vm2404, %v2276, %v2532
        %v2661 = vsel %vm2405, %v2277, %v2533
        %v2662 = vsel %vm2406, %v2278, %v2534
        %v2663 = vsel %vm2407, %v2279, %v2535
        %v2664 = vsel %vm2408, %v2280, %v2536
        %v2665 = vsel %vm2409, %v2281, %v2537
        %v2666 = vsel %vm2410, %v2282, %v2538
        %v2667 = vsel %vm2411, %v2283, %v2539
        %v2668 = vsel %vm2412, %v2284, %v2540
        %v2669 = vsel %vm2413, %v2285, %v2541
        %v2670 = vsel %vm2414, %v2286, %v2542
        %v2671 = vsel %vm2415, %v2287, %v2543
        %v2672 = vsel %vm2416, %v2288, %v2544
        %v2673 = vsel %vm2417, %v2289, %v2545
        %v2674 = vsel %vm2418, %v2290, %v2546
        %v2675 = vsel %vm2419, %v2291, %v2547
        %v2676 = vsel %vm2420, %v2292, %v2548
        %v2677 = vsel %vm2421, %v2293, %v2549
        %v2678 = vsel %vm2422, %v2294, %v2550
        %v2679 = vsel %vm2423, %v2295, %v2551
        %v2680 = vsel %vm2424, %v2296, %v2552
        %v2681 = vsel %vm2425, %v2297, %v2553
        %v2682 = vsel %vm2426, %v2298, %v2554
        %v2683 = vsel %vm2427, %v2299, %v2555
        %v2684 = vsel %vm2428, %v2300, %v2556
        %v2685 = vsel %vm2429, %v2301, %v2557
        %v2686 = vsel %vm2430, %v2302, %v2558
        %v2687 = vsel %vm2431, %v2303, %v2559
        %v2688 = vsel %vm2432, %v2304, %v2560
        %v2689 = vsel %vm2433, %v2305, %v2561
        %v2690 = vsel %vm2434, %v2306, %v2562
        %v2691 = vsel %vm2435, %v2307, %v2563
        %v2692 = vsel %vm2436, %v2308, %v2564
        %v2693 = vsel %vm2437, %v2309, %v2565
        %v2694 = vsel %vm2438, %v2310, %v2566
        %v2695 = vsel %vm2439, %v2311, %v2567
        %v2696 = vsel %vm2440, %v2312, %v2568
        %v2697 = vsel %vm2441, %v2313, %v2569
        %v2698 = vsel %vm2442, %v2314, %v2570
        %v2699 = vsel %vm2443, %v2315, %v2571
        %v2700 = vsel %vm2444, %v2316, %v2572
        %v2701 = vsel %vm2445, %v2317, %v2573
        %v2702 = vsel %vm2446, %v2318, %v2574
        %v2703 = vsel %vm2447, %v2319, %v2575
        %v2704 = vsel %vm2448, %v2320, %v2576
        %v2705 = vsel %vm2449, %v2321, %v2577
        %v2706 = vsel %vm2450, %v2322, %v2578
        %v2707 = vsel %vm2451, %v2323, %v2579
        %v2708 = vsel %vm2452, %v2324, %v2580
        %v2709 = vsel %vm2453, %v2325, %v2581
        %v2710 = vsel %vm2454, %v2326, %v2582
        %v2711 = vsel %vm2455, %v2327, %v2583
        %v2712 = vsel %vm2456, %v2328, %v2584
        %v2713 = vsel %vm2457, %v2329, %v2585
        %v2714 = vsel %vm2458, %v2330, %v2586
        %v2715 = vsel %vm2459, %v2331, %v2587
        %v2716 = vsel %vm2460, %v2332, %v2588
        %v2717 = vsel %vm2461, %v2333, %v2589
        %v2718 = vsel %vm2462, %v2334, %v2590
        %v2719 = vsel %vm2463, %v2335, %v2591
        %v2720 = vsel %vm2464, %v2336, %v2592
        %v2721 = vsel %vm2465, %v2337, %v2593
        %v2722 = vsel %vm2466, %v2338, %v2594
        %v2723 = vsel %vm2467, %v2339, %v2595
        %v2724 = vsel %vm2468, %v2340, %v2596
        %v2725 = vsel %vm2469, %v2341, %v2597
        %v2726 = vsel %vm2470, %v2342, %v2598
        %v2727 = vsel %vm2471, %v2343, %v2599
        %v2728 = vsel %vm2472, %v2344, %v2600
        %v2729 = vsel %vm2473, %v2345, %v2601
        %v2730 = vsel %vm2474, %v2346, %v2602
        %v2731 = vsel %vm2475, %v2347, %v2603
        %v2732 = vsel %vm2476, %v2348, %v2604
        %v2733 = vsel %vm2477, %v2349, %v2605
        %v2734 = vsel %vm2478, %v2350, %v2606
        %v2735 = vsel %vm2479, %v2351, %v2607
        %v2736 = vsel %vm2480, %v2352, %v2608
        %v2737 = vsel %vm2481, %v2353, %v2609
        %v2738 = vsel %vm2482, %v2354, %v2610
        %v2739 = vsel %vm2483, %v2355, %v2611
        %v2740 = vsel %vm2484, %v2356, %v2612
        %v2741 = vsel %vm2485, %v2357, %v2613
        %v2742 = vsel %vm2486, %v2358, %v2614
        %v2743 = vsel %vm2487, %v2359, %v2615
        %v2744 = vsel %vm2488, %v2360, %v2616
        %v2745 = vsel %vm2489, %v2361, %v2617
        %v2746 = vsel %vm2490, %v2362, %v2618
        %v2747 = vsel %vm2491, %v2363, %v2619
        %v2748 = vsel %vm2492, %v2364, %v2620
        %v2749 = vsel %vm2493, %v2365, %v2621
        %v2750 = vsel %vm2494, %v2366, %v2622
        %v2751 = vsel %vm2495, %v2367, %v2623
        %v2752 = vsel %vm2496, %v2368, %v2624
        %v2753 = vsel %vm2497, %v2369, %v2625
        %v2754 = vsel %vm2498, %v2370, %v2626
        %v2755 = vsel %vm2499, %v2371, %v2627
        %v2756 = vpack.c.bf16 %v2630, %v2628
        %v2757 = vpack.c.bf16 %v2631, %v2629
        %v2758 = vpack.c.bf16 %v2634, %v2632
        %v2759 = vpack.c.bf16 %v2635, %v2633
        %v2760 = vpack.c.bf16 %v2638, %v2636
        %v2761 = vpack.c.bf16 %v2639, %v2637
        %v2762 = vpack.c.bf16 %v2642, %v2640
        %v2763 = vpack.c.bf16 %v2643, %v2641
        %v2764 = vpack.c.bf16 %v2646, %v2644
        %v2765 = vpack.c.bf16 %v2647, %v2645
        %v2766 = vpack.c.bf16 %v2650, %v2648
        %v2767 = vpack.c.bf16 %v2651, %v2649
        %v2768 = vpack.c.bf16 %v2654, %v2652
        %v2769 = vpack.c.bf16 %v2655, %v2653
        %v2770 = vpack.c.bf16 %v2658, %v2656
        %v2771 = vpack.c.bf16 %v2659, %v2657
        %v2772 = vpack.c.bf16 %v2662, %v2660
        %v2773 = vpack.c.bf16 %v2663, %v2661
        %v2774 = vpack.c.bf16 %v2666, %v2664
        %v2775 = vpack.c.bf16 %v2667, %v2665
        %v2776 = vpack.c.bf16 %v2670, %v2668
        %v2777 = vpack.c.bf16 %v2671, %v2669
        %v2778 = vpack.c.bf16 %v2674, %v2672
        %v2779 = vpack.c.bf16 %v2675, %v2673
        %v2780 = vpack.c.bf16 %v2678, %v2676
        %v2781 = vpack.c.bf16 %v2679, %v2677
        %v2782 = vpack.c.bf16 %v2682, %v2680
        %v2783 = vpack.c.bf16 %v2683, %v2681
        %v2784 = vpack.c.bf16 %v2686, %v2684
        %v2785 = vpack.c.bf16 %v2687, %v2685
        %v2786 = vpack.c.bf16 %v2690, %v2688
        %v2787 = vpack.c.bf16 %v2691, %v2689
        %v2788 = vpack.c.bf16 %v2694, %v2692
        %v2789 = vpack.c.bf16 %v2695, %v2693
        %v2790 = vpack.c.bf16 %v2698, %v2696
        %v2791 = vpack.c.bf16 %v2699, %v2697
        %v2792 = vpack.c.bf16 %v2702, %v2700
        %v2793 = vpack.c.bf16 %v2703, %v2701
        %v2794 = vpack.c.bf16 %v2706, %v2704
        %v2795 = vpack.c.bf16 %v2707, %v2705
        %v2796 = vpack.c.bf16 %v2710, %v2708
        %v2797 = vpack.c.bf16 %v2711, %v2709
        %v2798 = vpack.c.bf16 %v2714, %v2712
        %v2799 = vpack.c.bf16 %v2715, %v2713
        %v2800 = vpack.c.bf16 %v2718, %v2716
        %v2801 = vpack.c.bf16 %v2719, %v2717
        %v2802 = vpack.c.bf16 %v2722, %v2720
        %v2803 = vpack.c.bf16 %v2723, %v2721
        %v2804 = vpack.c.bf16 %v2726, %v2724
        %v2805 = vpack.c.bf16 %v2727, %v2725
        %v2806 = vpack.c.bf16 %v2730, %v2728
        %v2807 = vpack.c.bf16 %v2731, %v2729
        %v2808 = vpack.c.bf16 %v2734, %v2732
        %v2809 = vpack.c.bf16 %v2735, %v2733
        %v2810 = vpack.c.bf16 %v2738, %v2736
        %v2811 = vpack.c.bf16 %v2739, %v2737
        %v2812 = vpack.c.bf16 %v2742, %v2740
        %v2813 = vpack.c.bf16 %v2743, %v2741
        %v2814 = vpack.c.bf16 %v2746, %v2744
        %v2815 = vpack.c.bf16 %v2747, %v2745
        %v2816 = vpack.c.bf16 %v2750, %v2748
        %v2817 = vpack.c.bf16 %v2751, %v2749
        %v2818 = vpack.c.bf16 %v2754, %v2752
        %v2819 = vpack.c.bf16 %v2755, %v2753
        %v2820 = vld [vmem:[%s7] sm:$0xff]
        %v2821 = vld [vmem:[%s7 + $0x8] sm:$0xff]
        %v2822 = vld [vmem:[%s7 + $0x10] sm:$0xff]
        %v2823 = vld [vmem:[%s7 + $0x18] sm:$0xff]
        %v2824 = vld [vmem:[%s7 + $0x20] sm:$0xff]
        %v2825 = vld [vmem:[%s7 + $0x28] sm:$0xff]
        %v2826 = vld [vmem:[%s7 + $0x30] sm:$0xff]
        %v2827 = vld [vmem:[%s7 + $0x38] sm:$0xff]
        %v2828 = vld [vmem:[%s7 + $0x40] sm:$0xff]
        %v2829 = vld [vmem:[%s7 + $0x48] sm:$0xff]
        %v2830 = vld [vmem:[%s7 + $0x50] sm:$0xff]
        %v2831 = vld [vmem:[%s7 + $0x58] sm:$0xff]
        %v2832 = vld [vmem:[%s7 + $0x60] sm:$0xff]
        %v2833 = vld [vmem:[%s7 + $0x68] sm:$0xff]
        %v2834 = vld [vmem:[%s7 + $0x70] sm:$0xff]
        %v2835 = vld [vmem:[%s7 + $0x78] sm:$0xff]
        %v2836 = vld [vmem:[%s7 + $0x80] sm:$0xff]
        %v2837 = vld [vmem:[%s7 + $0x88] sm:$0xff]
        %v2838 = vld [vmem:[%s7 + $0x90] sm:$0xff]
        %v2839 = vld [vmem:[%s7 + $0x98] sm:$0xff]
        %v2840 = vld [vmem:[%s7 + $0xa0] sm:$0xff]
        %v2841 = vld [vmem:[%s7 + $0xa8] sm:$0xff]
        %v2842 = vld [vmem:[%s7 + $0xb0] sm:$0xff]
        %v2843 = vld [vmem:[%s7 + $0xb8] sm:$0xff]
        %v2844 = vld [vmem:[%s7 + $0xc0] sm:$0xff]
        %v2845 = vld [vmem:[%s7 + $0xc8] sm:$0xff]
        %v2846 = vld [vmem:[%s7 + $0xd0] sm:$0xff]
        %v2847 = vld [vmem:[%s7 + $0xd8] sm:$0xff]
        %v2848 = vld [vmem:[%s7 + $0xe0] sm:$0xff]
        %v2849 = vld [vmem:[%s7 + $0xe8] sm:$0xff]
        %v2850 = vld [vmem:[%s7 + $0xf0] sm:$0xff]
        %v2851 = vld [vmem:[%s7 + $0xf8] sm:$0xff]
        %v2852 = vld [vmem:[%s8] sm:$0x3]
        %v2854 = vlaneseq
        %v2855 = vshrl.u32 %v2854, 7
        %v2856 = vsub.s32 0, %v2855
        %v2857 = vrot.slane %v2852, %v2856
        %v2858 = vlaneseq
        %v2859 = vshrl.u32 %v2858, 7
        %v2860 = vsub.s32 1, %v2859
        %v2861 = vrot.slane %v2852, %v2860
        %v2896 = vunpack.c.l.b16 %v2820
        %v2897 = vunpack.c.h.b16 %v2820
        %v2898 = vunpack.c.l.b16 %v2821
        %v2899 = vunpack.c.h.b16 %v2821
        %v2900 = vunpack.c.l.b16 %v2822
        %v2901 = vunpack.c.h.b16 %v2822
        %v2902 = vunpack.c.l.b16 %v2823
        %v2903 = vunpack.c.h.b16 %v2823
        %v2904 = vunpack.c.l.b16 %v2824
        %v2905 = vunpack.c.h.b16 %v2824
        %v2906 = vunpack.c.l.b16 %v2825
        %v2907 = vunpack.c.h.b16 %v2825
        %v2908 = vunpack.c.l.b16 %v2826
        %v2909 = vunpack.c.h.b16 %v2826
        %v2910 = vunpack.c.l.b16 %v2827
        %v2911 = vunpack.c.h.b16 %v2827
        %v2912 = vunpack.c.l.b16 %v2828
        %v2913 = vunpack.c.h.b16 %v2828
        %v2914 = vunpack.c.l.b16 %v2829
        %v2915 = vunpack.c.h.b16 %v2829
        %v2916 = vunpack.c.l.b16 %v2830
        %v2917 = vunpack.c.h.b16 %v2830
        %v2918 = vunpack.c.l.b16 %v2831
        %v2919 = vunpack.c.h.b16 %v2831
        %v2920 = vunpack.c.l.b16 %v2832
        %v2921 = vunpack.c.h.b16 %v2832
        %v2922 = vunpack.c.l.b16 %v2833
        %v2923 = vunpack.c.h.b16 %v2833
        %v2924 = vunpack.c.l.b16 %v2834
        %v2925 = vunpack.c.h.b16 %v2834
        %v2926 = vunpack.c.l.b16 %v2835
        %v2927 = vunpack.c.h.b16 %v2835
        %v2928 = vunpack.c.l.b16 %v2836
        %v2929 = vunpack.c.h.b16 %v2836
        %v2930 = vunpack.c.l.b16 %v2837
        %v2931 = vunpack.c.h.b16 %v2837
        %v2932 = vunpack.c.l.b16 %v2838
        %v2933 = vunpack.c.h.b16 %v2838
        %v2934 = vunpack.c.l.b16 %v2839
        %v2935 = vunpack.c.h.b16 %v2839
        %v2936 = vunpack.c.l.b16 %v2840
        %v2937 = vunpack.c.h.b16 %v2840
        %v2938 = vunpack.c.l.b16 %v2841
        %v2939 = vunpack.c.h.b16 %v2841
        %v2940 = vunpack.c.l.b16 %v2842
        %v2941 = vunpack.c.h.b16 %v2842
        %v2942 = vunpack.c.l.b16 %v2843
        %v2943 = vunpack.c.h.b16 %v2843
        %v2944 = vunpack.c.l.b16 %v2844
        %v2945 = vunpack.c.h.b16 %v2844
        %v2946 = vunpack.c.l.b16 %v2845
        %v2947 = vunpack.c.h.b16 %v2845
        %v2948 = vunpack.c.l.b16 %v2846
        %v2949 = vunpack.c.h.b16 %v2846
        %v2950 = vunpack.c.l.b16 %v2847
        %v2951 = vunpack.c.h.b16 %v2847
        %v2952 = vunpack.c.l.b16 %v2848
        %v2953 = vunpack.c.h.b16 %v2848
        %v2954 = vunpack.c.l.b16 %v2849
        %v2955 = vunpack.c.h.b16 %v2849
        %v2956 = vunpack.c.l.b16 %v2850
        %v2957 = vunpack.c.h.b16 %v2850
        %v2958 = vunpack.c.l.b16 %v2851
        %v2959 = vunpack.c.h.b16 %v2851
        %v2960 = vpack.c.b16 %v2898, %v2896
        %v2961 = vpack.c.b16 %v2899, %v2897
        %v2962 = vpack.c.b16 %v2902, %v2900
        %v2963 = vpack.c.b16 %v2903, %v2901
        %v2964 = vpack.c.b16 %v2906, %v2904
        %v2965 = vpack.c.b16 %v2907, %v2905
        %v2966 = vpack.c.b16 %v2910, %v2908
        %v2967 = vpack.c.b16 %v2911, %v2909
        %v2968 = vpack.c.b16 %v2914, %v2912
        %v2969 = vpack.c.b16 %v2915, %v2913
        %v2970 = vpack.c.b16 %v2918, %v2916
        %v2971 = vpack.c.b16 %v2919, %v2917
        %v2972 = vpack.c.b16 %v2922, %v2920
        %v2973 = vpack.c.b16 %v2923, %v2921
        %v2974 = vpack.c.b16 %v2926, %v2924
        %v2975 = vpack.c.b16 %v2927, %v2925
        %v2976 = vpack.c.b16 %v2930, %v2928
        %v2977 = vpack.c.b16 %v2931, %v2929
        %v2978 = vpack.c.b16 %v2934, %v2932
        %v2979 = vpack.c.b16 %v2935, %v2933
        %v2980 = vpack.c.b16 %v2938, %v2936
        %v2981 = vpack.c.b16 %v2939, %v2937
        %v2982 = vpack.c.b16 %v2942, %v2940
        %v2983 = vpack.c.b16 %v2943, %v2941
        %v2984 = vpack.c.b16 %v2946, %v2944
        %v2985 = vpack.c.b16 %v2947, %v2945
        %v2986 = vpack.c.b16 %v2950, %v2948
        %v2987 = vpack.c.b16 %v2951, %v2949
        %v2988 = vpack.c.b16 %v2954, %v2952
        %v2989 = vpack.c.b16 %v2955, %v2953
        %v2990 = vpack.c.b16 %v2958, %v2956
        %v2991 = vpack.c.b16 %v2959, %v2957
        %3024 = vmatprep.subr.bf16.mxu0 %v2961
        %3025 = vmatpush1.bf16.msra.mxu0 %v2960
        %3026 = vmatprep.subr.bf16.mxu0 %v2963
        %3027 = vmatpush1.bf16.msra.mxu0 %v2962
        %3028 = vmatprep.subr.bf16.mxu0 %v2965
        %3029 = vmatpush1.bf16.msra.mxu0 %v2964
        %3030 = vmatprep.subr.bf16.mxu0 %v2967
        %3031 = vmatpush1.bf16.msra.mxu0 %v2966
        %3032 = vmatprep.subr.bf16.mxu0 %v2969
        %3033 = vmatpush1.bf16.msra.mxu0 %v2968
        %3034 = vmatprep.subr.bf16.mxu0 %v2971
        %3035 = vmatpush1.bf16.msra.mxu0 %v2970
        %3036 = vmatprep.subr.bf16.mxu0 %v2973
        %3037 = vmatpush1.bf16.msra.mxu0 %v2972
        %3038 = vmatprep.subr.bf16.mxu0 %v2975
        %3039 = vmatpush1.bf16.msra.mxu0 %v2974
        %3040 = vmatprep.subr.bf16.mxu0 %v2977
        %3041 = vmatpush1.bf16.msra.mxu0 %v2976
        %3042 = vmatprep.subr.bf16.mxu0 %v2979
        %3043 = vmatpush1.bf16.msra.mxu0 %v2978
        %3044 = vmatprep.subr.bf16.mxu0 %v2981
        %3045 = vmatpush1.bf16.msra.mxu0 %v2980
        %3046 = vmatprep.subr.bf16.mxu0 %v2983
        %3047 = vmatpush1.bf16.msra.mxu0 %v2982
        %3048 = vmatprep.subr.bf16.mxu0 %v2985
        %3049 = vmatpush1.bf16.msra.mxu0 %v2984
        %3050 = vmatprep.subr.bf16.mxu0 %v2987
        %3051 = vmatpush1.bf16.msra.mxu0 %v2986
        %3052 = vmatprep.subr.bf16.mxu0 %v2989
        %3053 = vmatpush1.bf16.msra.mxu0 %v2988
        %3054 = vmatprep.subr.bf16.mxu0 %v2991
        %3055 = vmatpush1.bf16.msra.mxu0 %v2990
        %3056 = vmatprep.mubr.bf16.mxu0 %v2757
        %3057 = vmatmul.mubr.bf16.gmra.mrb[0].mxu0 %v2756
        %v3058 = vpop.f32.mrb[0].mxu0
        %v3059 = vadd.f32 %v2857, %v3058
        %v3060 = vpop.f32.mrb[0].mxu0
        %v3061 = vadd.f32 %v2861, %v3060
        %v3062 = vpop.f32.mrb[0].mxu0
        %v3063 = vadd.f32 %v2857, %v3062
        %v3064 = vpop.f32.mrb[0].mxu0
        %v3065 = vadd.f32 %v2861, %v3064
        %3066 = vmatprep.mubr.bf16.mxu0 %v2759
        %3067 = vmatmul.mubr.bf16.gmra.mrb[0].mxu0 %v2758
        %v3068 = vpop.f32.mrb[0].mxu0
        %v3069 = vadd.f32 %v2857, %v3068
        %v3070 = vpop.f32.mrb[0].mxu0
        %v3071 = vadd.f32 %v2861, %v3070
        %v3072 = vpop.f32.mrb[0].mxu0
        %v3073 = vadd.f32 %v2857, %v3072
        %v3074 = vpop.f32.mrb[0].mxu0
        %v3075 = vadd.f32 %v2861, %v3074
        %3076 = vmatprep.mubr.bf16.mxu0 %v2761
        %3077 = vmatmul.mubr.bf16.gmra.mrb[0].mxu0 %v2760
        %v3078 = vpop.f32.mrb[0].mxu0
        %v3079 = vadd.f32 %v2857, %v3078
        %v3080 = vpop.f32.mrb[0].mxu0
        %v3081 = vadd.f32 %v2861, %v3080
        %v3082 = vpop.f32.mrb[0].mxu0
        %v3083 = vadd.f32 %v2857, %v3082
        %v3084 = vpop.f32.mrb[0].mxu0
        %v3085 = vadd.f32 %v2861, %v3084
        %3086 = vmatprep.mubr.bf16.mxu0 %v2763
        %3087 = vmatmul.mubr.bf16.gmra.mrb[0].mxu0 %v2762
        %v3088 = vpop.f32.mrb[0].mxu0
        %v3089 = vadd.f32 %v2857, %v3088
        %v3090 = vpop.f32.mrb[0].mxu0
        %v3091 = vadd.f32 %v2861, %v3090
        %v3092 = vpop.f32.mrb[0].mxu0
        %v3093 = vadd.f32 %v2857, %v3092
        %v3094 = vpop.f32.mrb[0].mxu0
        %v3095 = vadd.f32 %v2861, %v3094
        %3096 = vmatprep.mubr.bf16.mxu0 %v2765
        %3097 = vmatmul.mubr.bf16.gmra.mrb[0].mxu0 %v2764
        %v3098 = vpop.f32.mrb[0].mxu0
        %v3099 = vadd.f32 %v2857, %v3098
        %v3100 = vpop.f32.mrb[0].mxu0
        %v3101 = vadd.f32 %v2861, %v3100
        %v3102 = vpop.f32.mrb[0].mxu0
        %v3103 = vadd.f32 %v2857, %v3102
        %v3104 = vpop.f32.mrb[0].mxu0
        %v3105 = vadd.f32 %v2861, %v3104
        %3106 = vmatprep.mubr.bf16.mxu0 %v2767
        %3107 = vmatmul.mubr.bf16.gmra.mrb[0].mxu0 %v2766
        %v3108 = vpop.f32.mrb[0].mxu0
        %v3109 = vadd.f32 %v2857, %v3108
        %v3110 = vpop.f32.mrb[0].mxu0
        %v3111 = vadd.f32 %v2861, %v3110
        %v3112 = vpop.f32.mrb[0].mxu0
        %v3113 = vadd.f32 %v2857, %v3112
        %v3114 = vpop.f32.mrb[0].mxu0
        %v3115 = vadd.f32 %v2861, %v3114
        %3116 = vmatprep.mubr.bf16.mxu0 %v2769
        %3117 = vmatmul.mubr.bf16.gmra.mrb[0].mxu0 %v2768
        %v3118 = vpop.f32.mrb[0].mxu0
        %v3119 = vadd.f32 %v2857, %v3118
        %v3120 = vpop.f32.mrb[0].mxu0
        %v3121 = vadd.f32 %v2861, %v3120
        %v3122 = vpop.f32.mrb[0].mxu0
        %v3123 = vadd.f32 %v2857, %v3122
        %v3124 = vpop.f32.mrb[0].mxu0
        %v3125 = vadd.f32 %v2861, %v3124
        %3126 = vmatprep.mubr.bf16.mxu0 %v2771
        %3127 = vmatmul.mubr.bf16.gmra.mrb[0].mxu0 %v2770
        %v3128 = vpop.f32.mrb[0].mxu0
        %v3129 = vadd.f32 %v2857, %v3128
        %v3130 = vpop.f32.mrb[0].mxu0
        %v3131 = vadd.f32 %v2861, %v3130
        %v3132 = vpop.f32.mrb[0].mxu0
        %v3133 = vadd.f32 %v2857, %v3132
        %v3134 = vpop.f32.mrb[0].mxu0
        %v3135 = vadd.f32 %v2861, %v3134
        %3136 = vmatprep.mubr.bf16.mxu0 %v2773
        %3137 = vmatmul.mubr.bf16.gmra.mrb[0].mxu0 %v2772
        %v3138 = vpop.f32.mrb[0].mxu0
        %v3139 = vadd.f32 %v2857, %v3138
        %v3140 = vpop.f32.mrb[0].mxu0
        %v3141 = vadd.f32 %v2861, %v3140
        %v3142 = vpop.f32.mrb[0].mxu0
        %v3143 = vadd.f32 %v2857, %v3142
        %v3144 = vpop.f32.mrb[0].mxu0
        %v3145 = vadd.f32 %v2861, %v3144
        %3146 = vmatprep.mubr.bf16.mxu0 %v2775
        %3147 = vmatmul.mubr.bf16.gmra.mrb[0].mxu0 %v2774
        %v3148 = vpop.f32.mrb[0].mxu0
        %v3149 = vadd.f32 %v2857, %v3148
        %v3150 = vpop.f32.mrb[0].mxu0
        %v3151 = vadd.f32 %v2861, %v3150
        %v3152 = vpop.f32.mrb[0].mxu0
        %v3153 = vadd.f32 %v2857, %v3152
        %v3154 = vpop.f32.mrb[0].mxu0
        %v3155 = vadd.f32 %v2861, %v3154
        %3156 = vmatprep.mubr.bf16.mxu0 %v2777
        %3157 = vmatmul.mubr.bf16.gmra.mrb[0].mxu0 %v2776
        %v3158 = vpop.f32.mrb[0].mxu0
        %v3159 = vadd.f32 %v2857, %v3158
        %v3160 = vpop.f32.mrb[0].mxu0
        %v3161 = vadd.f32 %v2861, %v3160
        %v3162 = vpop.f32.mrb[0].mxu0
        %v3163 = vadd.f32 %v2857, %v3162
        %v3164 = vpop.f32.mrb[0].mxu0
        %v3165 = vadd.f32 %v2861, %v3164
        %3166 = vmatprep.mubr.bf16.mxu0 %v2779
        %3167 = vmatmul.mubr.bf16.gmra.mrb[0].mxu0 %v2778
        %v3168 = vpop.f32.mrb[0].mxu0
        %v3169 = vadd.f32 %v2857, %v3168
        %v3170 = vpop.f32.mrb[0].mxu0
        %v3171 = vadd.f32 %v2861, %v3170
        %v3172 = vpop.f32.mrb[0].mxu0
        %v3173 = vadd.f32 %v2857, %v3172
        %v3174 = vpop.f32.mrb[0].mxu0
        %v3175 = vadd.f32 %v2861, %v3174
        %3176 = vmatprep.mubr.bf16.mxu0 %v2781
        %3177 = vmatmul.mubr.bf16.gmra.mrb[0].mxu0 %v2780
        %v3178 = vpop.f32.mrb[0].mxu0
        %v3179 = vadd.f32 %v2857, %v3178
        %v3180 = vpop.f32.mrb[0].mxu0
        %v3181 = vadd.f32 %v2861, %v3180
        %v3182 = vpop.f32.mrb[0].mxu0
        %v3183 = vadd.f32 %v2857, %v3182
        %v3184 = vpop.f32.mrb[0].mxu0
        %v3185 = vadd.f32 %v2861, %v3184
        %3186 = vmatprep.mubr.bf16.mxu0 %v2783
        %3187 = vmatmul.mubr.bf16.gmra.mrb[0].mxu0 %v2782
        %v3188 = vpop.f32.mrb[0].mxu0
        %v3189 = vadd.f32 %v2857, %v3188
        %v3190 = vpop.f32.mrb[0].mxu0
        %v3191 = vadd.f32 %v2861, %v3190
        %v3192 = vpop.f32.mrb[0].mxu0
        %v3193 = vadd.f32 %v2857, %v3192
        %v3194 = vpop.f32.mrb[0].mxu0
        %v3195 = vadd.f32 %v2861, %v3194
        %3196 = vmatprep.mubr.bf16.mxu0 %v2785
        %3197 = vmatmul.mubr.bf16.gmra.mrb[0].mxu0 %v2784
        %v3198 = vpop.f32.mrb[0].mxu0
        %v3199 = vadd.f32 %v2857, %v3198
        %v3200 = vpop.f32.mrb[0].mxu0
        %v3201 = vadd.f32 %v2861, %v3200
        %v3202 = vpop.f32.mrb[0].mxu0
        %v3203 = vadd.f32 %v2857, %v3202
        %v3204 = vpop.f32.mrb[0].mxu0
        %v3205 = vadd.f32 %v2861, %v3204
        %3206 = vmatprep.mubr.bf16.mxu0 %v2787
        %3207 = vmatmul.mubr.bf16.gmra.mrb[0].mxu0 %v2786
        %v3208 = vpop.f32.mrb[0].mxu0
        %v3209 = vadd.f32 %v2857, %v3208
        %v3210 = vpop.f32.mrb[0].mxu0
        %v3211 = vadd.f32 %v2861, %v3210
        %v3212 = vpop.f32.mrb[0].mxu0
        %v3213 = vadd.f32 %v2857, %v3212
        %v3214 = vpop.f32.mrb[0].mxu0
        %v3215 = vadd.f32 %v2861, %v3214
        %3216 = vmatprep.mubr.bf16.mxu0 %v2789
        %3217 = vmatmul.mubr.bf16.gmra.mrb[0].mxu0 %v2788
        %v3218 = vpop.f32.mrb[0].mxu0
        %v3219 = vadd.f32 %v2857, %v3218
        %v3220 = vpop.f32.mrb[0].mxu0
        %v3221 = vadd.f32 %v2861, %v3220
        %v3222 = vpop.f32.mrb[0].mxu0
        %v3223 = vadd.f32 %v2857, %v3222
        %v3224 = vpop.f32.mrb[0].mxu0
        %v3225 = vadd.f32 %v2861, %v3224
        %3226 = vmatprep.mubr.bf16.mxu0 %v2791
        %3227 = vmatmul.mubr.bf16.gmra.mrb[0].mxu0 %v2790
        %v3228 = vpop.f32.mrb[0].mxu0
        %v3229 = vadd.f32 %v2857, %v3228
        %v3230 = vpop.f32.mrb[0].mxu0
        %v3231 = vadd.f32 %v2861, %v3230
        %v3232 = vpop.f32.mrb[0].mxu0
        %v3233 = vadd.f32 %v2857, %v3232
        %v3234 = vpop.f32.mrb[0].mxu0
        %v3235 = vadd.f32 %v2861, %v3234
        %3236 = vmatprep.mubr.bf16.mxu0 %v2793
        %3237 = vmatmul.mubr.bf16.gmra.mrb[0].mxu0 %v2792
        %v3238 = vpop.f32.mrb[0].mxu0
        %v3239 = vadd.f32 %v2857, %v3238
        %v3240 = vpop.f32.mrb[0].mxu0
        %v3241 = vadd.f32 %v2861, %v3240
        %v3242 = vpop.f32.mrb[0].mxu0
        %v3243 = vadd.f32 %v2857, %v3242
        %v3244 = vpop.f32.mrb[0].mxu0
        %v3245 = vadd.f32 %v2861, %v3244
        %3246 = vmatprep.mubr.bf16.mxu0 %v2795
        %3247 = vmatmul.mubr.bf16.gmra.mrb[0].mxu0 %v2794
        %v3248 = vpop.f32.mrb[0].mxu0
        %v3249 = vadd.f32 %v2857, %v3248
        %v3250 = vpop.f32.mrb[0].mxu0
        %v3251 = vadd.f32 %v2861, %v3250
        %v3252 = vpop.f32.mrb[0].mxu0
        %v3253 = vadd.f32 %v2857, %v3252
        %v3254 = vpop.f32.mrb[0].mxu0
        %v3255 = vadd.f32 %v2861, %v3254
        %3256 = vmatprep.mubr.bf16.mxu0 %v2797
        %3257 = vmatmul.mubr.bf16.gmra.mrb[0].mxu0 %v2796
        %v3258 = vpop.f32.mrb[0].mxu0
        %v3259 = vadd.f32 %v2857, %v3258
        %v3260 = vpop.f32.mrb[0].mxu0
        %v3261 = vadd.f32 %v2861, %v3260
        %v3262 = vpop.f32.mrb[0].mxu0
        %v3263 = vadd.f32 %v2857, %v3262
        %v3264 = vpop.f32.mrb[0].mxu0
        %v3265 = vadd.f32 %v2861, %v3264
        %3266 = vmatprep.mubr.bf16.mxu0 %v2799
        %3267 = vmatmul.mubr.bf16.gmra.mrb[0].mxu0 %v2798
        %v3268 = vpop.f32.mrb[0].mxu0
        %v3269 = vadd.f32 %v2857, %v3268
        %v3270 = vpop.f32.mrb[0].mxu0
        %v3271 = vadd.f32 %v2861, %v3270
        %v3272 = vpop.f32.mrb[0].mxu0
        %v3273 = vadd.f32 %v2857, %v3272
        %v3274 = vpop.f32.mrb[0].mxu0
        %v3275 = vadd.f32 %v2861, %v3274
        %3276 = vmatprep.mubr.bf16.mxu0 %v2801
        %3277 = vmatmul.mubr.bf16.gmra.mrb[0].mxu0 %v2800
        %v3278 = vpop.f32.mrb[0].mxu0
        %v3279 = vadd.f32 %v2857, %v3278
        %v3280 = vpop.f32.mrb[0].mxu0
        %v3281 = vadd.f32 %v2861, %v3280
        %v3282 = vpop.f32.mrb[0].mxu0
        %v3283 = vadd.f32 %v2857, %v3282
        %v3284 = vpop.f32.mrb[0].mxu0
        %v3285 = vadd.f32 %v2861, %v3284
        %3286 = vmatprep.mubr.bf16.mxu0 %v2803
        %3287 = vmatmul.mubr.bf16.gmra.mrb[0].mxu0 %v2802
        %v3288 = vpop.f32.mrb[0].mxu0
        %v3289 = vadd.f32 %v2857, %v3288
        %v3290 = vpop.f32.mrb[0].mxu0
        %v3291 = vadd.f32 %v2861, %v3290
        %v3292 = vpop.f32.mrb[0].mxu0
        %v3293 = vadd.f32 %v2857, %v3292
        %v3294 = vpop.f32.mrb[0].mxu0
        %v3295 = vadd.f32 %v2861, %v3294
        %3296 = vmatprep.mubr.bf16.mxu0 %v2805
        %3297 = vmatmul.mubr.bf16.gmra.mrb[0].mxu0 %v2804
        %v3298 = vpop.f32.mrb[0].mxu0
        %v3299 = vadd.f32 %v2857, %v3298
        %v3300 = vpop.f32.mrb[0].mxu0
        %v3301 = vadd.f32 %v2861, %v3300
        %v3302 = vpop.f32.mrb[0].mxu0
        %v3303 = vadd.f32 %v2857, %v3302
        %v3304 = vpop.f32.mrb[0].mxu0
        %v3305 = vadd.f32 %v2861, %v3304
        %3306 = vmatprep.mubr.bf16.mxu0 %v2807
        %3307 = vmatmul.mubr.bf16.gmra.mrb[0].mxu0 %v2806
        %v3308 = vpop.f32.mrb[0].mxu0
        %v3309 = vadd.f32 %v2857, %v3308
        %v3310 = vpop.f32.mrb[0].mxu0
        %v3311 = vadd.f32 %v2861, %v3310
        %v3312 = vpop.f32.mrb[0].mxu0
        %v3313 = vadd.f32 %v2857, %v3312
        %v3314 = vpop.f32.mrb[0].mxu0
        %v3315 = vadd.f32 %v2861, %v3314
        %3316 = vmatprep.mubr.bf16.mxu0 %v2809
        %3317 = vmatmul.mubr.bf16.gmra.mrb[0].mxu0 %v2808
        %v3318 = vpop.f32.mrb[0].mxu0
        %v3319 = vadd.f32 %v2857, %v3318
        %v3320 = vpop.f32.mrb[0].mxu0
        %v3321 = vadd.f32 %v2861, %v3320
        %v3322 = vpop.f32.mrb[0].mxu0
        %v3323 = vadd.f32 %v2857, %v3322
        %v3324 = vpop.f32.mrb[0].mxu0
        %v3325 = vadd.f32 %v2861, %v3324
        %3326 = vmatprep.mubr.bf16.mxu0 %v2811
        %3327 = vmatmul.mubr.bf16.gmra.mrb[0].mxu0 %v2810
        %v3328 = vpop.f32.mrb[0].mxu0
        %v3329 = vadd.f32 %v2857, %v3328
        %v3330 = vpop.f32.mrb[0].mxu0
        %v3331 = vadd.f32 %v2861, %v3330
        %v3332 = vpop.f32.mrb[0].mxu0
        %v3333 = vadd.f32 %v2857, %v3332
        %v3334 = vpop.f32.mrb[0].mxu0
        %v3335 = vadd.f32 %v2861, %v3334
        %3336 = vmatprep.mubr.bf16.mxu0 %v2813
        %3337 = vmatmul.mubr.bf16.gmra.mrb[0].mxu0 %v2812
        %v3338 = vpop.f32.mrb[0].mxu0
        %v3339 = vadd.f32 %v2857, %v3338
        %v3340 = vpop.f32.mrb[0].mxu0
        %v3341 = vadd.f32 %v2861, %v3340
        %v3342 = vpop.f32.mrb[0].mxu0
        %v3343 = vadd.f32 %v2857, %v3342
        %v3344 = vpop.f32.mrb[0].mxu0
        %v3345 = vadd.f32 %v2861, %v3344
        %3346 = vmatprep.mubr.bf16.mxu0 %v2815
        %3347 = vmatmul.mubr.bf16.gmra.mrb[0].mxu0 %v2814
        %v3348 = vpop.f32.mrb[0].mxu0
        %v3349 = vadd.f32 %v2857, %v3348
        %v3350 = vpop.f32.mrb[0].mxu0
        %v3351 = vadd.f32 %v2861, %v3350
        %v3352 = vpop.f32.mrb[0].mxu0
        %v3353 = vadd.f32 %v2857, %v3352
        %v3354 = vpop.f32.mrb[0].mxu0
        %v3355 = vadd.f32 %v2861, %v3354
        %3356 = vmatprep.mubr.bf16.mxu0 %v2817
        %3357 = vmatmul.mubr.bf16.gmra.mrb[0].mxu0 %v2816
        %v3358 = vpop.f32.mrb[0].mxu0
        %v3359 = vadd.f32 %v2857, %v3358
        %v3360 = vpop.f32.mrb[0].mxu0
        %v3361 = vadd.f32 %v2861, %v3360
        %v3362 = vpop.f32.mrb[0].mxu0
        %v3363 = vadd.f32 %v2857, %v3362
        %v3364 = vpop.f32.mrb[0].mxu0
        %v3365 = vadd.f32 %v2861, %v3364
        %3366 = vmatprep.mubr.bf16.mxu0 %v2819
        %3367 = vmatmul.mubr.bf16.gmra.mrb[0].mxu0 %v2818
        %v3368 = vpop.f32.mrb[0].mxu0
        %v3369 = vadd.f32 %v2857, %v3368
        %v3370 = vpop.f32.mrb[0].mxu0
        %v3371 = vadd.f32 %v2861, %v3370
        %v3372 = vpop.f32.mrb[0].mxu0
        %v3373 = vadd.f32 %v2857, %v3372
        %v3374 = vpop.f32.mrb[0].mxu0
        %v3375 = vadd.f32 %v2861, %v3374
        %3376 = vdwg.mxu0
        %vm3377 = vcmp.ge.f32.partialorder %v3059, 0.0
        %vm3378 = vcmp.ge.f32.partialorder %v3061, 0.0
        %vm3379 = vcmp.ge.f32.partialorder %v3063, 0.0
        %vm3380 = vcmp.ge.f32.partialorder %v3065, 0.0
        %vm3381 = vcmp.ge.f32.partialorder %v3069, 0.0
        %vm3382 = vcmp.ge.f32.partialorder %v3071, 0.0
        %vm3383 = vcmp.ge.f32.partialorder %v3073, 0.0
        %vm3384 = vcmp.ge.f32.partialorder %v3075, 0.0
        %vm3385 = vcmp.ge.f32.partialorder %v3079, 0.0
        %vm3386 = vcmp.ge.f32.partialorder %v3081, 0.0
        %vm3387 = vcmp.ge.f32.partialorder %v3083, 0.0
        %vm3388 = vcmp.ge.f32.partialorder %v3085, 0.0
        %vm3389 = vcmp.ge.f32.partialorder %v3089, 0.0
        %vm3390 = vcmp.ge.f32.partialorder %v3091, 0.0
        %vm3391 = vcmp.ge.f32.partialorder %v3093, 0.0
        %vm3392 = vcmp.ge.f32.partialorder %v3095, 0.0
        %vm3393 = vcmp.ge.f32.partialorder %v3099, 0.0
        %vm3394 = vcmp.ge.f32.partialorder %v3101, 0.0
        %vm3395 = vcmp.ge.f32.partialorder %v3103, 0.0
        %vm3396 = vcmp.ge.f32.partialorder %v3105, 0.0
        %vm3397 = vcmp.ge.f32.partialorder %v3109, 0.0
        %vm3398 = vcmp.ge.f32.partialorder %v3111, 0.0
        %vm3399 = vcmp.ge.f32.partialorder %v3113, 0.0
        %vm3400 = vcmp.ge.f32.partialorder %v3115, 0.0
        %vm3401 = vcmp.ge.f32.partialorder %v3119, 0.0
        %vm3402 = vcmp.ge.f32.partialorder %v3121, 0.0
        %vm3403 = vcmp.ge.f32.partialorder %v3123, 0.0
        %vm3404 = vcmp.ge.f32.partialorder %v3125, 0.0
        %vm3405 = vcmp.ge.f32.partialorder %v3129, 0.0
        %vm3406 = vcmp.ge.f32.partialorder %v3131, 0.0
        %vm3407 = vcmp.ge.f32.partialorder %v3133, 0.0
        %vm3408 = vcmp.ge.f32.partialorder %v3135, 0.0
        %vm3409 = vcmp.ge.f32.partialorder %v3139, 0.0
        %vm3410 = vcmp.ge.f32.partialorder %v3141, 0.0
        %vm3411 = vcmp.ge.f32.partialorder %v3143, 0.0
        %vm3412 = vcmp.ge.f32.partialorder %v3145, 0.0
        %vm3413 = vcmp.ge.f32.partialorder %v3149, 0.0
        %vm3414 = vcmp.ge.f32.partialorder %v3151, 0.0
        %vm3415 = vcmp.ge.f32.partialorder %v3153, 0.0
        %vm3416 = vcmp.ge.f32.partialorder %v3155, 0.0
        %vm3417 = vcmp.ge.f32.partialorder %v3159, 0.0
        %vm3418 = vcmp.ge.f32.partialorder %v3161, 0.0
        %vm3419 = vcmp.ge.f32.partialorder %v3163, 0.0
        %vm3420 = vcmp.ge.f32.partialorder %v3165, 0.0
        %vm3421 = vcmp.ge.f32.partialorder %v3169, 0.0
        %vm3422 = vcmp.ge.f32.partialorder %v3171, 0.0
        %vm3423 = vcmp.ge.f32.partialorder %v3173, 0.0
        %vm3424 = vcmp.ge.f32.partialorder %v3175, 0.0
        %vm3425 = vcmp.ge.f32.partialorder %v3179, 0.0
        %vm3426 = vcmp.ge.f32.partialorder %v3181, 0.0
        %vm3427 = vcmp.ge.f32.partialorder %v3183, 0.0
        %vm3428 = vcmp.ge.f32.partialorder %v3185, 0.0
        %vm3429 = vcmp.ge.f32.partialorder %v3189, 0.0
        %vm3430 = vcmp.ge.f32.partialorder %v3191, 0.0
        %vm3431 = vcmp.ge.f32.partialorder %v3193, 0.0
        %vm3432 = vcmp.ge.f32.partialorder %v3195, 0.0
        %vm3433 = vcmp.ge.f32.partialorder %v3199, 0.0
        %vm3434 = vcmp.ge.f32.partialorder %v3201, 0.0
        %vm3435 = vcmp.ge.f32.partialorder %v3203, 0.0
        %vm3436 = vcmp.ge.f32.partialorder %v3205, 0.0
        %vm3437 = vcmp.ge.f32.partialorder %v3209, 0.0
        %vm3438 = vcmp.ge.f32.partialorder %v3211, 0.0
        %vm3439 = vcmp.ge.f32.partialorder %v3213, 0.0
        %vm3440 = vcmp.ge.f32.partialorder %v3215, 0.0
        %vm3441 = vcmp.ge.f32.partialorder %v3219, 0.0
        %vm3442 = vcmp.ge.f32.partialorder %v3221, 0.0
        %vm3443 = vcmp.ge.f32.partialorder %v3223, 0.0
        %vm3444 = vcmp.ge.f32.partialorder %v3225, 0.0
        %vm3445 = vcmp.ge.f32.partialorder %v3229, 0.0
        %vm3446 = vcmp.ge.f32.partialorder %v3231, 0.0
        %vm3447 = vcmp.ge.f32.partialorder %v3233, 0.0
        %vm3448 = vcmp.ge.f32.partialorder %v3235, 0.0
        %vm3449 = vcmp.ge.f32.partialorder %v3239, 0.0
        %vm3450 = vcmp.ge.f32.partialorder %v3241, 0.0
        %vm3451 = vcmp.ge.f32.partialorder %v3243, 0.0
        %vm3452 = vcmp.ge.f32.partialorder %v3245, 0.0
        %vm3453 = vcmp.ge.f32.partialorder %v3249, 0.0
        %vm3454 = vcmp.ge.f32.partialorder %v3251, 0.0
        %vm3455 = vcmp.ge.f32.partialorder %v3253, 0.0
        %vm3456 = vcmp.ge.f32.partialorder %v3255, 0.0
        %vm3457 = vcmp.ge.f32.partialorder %v3259, 0.0
        %vm3458 = vcmp.ge.f32.partialorder %v3261, 0.0
        %vm3459 = vcmp.ge.f32.partialorder %v3263, 0.0
        %vm3460 = vcmp.ge.f32.partialorder %v3265, 0.0
        %vm3461 = vcmp.ge.f32.partialorder %v3269, 0.0
        %vm3462 = vcmp.ge.f32.partialorder %v3271, 0.0
        %vm3463 = vcmp.ge.f32.partialorder %v3273, 0.0
        %vm3464 = vcmp.ge.f32.partialorder %v3275, 0.0
        %vm3465 = vcmp.ge.f32.partialorder %v3279, 0.0
        %vm3466 = vcmp.ge.f32.partialorder %v3281, 0.0
        %vm3467 = vcmp.ge.f32.partialorder %v3283, 0.0
        %vm3468 = vcmp.ge.f32.partialorder %v3285, 0.0
        %vm3469 = vcmp.ge.f32.partialorder %v3289, 0.0
        %vm3470 = vcmp.ge.f32.partialorder %v3291, 0.0
        %vm3471 = vcmp.ge.f32.partialorder %v3293, 0.0
        %vm3472 = vcmp.ge.f32.partialorder %v3295, 0.0
        %vm3473 = vcmp.ge.f32.partialorder %v3299, 0.0
        %vm3474 = vcmp.ge.f32.partialorder %v3301, 0.0
        %vm3475 = vcmp.ge.f32.partialorder %v3303, 0.0
        %vm3476 = vcmp.ge.f32.partialorder %v3305, 0.0
        %vm3477 = vcmp.ge.f32.partialorder %v3309, 0.0
        %vm3478 = vcmp.ge.f32.partialorder %v3311, 0.0
        %vm3479 = vcmp.ge.f32.partialorder %v3313, 0.0
        %vm3480 = vcmp.ge.f32.partialorder %v3315, 0.0
        %vm3481 = vcmp.ge.f32.partialorder %v3319, 0.0
        %vm3482 = vcmp.ge.f32.partialorder %v3321, 0.0
        %vm3483 = vcmp.ge.f32.partialorder %v3323, 0.0
        %vm3484 = vcmp.ge.f32.partialorder %v3325, 0.0
        %vm3485 = vcmp.ge.f32.partialorder %v3329, 0.0
        %vm3486 = vcmp.ge.f32.partialorder %v3331, 0.0
        %vm3487 = vcmp.ge.f32.partialorder %v3333, 0.0
        %vm3488 = vcmp.ge.f32.partialorder %v3335, 0.0
        %vm3489 = vcmp.ge.f32.partialorder %v3339, 0.0
        %vm3490 = vcmp.ge.f32.partialorder %v3341, 0.0
        %vm3491 = vcmp.ge.f32.partialorder %v3343, 0.0
        %vm3492 = vcmp.ge.f32.partialorder %v3345, 0.0
        %vm3493 = vcmp.ge.f32.partialorder %v3349, 0.0
        %vm3494 = vcmp.ge.f32.partialorder %v3351, 0.0
        %vm3495 = vcmp.ge.f32.partialorder %v3353, 0.0
        %vm3496 = vcmp.ge.f32.partialorder %v3355, 0.0
        %vm3497 = vcmp.ge.f32.partialorder %v3359, 0.0
        %vm3498 = vcmp.ge.f32.partialorder %v3361, 0.0
        %vm3499 = vcmp.ge.f32.partialorder %v3363, 0.0
        %vm3500 = vcmp.ge.f32.partialorder %v3365, 0.0
        %vm3501 = vcmp.ge.f32.partialorder %v3369, 0.0
        %vm3502 = vcmp.ge.f32.partialorder %v3371, 0.0
        %vm3503 = vcmp.ge.f32.partialorder %v3373, 0.0
        %vm3504 = vcmp.ge.f32.partialorder %v3375, 0.0
        %v3505 = vmul.f32 %v3059, 0.2
        %v3506 = vmul.f32 %v3061, 0.2
        %v3507 = vmul.f32 %v3063, 0.2
        %v3508 = vmul.f32 %v3065, 0.2
        %v3509 = vmul.f32 %v3069, 0.2
        %v3510 = vmul.f32 %v3071, 0.2
        %v3511 = vmul.f32 %v3073, 0.2
        %v3512 = vmul.f32 %v3075, 0.2
        %v3513 = vmul.f32 %v3079, 0.2
        %v3514 = vmul.f32 %v3081, 0.2
        %v3515 = vmul.f32 %v3083, 0.2
        %v3516 = vmul.f32 %v3085, 0.2
        %v3517 = vmul.f32 %v3089, 0.2
        %v3518 = vmul.f32 %v3091, 0.2
        %v3519 = vmul.f32 %v3093, 0.2
        %v3520 = vmul.f32 %v3095, 0.2
        %v3521 = vmul.f32 %v3099, 0.2
        %v3522 = vmul.f32 %v3101, 0.2
        %v3523 = vmul.f32 %v3103, 0.2
        %v3524 = vmul.f32 %v3105, 0.2
        %v3525 = vmul.f32 %v3109, 0.2
        %v3526 = vmul.f32 %v3111, 0.2
        %v3527 = vmul.f32 %v3113, 0.2
        %v3528 = vmul.f32 %v3115, 0.2
        %v3529 = vmul.f32 %v3119, 0.2
        %v3530 = vmul.f32 %v3121, 0.2
        %v3531 = vmul.f32 %v3123, 0.2
        %v3532 = vmul.f32 %v3125, 0.2
        %v3533 = vmul.f32 %v3129, 0.2
        %v3534 = vmul.f32 %v3131, 0.2
        %v3535 = vmul.f32 %v3133, 0.2
        %v3536 = vmul.f32 %v3135, 0.2
        %v3537 = vmul.f32 %v3139, 0.2
        %v3538 = vmul.f32 %v3141, 0.2
        %v3539 = vmul.f32 %v3143, 0.2
        %v3540 = vmul.f32 %v3145, 0.2
        %v3541 = vmul.f32 %v3149, 0.2
        %v3542 = vmul.f32 %v3151, 0.2
        %v3543 = vmul.f32 %v3153, 0.2
        %v3544 = vmul.f32 %v3155, 0.2
        %v3545 = vmul.f32 %v3159, 0.2
        %v3546 = vmul.f32 %v3161, 0.2
        %v3547 = vmul.f32 %v3163, 0.2
        %v3548 = vmul.f32 %v3165, 0.2
        %v3549 = vmul.f32 %v3169, 0.2
        %v3550 = vmul.f32 %v3171, 0.2
        %v3551 = vmul.f32 %v3173, 0.2
        %v3552 = vmul.f32 %v3175, 0.2
        %v3553 = vmul.f32 %v3179, 0.2
        %v3554 = vmul.f32 %v3181, 0.2
        %v3555 = vmul.f32 %v3183, 0.2
        %v3556 = vmul.f32 %v3185, 0.2
        %v3557 = vmul.f32 %v3189, 0.2
        %v3558 = vmul.f32 %v3191, 0.2
        %v3559 = vmul.f32 %v3193, 0.2
        %v3560 = vmul.f32 %v3195, 0.2
        %v3561 = vmul.f32 %v3199, 0.2
        %v3562 = vmul.f32 %v3201, 0.2
        %v3563 = vmul.f32 %v3203, 0.2
        %v3564 = vmul.f32 %v3205, 0.2
        %v3565 = vmul.f32 %v3209, 0.2
        %v3566 = vmul.f32 %v3211, 0.2
        %v3567 = vmul.f32 %v3213, 0.2
        %v3568 = vmul.f32 %v3215, 0.2
        %v3569 = vmul.f32 %v3219, 0.2
        %v3570 = vmul.f32 %v3221, 0.2
        %v3571 = vmul.f32 %v3223, 0.2
        %v3572 = vmul.f32 %v3225, 0.2
        %v3573 = vmul.f32 %v3229, 0.2
        %v3574 = vmul.f32 %v3231, 0.2
        %v3575 = vmul.f32 %v3233, 0.2
        %v3576 = vmul.f32 %v3235, 0.2
        %v3577 = vmul.f32 %v3239, 0.2
        %v3578 = vmul.f32 %v3241, 0.2
        %v3579 = vmul.f32 %v3243, 0.2
        %v3580 = vmul.f32 %v3245, 0.2
        %v3581 = vmul.f32 %v3249, 0.2
        %v3582 = vmul.f32 %v3251, 0.2
        %v3583 = vmul.f32 %v3253, 0.2
        %v3584 = vmul.f32 %v3255, 0.2
        %v3585 = vmul.f32 %v3259, 0.2
        %v3586 = vmul.f32 %v3261, 0.2
        %v3587 = vmul.f32 %v3263, 0.2
        %v3588 = vmul.f32 %v3265, 0.2
        %v3589 = vmul.f32 %v3269, 0.2
        %v3590 = vmul.f32 %v3271, 0.2
        %v3591 = vmul.f32 %v3273, 0.2
        %v3592 = vmul.f32 %v3275, 0.2
        %v3593 = vmul.f32 %v3279, 0.2
        %v3594 = vmul.f32 %v3281, 0.2
        %v3595 = vmul.f32 %v3283, 0.2
        %v3596 = vmul.f32 %v3285, 0.2
        %v3597 = vmul.f32 %v3289, 0.2
        %v3598 = vmul.f32 %v3291, 0.2
        %v3599 = vmul.f32 %v3293, 0.2
        %v3600 = vmul.f32 %v3295, 0.2
        %v3601 = vmul.f32 %v3299, 0.2
        %v3602 = vmul.f32 %v3301, 0.2
        %v3603 = vmul.f32 %v3303, 0.2
        %v3604 = vmul.f32 %v3305, 0.2
        %v3605 = vmul.f32 %v3309, 0.2
        %v3606 = vmul.f32 %v3311, 0.2
        %v3607 = vmul.f32 %v3313, 0.2
        %v3608 = vmul.f32 %v3315, 0.2
        %v3609 = vmul.f32 %v3319, 0.2
        %v3610 = vmul.f32 %v3321, 0.2
        %v3611 = vmul.f32 %v3323, 0.2
        %v3612 = vmul.f32 %v3325, 0.2
        %v3613 = vmul.f32 %v3329, 0.2
        %v3614 = vmul.f32 %v3331, 0.2
        %v3615 = vmul.f32 %v3333, 0.2
        %v3616 = vmul.f32 %v3335, 0.2
        %v3617 = vmul.f32 %v3339, 0.2
        %v3618 = vmul.f32 %v3341, 0.2
        %v3619 = vmul.f32 %v3343, 0.2
        %v3620 = vmul.f32 %v3345, 0.2
        %v3621 = vmul.f32 %v3349, 0.2
        %v3622 = vmul.f32 %v3351, 0.2
        %v3623 = vmul.f32 %v3353, 0.2
        %v3624 = vmul.f32 %v3355, 0.2
        %v3625 = vmul.f32 %v3359, 0.2
        %v3626 = vmul.f32 %v3361, 0.2
        %v3627 = vmul.f32 %v3363, 0.2
        %v3628 = vmul.f32 %v3365, 0.2
        %v3629 = vmul.f32 %v3369, 0.2
        %v3630 = vmul.f32 %v3371, 0.2
        %v3631 = vmul.f32 %v3373, 0.2
        %v3632 = vmul.f32 %v3375, 0.2
        %v3633 = vsel %vm3377, %v3059, %v3505
        %v3634 = vsel %vm3378, %v3061, %v3506
        %v3635 = vsel %vm3379, %v3063, %v3507
        %v3636 = vsel %vm3380, %v3065, %v3508
        %v3637 = vsel %vm3381, %v3069, %v3509
        %v3638 = vsel %vm3382, %v3071, %v3510
        %v3639 = vsel %vm3383, %v3073, %v3511
        %v3640 = vsel %vm3384, %v3075, %v3512
        %v3641 = vsel %vm3385, %v3079, %v3513
        %v3642 = vsel %vm3386, %v3081, %v3514
        %v3643 = vsel %vm3387, %v3083, %v3515
        %v3644 = vsel %vm3388, %v3085, %v3516
        %v3645 = vsel %vm3389, %v3089, %v3517
        %v3646 = vsel %vm3390, %v3091, %v3518
        %v3647 = vsel %vm3391, %v3093, %v3519
        %v3648 = vsel %vm3392, %v3095, %v3520
        %v3649 = vsel %vm3393, %v3099, %v3521
        %v3650 = vsel %vm3394, %v3101, %v3522
        %v3651 = vsel %vm3395, %v3103, %v3523
        %v3652 = vsel %vm3396, %v3105, %v3524
        %v3653 = vsel %vm3397, %v3109, %v3525
        %v3654 = vsel %vm3398, %v3111, %v3526
        %v3655 = vsel %vm3399, %v3113, %v3527
        %v3656 = vsel %vm3400, %v3115, %v3528
        %v3657 = vsel %vm3401, %v3119, %v3529
        %v3658 = vsel %vm3402, %v3121, %v3530
        %v3659 = vsel %vm3403, %v3123, %v3531
        %v3660 = vsel %vm3404, %v3125, %v3532
        %v3661 = vsel %vm3405, %v3129, %v3533
        %v3662 = vsel %vm3406, %v3131, %v3534
        %v3663 = vsel %vm3407, %v3133, %v3535
        %v3664 = vsel %vm3408, %v3135, %v3536
        %v3665 = vsel %vm3409, %v3139, %v3537
        %v3666 = vsel %vm3410, %v3141, %v3538
        %v3667 = vsel %vm3411, %v3143, %v3539
        %v3668 = vsel %vm3412, %v3145, %v3540
        %v3669 = vsel %vm3413, %v3149, %v3541
        %v3670 = vsel %vm3414, %v3151, %v3542
        %v3671 = vsel %vm3415, %v3153, %v3543
        %v3672 = vsel %vm3416, %v3155, %v3544
        %v3673 = vsel %vm3417, %v3159, %v3545
        %v3674 = vsel %vm3418, %v3161, %v3546
        %v3675 = vsel %vm3419, %v3163, %v3547
        %v3676 = vsel %vm3420, %v3165, %v3548
        %v3677 = vsel %vm3421, %v3169, %v3549
        %v3678 = vsel %vm3422, %v3171, %v3550
        %v3679 = vsel %vm3423, %v3173, %v3551
        %v3680 = vsel %vm3424, %v3175, %v3552
        %v3681 = vsel %vm3425, %v3179, %v3553
        %v3682 = vsel %vm3426, %v3181, %v3554
        %v3683 = vsel %vm3427, %v3183, %v3555
        %v3684 = vsel %vm3428, %v3185, %v3556
        %v3685 = vsel %vm3429, %v3189, %v3557
        %v3686 = vsel %vm3430, %v3191, %v3558
        %v3687 = vsel %vm3431, %v3193, %v3559
        %v3688 = vsel %vm3432, %v3195, %v3560
        %v3689 = vsel %vm3433, %v3199, %v3561
        %v3690 = vsel %vm3434, %v3201, %v3562
        %v3691 = vsel %vm3435, %v3203, %v3563
        %v3692 = vsel %vm3436, %v3205, %v3564
        %v3693 = vsel %vm3437, %v3209, %v3565
        %v3694 = vsel %vm3438, %v3211, %v3566
        %v3695 = vsel %vm3439, %v3213, %v3567
        %v3696 = vsel %vm3440, %v3215, %v3568
        %v3697 = vsel %vm3441, %v3219, %v3569
        %v3698 = vsel %vm3442, %v3221, %v3570
        %v3699 = vsel %vm3443, %v3223, %v3571
        %v3700 = vsel %vm3444, %v3225, %v3572
        %v3701 = vsel %vm3445, %v3229, %v3573
        %v3702 = vsel %vm3446, %v3231, %v3574
        %v3703 = vsel %vm3447, %v3233, %v3575
        %v3704 = vsel %vm3448, %v3235, %v3576
        %v3705 = vsel %vm3449, %v3239, %v3577
        %v3706 = vsel %vm3450, %v3241, %v3578
        %v3707 = vsel %vm3451, %v3243, %v3579
        %v3708 = vsel %vm3452, %v3245, %v3580
        %v3709 = vsel %vm3453, %v3249, %v3581
        %v3710 = vsel %vm3454, %v3251, %v3582
        %v3711 = vsel %vm3455, %v3253, %v3583
        %v3712 = vsel %vm3456, %v3255, %v3584
        %v3713 = vsel %vm3457, %v3259, %v3585
        %v3714 = vsel %vm3458, %v3261, %v3586
        %v3715 = vsel %vm3459, %v3263, %v3587
        %v3716 = vsel %vm3460, %v3265, %v3588
        %v3717 = vsel %vm3461, %v3269, %v3589
        %v3718 = vsel %vm3462, %v3271, %v3590
        %v3719 = vsel %vm3463, %v3273, %v3591
        %v3720 = vsel %vm3464, %v3275, %v3592
        %v3721 = vsel %vm3465, %v3279, %v3593
        %v3722 = vsel %vm3466, %v3281, %v3594
        %v3723 = vsel %vm3467, %v3283, %v3595
        %v3724 = vsel %vm3468, %v3285, %v3596
        %v3725 = vsel %vm3469, %v3289, %v3597
        %v3726 = vsel %vm3470, %v3291, %v3598
        %v3727 = vsel %vm3471, %v3293, %v3599
        %v3728 = vsel %vm3472, %v3295, %v3600
        %v3729 = vsel %vm3473, %v3299, %v3601
        %v3730 = vsel %vm3474, %v3301, %v3602
        %v3731 = vsel %vm3475, %v3303, %v3603
        %v3732 = vsel %vm3476, %v3305, %v3604
        %v3733 = vsel %vm3477, %v3309, %v3605
        %v3734 = vsel %vm3478, %v3311, %v3606
        %v3735 = vsel %vm3479, %v3313, %v3607
        %v3736 = vsel %vm3480, %v3315, %v3608
        %v3737 = vsel %vm3481, %v3319, %v3609
        %v3738 = vsel %vm3482, %v3321, %v3610
        %v3739 = vsel %vm3483, %v3323, %v3611
        %v3740 = vsel %vm3484, %v3325, %v3612
        %v3741 = vsel %vm3485, %v3329, %v3613
        %v3742 = vsel %vm3486, %v3331, %v3614
        %v3743 = vsel %vm3487, %v3333, %v3615
        %v3744 = vsel %vm3488, %v3335, %v3616
        %v3745 = vsel %vm3489, %v3339, %v3617
        %v3746 = vsel %vm3490, %v3341, %v3618
        %v3747 = vsel %vm3491, %v3343, %v3619
        %v3748 = vsel %vm3492, %v3345, %v3620
        %v3749 = vsel %vm3493, %v3349, %v3621
        %v3750 = vsel %vm3494, %v3351, %v3622
        %v3751 = vsel %vm3495, %v3353, %v3623
        %v3752 = vsel %vm3496, %v3355, %v3624
        %v3753 = vsel %vm3497, %v3359, %v3625
        %v3754 = vsel %vm3498, %v3361, %v3626
        %v3755 = vsel %vm3499, %v3363, %v3627
        %v3756 = vsel %vm3500, %v3365, %v3628
        %v3757 = vsel %vm3501, %v3369, %v3629
        %v3758 = vsel %vm3502, %v3371, %v3630
        %v3759 = vsel %vm3503, %v3373, %v3631
        %v3760 = vsel %vm3504, %v3375, %v3632
        %v3761 = vpack.c.bf16 %v3635, %v3633
        %v3762 = vpack.c.bf16 %v3636, %v3634
        %v3763 = vpack.c.bf16 %v3639, %v3637
        %v3764 = vpack.c.bf16 %v3640, %v3638
        %v3765 = vpack.c.bf16 %v3643, %v3641
        %v3766 = vpack.c.bf16 %v3644, %v3642
        %v3767 = vpack.c.bf16 %v3647, %v3645
        %v3768 = vpack.c.bf16 %v3648, %v3646
        %v3769 = vpack.c.bf16 %v3651, %v3649
        %v3770 = vpack.c.bf16 %v3652, %v3650
        %v3771 = vpack.c.bf16 %v3655, %v3653
        %v3772 = vpack.c.bf16 %v3656, %v3654
        %v3773 = vpack.c.bf16 %v3659, %v3657
        %v3774 = vpack.c.bf16 %v3660, %v3658
        %v3775 = vpack.c.bf16 %v3663, %v3661
        %v3776 = vpack.c.bf16 %v3664, %v3662
        %v3777 = vpack.c.bf16 %v3667, %v3665
        %v3778 = vpack.c.bf16 %v3668, %v3666
        %v3779 = vpack.c.bf16 %v3671, %v3669
        %v3780 = vpack.c.bf16 %v3672, %v3670
        %v3781 = vpack.c.bf16 %v3675, %v3673
        %v3782 = vpack.c.bf16 %v3676, %v3674
        %v3783 = vpack.c.bf16 %v3679, %v3677
        %v3784 = vpack.c.bf16 %v3680, %v3678
        %v3785 = vpack.c.bf16 %v3683, %v3681
        %v3786 = vpack.c.bf16 %v3684, %v3682
        %v3787 = vpack.c.bf16 %v3687, %v3685
        %v3788 = vpack.c.bf16 %v3688, %v3686
        %v3789 = vpack.c.bf16 %v3691, %v3689
        %v3790 = vpack.c.bf16 %v3692, %v3690
        %v3791 = vpack.c.bf16 %v3695, %v3693
        %v3792 = vpack.c.bf16 %v3696, %v3694
        %v3793 = vpack.c.bf16 %v3699, %v3697
        %v3794 = vpack.c.bf16 %v3700, %v3698
        %v3795 = vpack.c.bf16 %v3703, %v3701
        %v3796 = vpack.c.bf16 %v3704, %v3702
        %v3797 = vpack.c.bf16 %v3707, %v3705
        %v3798 = vpack.c.bf16 %v3708, %v3706
        %v3799 = vpack.c.bf16 %v3711, %v3709
        %v3800 = vpack.c.bf16 %v3712, %v3710
        %v3801 = vpack.c.bf16 %v3715, %v3713
        %v3802 = vpack.c.bf16 %v3716, %v3714
        %v3803 = vpack.c.bf16 %v3719, %v3717
        %v3804 = vpack.c.bf16 %v3720, %v3718
        %v3805 = vpack.c.bf16 %v3723, %v3721
        %v3806 = vpack.c.bf16 %v3724, %v3722
        %v3807 = vpack.c.bf16 %v3727, %v3725
        %v3808 = vpack.c.bf16 %v3728, %v3726
        %v3809 = vpack.c.bf16 %v3731, %v3729
        %v3810 = vpack.c.bf16 %v3732, %v3730
        %v3811 = vpack.c.bf16 %v3735, %v3733
        %v3812 = vpack.c.bf16 %v3736, %v3734
        %v3813 = vpack.c.bf16 %v3739, %v3737
        %v3814 = vpack.c.bf16 %v3740, %v3738
        %v3815 = vpack.c.bf16 %v3743, %v3741
        %v3816 = vpack.c.bf16 %v3744, %v3742
        %v3817 = vpack.c.bf16 %v3747, %v3745
        %v3818 = vpack.c.bf16 %v3748, %v3746
        %v3819 = vpack.c.bf16 %v3751, %v3749
        %v3820 = vpack.c.bf16 %v3752, %v3750
        %v3821 = vpack.c.bf16 %v3755, %v3753
        %v3822 = vpack.c.bf16 %v3756, %v3754
        %v3823 = vpack.c.bf16 %v3759, %v3757
        %v3824 = vpack.c.bf16 %v3760, %v3758
        %v3825 = vld [vmem:[%s9] sm:$0xf]
        %v3826 = vld [vmem:[%s9 + $0x4] sm:$0xf]
        %v3827 = vld [vmem:[%s9 + $0x8] sm:$0xf]
        %v3828 = vld [vmem:[%s9 + $0xc] sm:$0xf]
        %v3829 = vld [vmem:[%s9 + $0x10] sm:$0xf]
        %v3830 = vld [vmem:[%s9 + $0x14] sm:$0xf]
        %v3831 = vld [vmem:[%s9 + $0x18] sm:$0xf]
        %v3832 = vld [vmem:[%s9 + $0x1c] sm:$0xf]
        %v3833 = vld [vmem:[%s9 + $0x20] sm:$0xf]
        %v3834 = vld [vmem:[%s9 + $0x24] sm:$0xf]
        %v3835 = vld [vmem:[%s9 + $0x28] sm:$0xf]
        %v3836 = vld [vmem:[%s9 + $0x2c] sm:$0xf]
        %v3837 = vld [vmem:[%s9 + $0x30] sm:$0xf]
        %v3838 = vld [vmem:[%s9 + $0x34] sm:$0xf]
        %v3839 = vld [vmem:[%s9 + $0x38] sm:$0xf]
        %v3840 = vld [vmem:[%s9 + $0x3c] sm:$0xf]
        %v3841 = vld [vmem:[%s9 + $0x40] sm:$0xf]
        %v3842 = vld [vmem:[%s9 + $0x44] sm:$0xf]
        %v3843 = vld [vmem:[%s9 + $0x48] sm:$0xf]
        %v3844 = vld [vmem:[%s9 + $0x4c] sm:$0xf]
        %v3845 = vld [vmem:[%s9 + $0x50] sm:$0xf]
        %v3846 = vld [vmem:[%s9 + $0x54] sm:$0xf]
        %v3847 = vld [vmem:[%s9 + $0x58] sm:$0xf]
        %v3848 = vld [vmem:[%s9 + $0x5c] sm:$0xf]
        %v3849 = vld [vmem:[%s9 + $0x60] sm:$0xf]
        %v3850 = vld [vmem:[%s9 + $0x64] sm:$0xf]
        %v3851 = vld [vmem:[%s9 + $0x68] sm:$0xf]
        %v3852 = vld [vmem:[%s9 + $0x6c] sm:$0xf]
        %v3853 = vld [vmem:[%s9 + $0x70] sm:$0xf]
        %v3854 = vld [vmem:[%s9 + $0x74] sm:$0xf]
        %v3855 = vld [vmem:[%s9 + $0x78] sm:$0xf]
        %v3856 = vld [vmem:[%s9 + $0x7c] sm:$0xf]
        %v3857 = vld [vmem:[%s10] sm:$0x1]
        %v3859 = vlaneseq
        %v3860 = vshrl.u32 %v3859, 7
        %v3861 = vsub.s32 0, %v3860
        %v3862 = vrot.slane %v3857, %v3861
        %v3896 = vunpack.c.l.b16 %v3825
        %v3897 = vunpack.c.l.b16 %v3826
        %v3898 = vunpack.c.l.b16 %v3827
        %v3899 = vunpack.c.l.b16 %v3828
        %v3900 = vunpack.c.l.b16 %v3829
        %v3901 = vunpack.c.l.b16 %v3830
        %v3902 = vunpack.c.l.b16 %v3831
        %v3903 = vunpack.c.l.b16 %v3832
        %v3904 = vunpack.c.l.b16 %v3833
        %v3905 = vunpack.c.l.b16 %v3834
        %v3906 = vunpack.c.l.b16 %v3835
        %v3907 = vunpack.c.l.b16 %v3836
        %v3908 = vunpack.c.l.b16 %v3837
        %v3909 = vunpack.c.l.b16 %v3838
        %v3910 = vunpack.c.l.b16 %v3839
        %v3911 = vunpack.c.l.b16 %v3840
        %v3912 = vunpack.c.l.b16 %v3841
        %v3913 = vunpack.c.l.b16 %v3842
        %v3914 = vunpack.c.l.b16 %v3843
        %v3915 = vunpack.c.l.b16 %v3844
        %v3916 = vunpack.c.l.b16 %v3845
        %v3917 = vunpack.c.l.b16 %v3846
        %v3918 = vunpack.c.l.b16 %v3847
        %v3919 = vunpack.c.l.b16 %v3848
        %v3920 = vunpack.c.l.b16 %v3849
        %v3921 = vunpack.c.l.b16 %v3850
        %v3922 = vunpack.c.l.b16 %v3851
        %v3923 = vunpack.c.l.b16 %v3852
        %v3924 = vunpack.c.l.b16 %v3853
        %v3925 = vunpack.c.l.b16 %v3854
        %v3926 = vunpack.c.l.b16 %v3855
        %v3927 = vunpack.c.l.b16 %v3856
        %v3928 = vpack.c.b16 %v3897, %v3896
        %v3929 = vpack.c.b16 %v3899, %v3898
        %v3930 = vpack.c.b16 %v3901, %v3900
        %v3931 = vpack.c.b16 %v3903, %v3902
        %v3932 = vpack.c.b16 %v3905, %v3904
        %v3933 = vpack.c.b16 %v3907, %v3906
        %v3934 = vpack.c.b16 %v3909, %v3908
        %v3935 = vpack.c.b16 %v3911, %v3910
        %v3936 = vpack.c.b16 %v3913, %v3912
        %v3937 = vpack.c.b16 %v3915, %v3914
        %v3938 = vpack.c.b16 %v3917, %v3916
        %v3939 = vpack.c.b16 %v3919, %v3918
        %v3940 = vpack.c.b16 %v3921, %v3920
        %v3941 = vpack.c.b16 %v3923, %v3922
        %v3942 = vpack.c.b16 %v3925, %v3924
        %v3943 = vpack.c.b16 %v3927, %v3926
        %3960 = vmatprep.subr.bf16.mxu0 0
        %3961 = vmatpush1.bf16.msra.mxu0 %v3928
        %3962 = vmatprep.subr.bf16.mxu0 0
        %3963 = vmatpush1.bf16.msra.mxu0 %v3929
        %3964 = vmatprep.subr.bf16.mxu0 0
        %3965 = vmatpush1.bf16.msra.mxu0 %v3930
        %3966 = vmatprep.subr.bf16.mxu0 0
        %3967 = vmatpush1.bf16.msra.mxu0 %v3931
        %3968 = vmatprep.subr.bf16.mxu0 0
        %3969 = vmatpush1.bf16.msra.mxu0 %v3932
        %3970 = vmatprep.subr.bf16.mxu0 0
        %3971 = vmatpush1.bf16.msra.mxu0 %v3933
        %3972 = vmatprep.subr.bf16.mxu0 0
        %3973 = vmatpush1.bf16.msra.mxu0 %v3934
        %3974 = vmatprep.subr.bf16.mxu0 0
        %3975 = vmatpush1.bf16.msra.mxu0 %v3935
        %3976 = vmatprep.subr.bf16.mxu0 0
        %3977 = vmatpush1.bf16.msra.mxu0 %v3936
        %3978 = vmatprep.subr.bf16.mxu0 0
        %3979 = vmatpush1.bf16.msra.mxu0 %v3937
        %3980 = vmatprep.subr.bf16.mxu0 0
        %3981 = vmatpush1.bf16.msra.mxu0 %v3938
        %3982 = vmatprep.subr.bf16.mxu0 0
        %3983 = vmatpush1.bf16.msra.mxu0 %v3939
        %3984 = vmatprep.subr.bf16.mxu0 0
        %3985 = vmatpush1.bf16.msra.mxu0 %v3940
        %3986 = vmatprep.subr.bf16.mxu0 0
        %3987 = vmatpush1.bf16.msra.mxu0 %v3941
        %3988 = vmatprep.subr.bf16.mxu0 0
        %3989 = vmatpush1.bf16.msra.mxu0 %v3942
        %3990 = vmatprep.subr.bf16.mxu0 0
        %3991 = vmatpush1.bf16.msra.mxu0 %v3943
        %3992 = vmatprep.mubr.bf16.mxu0 %v3762
        %3993 = vmatmul.mubr.bf16.gmra.mrb[0].mxu0 %v3761
        %v3994 = vpop.f32.mrb[0].mxu0
        %v3995 = vadd.f32 %v3862, %v3994
        %v3996 = vpop.f32.mrb[0].mxu0
        %v3997 = vpop.f32.mrb[0].mxu0
        %v3998 = vadd.f32 %v3862, %v3997
        %v3999 = vpop.f32.mrb[0].mxu0
        %4000 = vmatprep.mubr.bf16.mxu0 %v3764
        %4001 = vmatmul.mubr.bf16.gmra.mrb[0].mxu0 %v3763
        %v4002 = vpop.f32.mrb[0].mxu0
        %v4003 = vadd.f32 %v3862, %v4002
        %v4004 = vpop.f32.mrb[0].mxu0
        %v4005 = vpop.f32.mrb[0].mxu0
        %v4006 = vadd.f32 %v3862, %v4005
        %v4007 = vpop.f32.mrb[0].mxu0
        %4008 = vmatprep.mubr.bf16.mxu0 %v3766
        %4009 = vmatmul.mubr.bf16.gmra.mrb[0].mxu0 %v3765
        %v4010 = vpop.f32.mrb[0].mxu0
        %v4011 = vadd.f32 %v3862, %v4010
        %v4012 = vpop.f32.mrb[0].mxu0
        %v4013 = vpop.f32.mrb[0].mxu0
        %v4014 = vadd.f32 %v3862, %v4013
        %v4015 = vpop.f32.mrb[0].mxu0
        %4016 = vmatprep.mubr.bf16.mxu0 %v3768
        %4017 = vmatmul.mubr.bf16.gmra.mrb[0].mxu0 %v3767
        %v4018 = vpop.f32.mrb[0].mxu0
        %v4019 = vadd.f32 %v3862, %v4018
        %v4020 = vpop.f32.mrb[0].mxu0
        %v4021 = vpop.f32.mrb[0].mxu0
        %v4022 = vadd.f32 %v3862, %v4021
        %v4023 = vpop.f32.mrb[0].mxu0
        %4024 = vmatprep.mubr.bf16.mxu0 %v3770
        %4025 = vmatmul.mubr.bf16.gmra.mrb[0].mxu0 %v3769
        %v4026 = vpop.f32.mrb[0].mxu0
        %v4027 = vadd.f32 %v3862, %v4026
        %v4028 = vpop.f32.mrb[0].mxu0
        %v4029 = vpop.f32.mrb[0].mxu0
        %v4030 = vadd.f32 %v3862, %v4029
        %v4031 = vpop.f32.mrb[0].mxu0
        %4032 = vmatprep.mubr.bf16.mxu0 %v3772
        %4033 = vmatmul.mubr.bf16.gmra.mrb[0].mxu0 %v3771
        %v4034 = vpop.f32.mrb[0].mxu0
        %v4035 = vadd.f32 %v3862, %v4034
        %v4036 = vpop.f32.mrb[0].mxu0
        %v4037 = vpop.f32.mrb[0].mxu0
        %v4038 = vadd.f32 %v3862, %v4037
        %v4039 = vpop.f32.mrb[0].mxu0
        %4040 = vmatprep.mubr.bf16.mxu0 %v3774
        %4041 = vmatmul.mubr.bf16.gmra.mrb[0].mxu0 %v3773
        %v4042 = vpop.f32.mrb[0].mxu0
        %v4043 = vadd.f32 %v3862, %v4042
        %v4044 = vpop.f32.mrb[0].mxu0
        %v4045 = vpop.f32.mrb[0].mxu0
        %v4046 = vadd.f32 %v3862, %v4045
        %v4047 = vpop.f32.mrb[0].mxu0
        %4048 = vmatprep.mubr.bf16.mxu0 %v3776
        %4049 = vmatmul.mubr.bf16.gmra.mrb[0].mxu0 %v3775
        %v4050 = vpop.f32.mrb[0].mxu0
        %v4051 = vadd.f32 %v3862, %v4050
        %v4052 = vpop.f32.mrb[0].mxu0
        %v4053 = vpop.f32.mrb[0].mxu0
        %v4054 = vadd.f32 %v3862, %v4053
        %v4055 = vpop.f32.mrb[0].mxu0
        %4056 = vmatprep.mubr.bf16.mxu0 %v3778
        %4057 = vmatmul.mubr.bf16.gmra.mrb[0].mxu0 %v3777
        %v4058 = vpop.f32.mrb[0].mxu0
        %v4059 = vadd.f32 %v3862, %v4058
        %v4060 = vpop.f32.mrb[0].mxu0
        %v4061 = vpop.f32.mrb[0].mxu0
        %v4062 = vadd.f32 %v3862, %v4061
        %v4063 = vpop.f32.mrb[0].mxu0
        %4064 = vmatprep.mubr.bf16.mxu0 %v3780
        %4065 = vmatmul.mubr.bf16.gmra.mrb[0].mxu0 %v3779
        %v4066 = vpop.f32.mrb[0].mxu0
        %v4067 = vadd.f32 %v3862, %v4066
        %v4068 = vpop.f32.mrb[0].mxu0
        %v4069 = vpop.f32.mrb[0].mxu0
        %v4070 = vadd.f32 %v3862, %v4069
        %v4071 = vpop.f32.mrb[0].mxu0
        %4072 = vmatprep.mubr.bf16.mxu0 %v3782
        %4073 = vmatmul.mubr.bf16.gmra.mrb[0].mxu0 %v3781
        %v4074 = vpop.f32.mrb[0].mxu0
        %v4075 = vadd.f32 %v3862, %v4074
        %v4076 = vpop.f32.mrb[0].mxu0
        %v4077 = vpop.f32.mrb[0].mxu0
        %v4078 = vadd.f32 %v3862, %v4077
        %v4079 = vpop.f32.mrb[0].mxu0
        %4080 = vmatprep.mubr.bf16.mxu0 %v3784
        %4081 = vmatmul.mubr.bf16.gmra.mrb[0].mxu0 %v3783
        %v4082 = vpop.f32.mrb[0].mxu0
        %v4083 = vadd.f32 %v3862, %v4082
        %v4084 = vpop.f32.mrb[0].mxu0
        %v4085 = vpop.f32.mrb[0].mxu0
        %v4086 = vadd.f32 %v3862, %v4085
        %v4087 = vpop.f32.mrb[0].mxu0
        %4088 = vmatprep.mubr.bf16.mxu0 %v3786
        %4089 = vmatmul.mubr.bf16.gmra.mrb[0].mxu0 %v3785
        %v4090 = vpop.f32.mrb[0].mxu0
        %v4091 = vadd.f32 %v3862, %v4090
        %v4092 = vpop.f32.mrb[0].mxu0
        %v4093 = vpop.f32.mrb[0].mxu0
        %v4094 = vadd.f32 %v3862, %v4093
        %v4095 = vpop.f32.mrb[0].mxu0
        %4096 = vmatprep.mubr.bf16.mxu0 %v3788
        %4097 = vmatmul.mubr.bf16.gmra.mrb[0].mxu0 %v3787
        %v4098 = vpop.f32.mrb[0].mxu0
        %v4099 = vadd.f32 %v3862, %v4098
        %v4100 = vpop.f32.mrb[0].mxu0
        %v4101 = vpop.f32.mrb[0].mxu0
        %v4102 = vadd.f32 %v3862, %v4101
        %v4103 = vpop.f32.mrb[0].mxu0
        %4104 = vmatprep.mubr.bf16.mxu0 %v3790
        %4105 = vmatmul.mubr.bf16.gmra.mrb[0].mxu0 %v3789
        %v4106 = vpop.f32.mrb[0].mxu0
        %v4107 = vadd.f32 %v3862, %v4106
        %v4108 = vpop.f32.mrb[0].mxu0
        %v4109 = vpop.f32.mrb[0].mxu0
        %v4110 = vadd.f32 %v3862, %v4109
        %v4111 = vpop.f32.mrb[0].mxu0
        %4112 = vmatprep.mubr.bf16.mxu0 %v3792
        %4113 = vmatmul.mubr.bf16.gmra.mrb[0].mxu0 %v3791
        %v4114 = vpop.f32.mrb[0].mxu0
        %v4115 = vadd.f32 %v3862, %v4114
        %v4116 = vpop.f32.mrb[0].mxu0
        %v4117 = vpop.f32.mrb[0].mxu0
        %v4118 = vadd.f32 %v3862, %v4117
        %v4119 = vpop.f32.mrb[0].mxu0
        %4120 = vmatprep.mubr.bf16.mxu0 %v3794
        %4121 = vmatmul.mubr.bf16.gmra.mrb[0].mxu0 %v3793
        %v4122 = vpop.f32.mrb[0].mxu0
        %v4123 = vadd.f32 %v3862, %v4122
        %v4124 = vpop.f32.mrb[0].mxu0
        %v4125 = vpop.f32.mrb[0].mxu0
        %v4126 = vadd.f32 %v3862, %v4125
        %v4127 = vpop.f32.mrb[0].mxu0
        %4128 = vmatprep.mubr.bf16.mxu0 %v3796
        %4129 = vmatmul.mubr.bf16.gmra.mrb[0].mxu0 %v3795
        %v4130 = vpop.f32.mrb[0].mxu0
        %v4131 = vadd.f32 %v3862, %v4130
        %v4132 = vpop.f32.mrb[0].mxu0
        %v4133 = vpop.f32.mrb[0].mxu0
        %v4134 = vadd.f32 %v3862, %v4133
        %v4135 = vpop.f32.mrb[0].mxu0
        %4136 = vmatprep.mubr.bf16.mxu0 %v3798
        %4137 = vmatmul.mubr.bf16.gmra.mrb[0].mxu0 %v3797
        %v4138 = vpop.f32.mrb[0].mxu0
        %v4139 = vadd.f32 %v3862, %v4138
        %v4140 = vpop.f32.mrb[0].mxu0
        %v4141 = vpop.f32.mrb[0].mxu0
        %v4142 = vadd.f32 %v3862, %v4141
        %v4143 = vpop.f32.mrb[0].mxu0
        %4144 = vmatprep.mubr.bf16.mxu0 %v3800
        %4145 = vmatmul.mubr.bf16.gmra.mrb[0].mxu0 %v3799
        %v4146 = vpop.f32.mrb[0].mxu0
        %v4147 = vadd.f32 %v3862, %v4146
        %v4148 = vpop.f32.mrb[0].mxu0
        %v4149 = vpop.f32.mrb[0].mxu0
        %v4150 = vadd.f32 %v3862, %v4149
        %v4151 = vpop.f32.mrb[0].mxu0
        %4152 = vmatprep.mubr.bf16.mxu0 %v3802
        %4153 = vmatmul.mubr.bf16.gmra.mrb[0].mxu0 %v3801
        %v4154 = vpop.f32.mrb[0].mxu0
        %v4155 = vadd.f32 %v3862, %v4154
        %v4156 = vpop.f32.mrb[0].mxu0
        %v4157 = vpop.f32.mrb[0].mxu0
        %v4158 = vadd.f32 %v3862, %v4157
        %v4159 = vpop.f32.mrb[0].mxu0
        %4160 = vmatprep.mubr.bf16.mxu0 %v3804
        %4161 = vmatmul.mubr.bf16.gmra.mrb[0].mxu0 %v3803
        %v4162 = vpop.f32.mrb[0].mxu0
        %v4163 = vadd.f32 %v3862, %v4162
        %v4164 = vpop.f32.mrb[0].mxu0
        %v4165 = vpop.f32.mrb[0].mxu0
        %v4166 = vadd.f32 %v3862, %v4165
        %v4167 = vpop.f32.mrb[0].mxu0
        %4168 = vmatprep.mubr.bf16.mxu0 %v3806
        %4169 = vmatmul.mubr.bf16.gmra.mrb[0].mxu0 %v3805
        %v4170 = vpop.f32.mrb[0].mxu0
        %v4171 = vadd.f32 %v3862, %v4170
        %v4172 = vpop.f32.mrb[0].mxu0
        %v4173 = vpop.f32.mrb[0].mxu0
        %v4174 = vadd.f32 %v3862, %v4173
        %v4175 = vpop.f32.mrb[0].mxu0
        %4176 = vmatprep.mubr.bf16.mxu0 %v3808
        %4177 = vmatmul.mubr.bf16.gmra.mrb[0].mxu0 %v3807
        %v4178 = vpop.f32.mrb[0].mxu0
        %v4179 = vadd.f32 %v3862, %v4178
        %v4180 = vpop.f32.mrb[0].mxu0
        %v4181 = vpop.f32.mrb[0].mxu0
        %v4182 = vadd.f32 %v3862, %v4181
        %v4183 = vpop.f32.mrb[0].mxu0
        %4184 = vmatprep.mubr.bf16.mxu0 %v3810
        %4185 = vmatmul.mubr.bf16.gmra.mrb[0].mxu0 %v3809
        %v4186 = vpop.f32.mrb[0].mxu0
        %v4187 = vadd.f32 %v3862, %v4186
        %v4188 = vpop.f32.mrb[0].mxu0
        %v4189 = vpop.f32.mrb[0].mxu0
        %v4190 = vadd.f32 %v3862, %v4189
        %v4191 = vpop.f32.mrb[0].mxu0
        %4192 = vmatprep.mubr.bf16.mxu0 %v3812
        %4193 = vmatmul.mubr.bf16.gmra.mrb[0].mxu0 %v3811
        %v4194 = vpop.f32.mrb[0].mxu0
        %v4195 = vadd.f32 %v3862, %v4194
        %v4196 = vpop.f32.mrb[0].mxu0
        %v4197 = vpop.f32.mrb[0].mxu0
        %v4198 = vadd.f32 %v3862, %v4197
        %v4199 = vpop.f32.mrb[0].mxu0
        %4200 = vmatprep.mubr.bf16.mxu0 %v3814
        %4201 = vmatmul.mubr.bf16.gmra.mrb[0].mxu0 %v3813
        %v4202 = vpop.f32.mrb[0].mxu0
        %v4203 = vadd.f32 %v3862, %v4202
        %v4204 = vpop.f32.mrb[0].mxu0
        %v4205 = vpop.f32.mrb[0].mxu0
        %v4206 = vadd.f32 %v3862, %v4205
        %v4207 = vpop.f32.mrb[0].mxu0
        %4208 = vmatprep.mubr.bf16.mxu0 %v3816
        %4209 = vmatmul.mubr.bf16.gmra.mrb[0].mxu0 %v3815
        %v4210 = vpop.f32.mrb[0].mxu0
        %v4211 = vadd.f32 %v3862, %v4210
        %v4212 = vpop.f32.mrb[0].mxu0
        %v4213 = vpop.f32.mrb[0].mxu0
        %v4214 = vadd.f32 %v3862, %v4213
        %v4215 = vpop.f32.mrb[0].mxu0
        %4216 = vmatprep.mubr.bf16.mxu0 %v3818
        %4217 = vmatmul.mubr.bf16.gmra.mrb[0].mxu0 %v3817
        %v4218 = vpop.f32.mrb[0].mxu0
        %v4219 = vadd.f32 %v3862, %v4218
        %v4220 = vpop.f32.mrb[0].mxu0
        %v4221 = vpop.f32.mrb[0].mxu0
        %v4222 = vadd.f32 %v3862, %v4221
        %v4223 = vpop.f32.mrb[0].mxu0
        %4224 = vmatprep.mubr.bf16.mxu0 %v3820
        %4225 = vmatmul.mubr.bf16.gmra.mrb[0].mxu0 %v3819
        %v4226 = vpop.f32.mrb[0].mxu0
        %v4227 = vadd.f32 %v3862, %v4226
        %v4228 = vpop.f32.mrb[0].mxu0
        %v4229 = vpop.f32.mrb[0].mxu0
        %v4230 = vadd.f32 %v3862, %v4229
        %v4231 = vpop.f32.mrb[0].mxu0
        %4232 = vmatprep.mubr.bf16.mxu0 %v3822
        %4233 = vmatmul.mubr.bf16.gmra.mrb[0].mxu0 %v3821
        %v4234 = vpop.f32.mrb[0].mxu0
        %v4235 = vadd.f32 %v3862, %v4234
        %v4236 = vpop.f32.mrb[0].mxu0
        %v4237 = vpop.f32.mrb[0].mxu0
        %v4238 = vadd.f32 %v3862, %v4237
        %v4239 = vpop.f32.mrb[0].mxu0
        %4240 = vmatprep.mubr.bf16.mxu0 %v3824
        %4241 = vmatmul.mubr.bf16.gmra.mrb[0].mxu0 %v3823
        %v4242 = vpop.f32.mrb[0].mxu0
        %v4243 = vadd.f32 %v3862, %v4242
        %v4244 = vpop.f32.mrb[0].mxu0
        %v4245 = vpop.f32.mrb[0].mxu0
        %v4246 = vadd.f32 %v3862, %v4245
        %v4247 = vpop.f32.mrb[0].mxu0
        %4248 = vdwg.mxu0
        %4249 = vst [vmem:[%s412] sm:$0xff] %v3995
        %4250 = vst [vmem:[%s412 + $0x8] sm:$0xff] %v3998
        %4251 = vst [vmem:[%s412 + $0x10] sm:$0xff] %v4003
        %4252 = vst [vmem:[%s412 + $0x18] sm:$0xff] %v4006
        %4253 = vst [vmem:[%s412 + $0x20] sm:$0xff] %v4011
        %4254 = vst [vmem:[%s412 + $0x28] sm:$0xff] %v4014
        %4255 = vst [vmem:[%s412 + $0x30] sm:$0xff] %v4019
        %4256 = vst [vmem:[%s412 + $0x38] sm:$0xff] %v4022
        %4257 = vst [vmem:[%s412 + $0x40] sm:$0xff] %v4027
        %4258 = vst [vmem:[%s412 + $0x48] sm:$0xff] %v4030
        %4259 = vst [vmem:[%s412 + $0x50] sm:$0xff] %v4035
        %4260 = vst [vmem:[%s412 + $0x58] sm:$0xff] %v4038
        %4261 = vst [vmem:[%s412 + $0x60] sm:$0xff] %v4043
        %4262 = vst [vmem:[%s412 + $0x68] sm:$0xff] %v4046
        %4263 = vst [vmem:[%s412 + $0x70] sm:$0xff] %v4051
        %4264 = vst [vmem:[%s412 + $0x78] sm:$0xff] %v4054
        %4265 = vst [vmem:[%s412 + $0x80] sm:$0xff] %v4059
        %4266 = vst [vmem:[%s412 + $0x88] sm:$0xff] %v4062
        %4267 = vst [vmem:[%s412 + $0x90] sm:$0xff] %v4067
        %4268 = vst [vmem:[%s412 + $0x98] sm:$0xff] %v4070
        %4269 = vst [vmem:[%s412 + $0xa0] sm:$0xff] %v4075
        %4270 = vst [vmem:[%s412 + $0xa8] sm:$0xff] %v4078
        %4271 = vst [vmem:[%s412 + $0xb0] sm:$0xff] %v4083
        %4272 = vst [vmem:[%s412 + $0xb8] sm:$0xff] %v4086
        %4273 = vst [vmem:[%s412 + $0xc0] sm:$0xff] %v4091
        %4274 = vst [vmem:[%s412 + $0xc8] sm:$0xff] %v4094
        %4275 = vst [vmem:[%s412 + $0xd0] sm:$0xff] %v4099
        %4276 = vst [vmem:[%s412 + $0xd8] sm:$0xff] %v4102
        %4277 = vst [vmem:[%s412 + $0xe0] sm:$0xff] %v4107
        %4278 = vst [vmem:[%s412 + $0xe8] sm:$0xff] %v4110
        %4279 = vst [vmem:[%s412 + $0xf0] sm:$0xff] %v4115
        %4280 = vst [vmem:[%s412 + $0xf8] sm:$0xff] %v4118
        %4281 = vst [vmem:[%s412 + $0x100] sm:$0xff] %v4123
        %4282 = vst [vmem:[%s412 + $0x108] sm:$0xff] %v4126
        %4283 = vst [vmem:[%s412 + $0x110] sm:$0xff] %v4131
        %4284 = vst [vmem:[%s412 + $0x118] sm:$0xff] %v4134
        %4285 = vst [vmem:[%s412 + $0x120] sm:$0xff] %v4139
        %4286 = vst [vmem:[%s412 + $0x128] sm:$0xff] %v4142
        %4287 = vst [vmem:[%s412 + $0x130] sm:$0xff] %v4147
        %4288 = vst [vmem:[%s412 + $0x138] sm:$0xff] %v4150
        %4289 = vst [vmem:[%s412 + $0x140] sm:$0xff] %v4155
        %4290 = vst [vmem:[%s412 + $0x148] sm:$0xff] %v4158
        %4291 = vst [vmem:[%s412 + $0x150] sm:$0xff] %v4163
        %4292 = vst [vmem:[%s412 + $0x158] sm:$0xff] %v4166
        %4293 = vst [vmem:[%s412 + $0x160] sm:$0xff] %v4171
        %4294 = vst [vmem:[%s412 + $0x168] sm:$0xff] %v4174
        %4295 = vst [vmem:[%s412 + $0x170] sm:$0xff] %v4179
        %4296 = vst [vmem:[%s412 + $0x178] sm:$0xff] %v4182
        %4297 = vst [vmem:[%s412 + $0x180] sm:$0xff] %v4187
        %4298 = vst [vmem:[%s412 + $0x188] sm:$0xff] %v4190
        %4299 = vst [vmem:[%s412 + $0x190] sm:$0xff] %v4195
        %4300 = vst [vmem:[%s412 + $0x198] sm:$0xff] %v4198
        %4301 = vst [vmem:[%s412 + $0x1a0] sm:$0xff] %v4203
        %4302 = vst [vmem:[%s412 + $0x1a8] sm:$0xff] %v4206
        %4303 = vst [vmem:[%s412 + $0x1b0] sm:$0xff] %v4211
        %4304 = vst [vmem:[%s412 + $0x1b8] sm:$0xff] %v4214
        %4305 = vst [vmem:[%s412 + $0x1c0] sm:$0xff] %v4219
        %4306 = vst [vmem:[%s412 + $0x1c8] sm:$0xff] %v4222
        %4307 = vst [vmem:[%s412 + $0x1d0] sm:$0xff] %v4227
        %4308 = vst [vmem:[%s412 + $0x1d8] sm:$0xff] %v4230
        %4309 = vst [vmem:[%s412 + $0x1e0] sm:$0xff] %v4235
        %4310 = vst [vmem:[%s412 + $0x1e8] sm:$0xff] %v4238
        %4311 = vst [vmem:[%s412 + $0x1f0] sm:$0xff] %v4243
        %4312 = vst [vmem:[%s412 + $0x1f8] sm:$0xff] %v4246
        %s4313 = sand.u32 %s279, 1
        %s4314 = scalar_lea.sflag [#allocation3], %s4313
        %s4315 = sand.u32 %s279, 1
        %s4316 = smul.addr %s4315, 512
        %s4317 = scalar_lea.vmem [#allocation2], %s4316
        // Predicated region
        $region65: #{tpu_custom_call.1} parent=63 // pred_check
          %p4318 = pneg %p289
        $region66: #{tpu_custom_call.1} parent=63 // pred_check_branch
          %4320 = sbr.rel (%p4318) target = $region68
        $region67: #{tpu_custom_call.1} parent=63 // pred_region
          %s4321 = smul.u32 64, %s25
          %s4323 = ssub.s32 8192, 8192
          %4324 = vsyncadd %s4314, %s4323
          %s4325 = smul.addr %s4321, 128
          %s4326 = scalar_lea.hbm %s11, %s4325
          %s4327 = sshll.u32 %s4317, 4
          %s4328 = int_to_ptr.vmem [resolvable:$true] %s4327
          %4333 = dma.vmem_to_hbm [thread:$0]  %s4328, 8192, %s4326, %s4314, 128, 128, 8
        $region68: #{tpu_custom_call.1} parent=63 // pred_fallthru
          _
      $region64: #{tpu_custom_call.1} parent=5 // pred_fallthru
        _
      %p4334 = scmp.le.s32.totalorder 2, %s20
      // Predicated region
      $region69: #{tpu_custom_call.1} parent=5 // pred_check
        %p4335 = pneg %p4334
      $region70: #{tpu_custom_call.1} parent=5 // pred_check_branch
        %4337 = sbr.rel (%p4335) target = $region72
      $region71: #{tpu_custom_call.1} parent=5 // pred_region
        %s4338 = ssub.s32 %s20, 2
        // Predicated region
        $region73: #{tpu_custom_call.1} parent=71 // pred_check
          %p4339 = pneg %p295
        $region74: #{tpu_custom_call.1} parent=71 // pred_check_branch
          %4341 = sbr.rel (%p4339) target = $region76
        $region75: #{tpu_custom_call.1} parent=71 // pred_region
          %s4342 = sand.u32 %s280, 1
          %s4343 = scalar_lea.sflag [#allocation3], %s4342
          %s4344 = sand.u32 %s280, 1
          %s4345 = smul.addr %s4344, 512
          %s4346 = scalar_lea.vmem [#allocation2], %s4345
          %4347 = dma.done %s4343, 8192
        $region76: #{tpu_custom_call.1} parent=71 // pred_fallthru
          _
      $region72: #{tpu_custom_call.1} parent=5 // pred_fallthru
        _
    $region6: #{tpu_custom_call.1} parent=1 // loop_footer
      %s24 = sadd.s32 1, %s20
    $region7: #{tpu_custom_call.1} parent=1 // loop_footer_branch
      %19 = sbr.rel target = $region3
    $region8: #{tpu_custom_call.1} parent=1 // loop_exit
      _
    %4348 = vsyncpa [#allocation3], 1
    %s4349 = scalar_lea.sflag [#allocation3], 1
    %4350 = vsyncpa %s4349, 1

</llo_original>
